<compile_context>
chip_gen: v7x
topology: tpu7x:2x2x1
jax: 0.10.0
libtpu: 0.0.40
codegen_flags: <defaults>
</compile_context>

<pallas_src>
import functools

import jax
import jax.numpy as jnp
from jax.experimental import pallas as pl
from jax.experimental.pallas import tpu as pltpu


FC_INNER = 1024
POOL = 7


def _round_up(x, m):
    return ((x + m - 1) // m) * m


def _pick_tk(k_pad):
    for tk in (1024, 512, 256, 128):
        if k_pad % tk == 0:
            return tk
    return k_pad


# ---------------------------------------------------------------------------
# Pallas kernel: K-tiled fc6 accumulate -> relu -> fc7 -> relu -> fused head
# ---------------------------------------------------------------------------
def _roi_head_kernel(x_ref, w6_ref, b6_ref, w7_ref, b7_ref, wh_ref, bh_ref,
                     out_ref, acc_ref):
    k = pl.program_id(1)

    @pl.when(k == 0)
    def _init():
        # fold the fc6 bias into the accumulator init (added exactly once)
        acc_ref[...] = jnp.broadcast_to(b6_ref[...], acc_ref.shape)

    # bf16 x bf16 -> f32 accumulate on the MXU
    acc_ref[...] += jnp.dot(x_ref[...], w6_ref[...],
                            preferred_element_type=jnp.float32)

    @pl.when(k == pl.num_programs(1) - 1)
    def _epilogue():
        h6 = jnp.maximum(acc_ref[...], 0.0).astype(jnp.bfloat16)
        h7 = jnp.dot(h6, w7_ref[...],
                     preferred_element_type=jnp.float32) + b7_ref[...]
        h7 = jnp.maximum(h7, 0.0).astype(jnp.bfloat16)
        out_ref[...] = (jnp.dot(h7, wh_ref[...],
                                preferred_element_type=jnp.float32)
                        + bh_ref[...]).astype(out_ref.dtype)


def roi_head_pallas(flat, packed, nc, nb):
    """flat: (n, k_in) f32 pooled+flattened ROI features. Returns (cls, bbox)."""
    w6p, b6, w7, b7, whead, bhead = packed
    n, k_in = flat.shape
    k_pad, d = w6p.shape
    nh_pad = whead.shape[1]

    tk = _pick_tk(k_pad)
    if n <= 128:
        tm = _round_up(n, 8)
        n_pad = tm
    else:
        tm = 128
        n_pad = _round_up(n, tm)

    xp = jnp.zeros((n_pad, k_pad), jnp.bfloat16)
    xp = xp.at[:n, :k_in].set(flat.astype(jnp.bfloat16))

    out = pl.pallas_call(
        _roi_head_kernel,
        out_shape=jax.ShapeDtypeStruct((n_pad, nh_pad), jnp.float32),
        grid_spec=pltpu.PrefetchScalarGridSpec(
            num_scalar_prefetch=0,
            grid=(n_pad // tm, k_pad // tk),
            in_specs=[
                pl.BlockSpec((tm, tk), lambda i, k: (i, k)),       # x tile
                pl.BlockSpec((tk, d), lambda i, k: (k, 0)),        # w6 K-tile
                pl.BlockSpec((1, d), lambda i, k: (0, 0)),         # b6 (resident)
                pl.BlockSpec((d, d), lambda i, k: (0, 0)),         # w7 (resident)
                pl.BlockSpec((1, d), lambda i, k: (0, 0)),         # b7 (resident)
                pl.BlockSpec((d, nh_pad), lambda i, k: (0, 0)),    # fused head W
                pl.BlockSpec((1, nh_pad), lambda i, k: (0, 0)),    # fused head b
            ],
            out_specs=pl.BlockSpec((tm, nh_pad), lambda i, k: (i, 0)),
            scratch_shapes=[pltpu.VMEM((tm, d), jnp.float32)],
        ),
        compiler_params=pltpu.CompilerParams(
            dimension_semantics=("parallel", "arbitrary"),
            vmem_limit_bytes=48 << 20,   # fits v7x's 64 MiB physical VMEM
        ),
    )(xp, w6p, b6, w7, b7, whead, bhead)

    return out[:n, :nc], out[:n, nc:nc + nb]


# ---------------------------------------------------------------------------
# Parameter packing: bf16 weights, fused + lane-padded head, K-padded fc6
# ---------------------------------------------------------------------------
def pack_params(params):
    w6, b6, w7, b7, wc, bc, wb, bb = params
    k_in, d = w6.shape
    nc, nb = wc.shape[1], wb.shape[1]
    nh = nc + nb

    k_pad = _round_up(k_in, 128)
    nh_pad = _round_up(nh, 128)

    w6p = jnp.zeros((k_pad, d), jnp.bfloat16).at[:k_in].set(
        w6.astype(jnp.bfloat16))
    whead = jnp.zeros((d, nh_pad), jnp.bfloat16)
    whead = whead.at[:, :nc].set(wc.astype(jnp.bfloat16))
    whead = whead.at[:, nc:nh].set(wb.astype(jnp.bfloat16))
    bhead = jnp.zeros((1, nh_pad), jnp.float32)
    bhead = bhead.at[:, :nc].set(bc.astype(jnp.float32))
    bhead = bhead.at[:, nc:nh].set(bb.astype(jnp.float32))

    return (w6p, b6.astype(jnp.float32), w7.astype(jnp.bfloat16),
            b7.astype(jnp.float32), whead, bhead)


# ---------------------------------------------------------------------------
# JAX glue: ROI max-pool (torchvision roi_pool quantization semantics)
# Looped per-bin masked max: no (N,C,P,H,W) intermediate.
# ---------------------------------------------------------------------------
def roi_max_pool(feat, proposals, spatial_scale, pool_size=POOL):
    """feat: (C, H, W) single image; proposals: (N, 4) as x1,y1,x2,y2."""
    C, H, W = feat.shape
    P = pool_size
    x1, y1, x2, y2 = [proposals[:, i] for i in range(4)]

    rsw = jnp.round(x1 * spatial_scale).astype(jnp.int32)
    rsh = jnp.round(y1 * spatial_scale).astype(jnp.int32)
    rew = jnp.round(x2 * spatial_scale).astype(jnp.int32)
    reh = jnp.round(y2 * spatial_scale).astype(jnp.int32)

    roi_w = jnp.maximum(rew - rsw + 1, 1).astype(jnp.float32)
    roi_h = jnp.maximum(reh - rsh + 1, 1).astype(jnp.float32)
    bin_w = roi_w / P
    bin_h = roi_h / P

    pidx = jnp.arange(P, dtype=jnp.float32)
    hstart = jnp.clip(jnp.floor(pidx[None, :] * bin_h[:, None]).astype(jnp.int32)
                      + rsh[:, None], 0, H)                       # (N, P)
    hend = jnp.clip(jnp.ceil((pidx[None, :] + 1) * bin_h[:, None]).astype(jnp.int32)
                    + rsh[:, None], 0, H)
    wstart = jnp.clip(jnp.floor(pidx[None, :] * bin_w[:, None]).astype(jnp.int32)
                      + rsw[:, None], 0, W)
    wend = jnp.clip(jnp.ceil((pidx[None, :] + 1) * bin_w[:, None]).astype(jnp.int32)
                    + rsw[:, None], 0, W)

    hh = jnp.arange(H)
    ww = jnp.arange(W)
    neg = jnp.float32(-jnp.inf)

    # Stage 1: per ph-bin max over H -> (N, C, P, W)
    rows = []
    for p in range(P):
        m = (hh[None, :] >= hstart[:, p:p + 1]) & (hh[None, :] < hend[:, p:p + 1])  # (N, H)
        rows.append(jnp.where(m[:, None, :, None], feat[None], neg).max(axis=2))    # (N, C, W)
    row = jnp.stack(rows, axis=2)                                                   # (N, C, P, W)

    # Stage 2: per pw-bin max over W -> (N, C, P, P)
    cols = []
    for p in range(P):
        m = (ww[None, :] >= wstart[:, p:p + 1]) & (ww[None, :] < wend[:, p:p + 1])  # (N, W)
        cols.append(jnp.where(m[:, None, None, :], row, neg).max(axis=3))           # (N, C, P)
    pooled = jnp.stack(cols, axis=3)                                                # (N, C, P, P)

    pooled = jnp.where(jnp.isneginf(pooled), 0.0, pooled)   # empty bins -> 0
    return pooled


# ---------------------------------------------------------------------------
# Parameter init (deterministic) and full forward
# ---------------------------------------------------------------------------
def init_params(key, in_channels, num_classes, pool_size=POOL, fc_inner=FC_INNER):
    k_in = in_channels * pool_size * pool_size
    keys = jax.random.split(key, 8)
    s = 0.01
    w6 = jax.random.normal(keys[0], (k_in, fc_inner), jnp.float32) * s
    b6 = jax.random.normal(keys[1], (1, fc_inner), jnp.float32) * s
    w7 = jax.random.normal(keys[2], (fc_inner, fc_inner), jnp.float32) * s
    b7 = jax.random.normal(keys[3], (1, fc_inner), jnp.float32) * s
    wc = jax.random.normal(keys[4], (fc_inner, num_classes), jnp.float32) * s
    bc = jax.random.normal(keys[5], (1, num_classes), jnp.float32) * s
    wb = jax.random.normal(keys[6], (fc_inner, num_classes * 4), jnp.float32) * s
    bb = jax.random.normal(keys[7], (1, num_classes * 4), jnp.float32) * s
    return (w6, b6, w7, b7, wc, bc, wb, bb)


@functools.partial(jax.jit, static_argnames=("pool_size", "num_classes"))
def roi_head_forward(feat, proposals, image_shape_hw, packed, num_classes,
                     pool_size=POOL):
    # feat: (1, C, H, W) NCHW; proposals: (N, 4) in image coords
    C, H = feat.shape[1], feat.shape[2]
    spatial_scale = H / image_shape_hw[0]
    pooled = roi_max_pool(feat[0], proposals, spatial_scale, pool_size)  # (N,C,7,7)
    flat = pooled.reshape(pooled.shape[0], C * pool_size * pool_size)    # PyTorch flatten order
    nc, nb = num_classes, num_classes * 4
    cls_scores, bbox_pred = roi_head_pallas(flat, packed, nc, nb)
    return cls_scores, bbox_pred, flat


def reference_head(flat, packed, nc, nb):
    """Mirror of the kernel numerics (bf16 operands, f32 accumulation)."""
    w6p, b6, w7, b7, whead, bhead = packed
    k_in = flat.shape[1]
    xb = flat.astype(jnp.bfloat16)
    h6 = jnp.maximum(jnp.dot(xb, w6p[:k_in],
                             preferred_element_type=jnp.float32) + b6, 0.0)
    h7 = jnp.maximum(jnp.dot(h6.astype(jnp.bfloat16), w7,
                             preferred_element_type=jnp.float32) + b7, 0.0)
    out = jnp.dot(h7.astype(jnp.bfloat16), whead,
                  preferred_element_type=jnp.float32) + bhead
    return out[:, :nc], out[:, nc:nc + nb]


if __name__ == "__main__":
    key = jax.random.PRNGKey(0)
    k_feat, k_box, k_param = jax.random.split(key, 3)

    num_classes = 8
    in_channels = 16
    H = W = 16
    image_h = image_w = 32.0
    num_rois = 32

    feat = jax.random.normal(k_feat, (1, in_channels, H, W), jnp.float32)

    kb1, kb2 = jax.random.split(k_box)
    xy = jax.random.uniform(kb1, (num_rois, 2), jnp.float32, 0.0, 24.0)
    wh = jax.random.uniform(kb2, (num_rois, 2), jnp.float32, 4.0, 8.0)
    proposals = jnp.concatenate([xy, xy + wh], axis=1)  # (N,4) x1,y1,x2,y2

    params = init_params(k_param, in_channels, num_classes)
    packed = pack_params(params)

    cls_scores, bbox_pred, flat = roi_head_forward(
        feat, proposals, (image_h, image_w), packed, num_classes)
    jax.block_until_ready((cls_scores, bbox_pred))

    # sanity check against pure-JAX reference of the FC head (same bf16 numerics)
    ref_cls, ref_bbox = reference_head(flat, packed, num_classes, num_classes * 4)
    assert cls_scores.shape == (num_rois, num_classes)
    assert bbox_pred.shape == (num_rois, num_classes * 4)
    assert jnp.allclose(cls_scores, ref_cls, atol=1e-3, rtol=1e-2)
    assert jnp.allclose(bbox_pred, ref_bbox, atol=1e-3, rtol=1e-2)

    print("KERNEL_OK")
</pallas_src>

<mosaic_0001>
module attributes {stable_mosaic.version = 11 : i64} {
  func.func @_roi_head_kernel(%arg0: i32, %arg1: i32, %arg2: memref<32x128xbf16, #tpu.memory_space<vmem>>, %arg3: memref<128x1024xbf16, #tpu.memory_space<vmem>>, %arg4: memref<1x1024xf32, #tpu.memory_space<vmem>>, %arg5: memref<1024x1024xbf16, #tpu.memory_space<vmem>>, %arg6: memref<1x1024xf32, #tpu.memory_space<vmem>>, %arg7: memref<1024x128xbf16, #tpu.memory_space<vmem>>, %arg8: memref<1x128xf32, #tpu.memory_space<vmem>>, %arg9: memref<32x128xf32, #tpu.memory_space<vmem>>, %arg10: memref<32x1024xf32, #tpu.memory_space<vmem>>) attributes {dimension_semantics = [#tpu.dimension_semantics<parallel>, #tpu.dimension_semantics<arbitrary>], iteration_bounds = array<i64: 1, 7>, scalar_prefetch = 0 : i64, scratch_operands = 1 : i64, tpu.core_type = #tpu.core_type<tc>, window_params = [{transform_indices = @transform_0, window_bounds = array<i64: 32, 128>}, {transform_indices = @transform_1, window_bounds = array<i64: 128, 1024>}, {pipeline_mode = #tpu.pipeline_mode<synchronous>, transform_indices = @transform_2, window_bounds = array<i64: 1, 1024>}, {pipeline_mode = #tpu.pipeline_mode<synchronous>, transform_indices = @transform_3, window_bounds = array<i64: 1024, 1024>}, {pipeline_mode = #tpu.pipeline_mode<synchronous>, transform_indices = @transform_4, window_bounds = array<i64: 1, 1024>}, {pipeline_mode = #tpu.pipeline_mode<synchronous>, transform_indices = @transform_5, window_bounds = array<i64: 1024, 128>}, {pipeline_mode = #tpu.pipeline_mode<synchronous>, transform_indices = @transform_6, window_bounds = array<i64: 1, 128>}, {transform_indices = @transform_7, window_bounds = array<i64: 32, 128>}]} {
    %c0_i32 = arith.constant 0 : i32
    %0 = arith.cmpi eq, %arg1, %c0_i32 : i32
    %1 = arith.extui %0 : i1 to i32
    %c0_i32_0 = arith.constant 0 : i32
    %2 = arith.cmpi ne, %1, %c0_i32_0 : i32
    scf.if %2 {
      %c0_9 = arith.constant 0 : index
      %c0_10 = arith.constant 0 : index
      %12 = vector.load %arg4[%c0_9, %c0_10] : memref<1x1024xf32, #tpu.memory_space<vmem>>, vector<1x1024xf32>
      %13 = vector.shape_cast %12 : vector<1x1024xf32> to vector<1x1024xf32>
      %14 = vector.broadcast %13 : vector<1x1024xf32> to vector<32x1024xf32>
      %c0_11 = arith.constant 0 : index
      %c0_12 = arith.constant 0 : index
      %15 = vector.load %arg10[%c0_11, %c0_12] : memref<32x1024xf32, #tpu.memory_space<vmem>>, vector<32x1024xf32>
      tpu.vector_store %arg10[%c0_11, %c0_12], %14 {strides = array<i32>} : memref<32x1024xf32, #tpu.memory_space<vmem>>, vector<32x1024xf32>,
    } else {
    }
    %c0 = arith.constant 0 : index
    %c0_1 = arith.constant 0 : index
    %3 = vector.load %arg10[%c0, %c0_1] : memref<32x1024xf32, #tpu.memory_space<vmem>>, vector<32x1024xf32>
    %c0_2 = arith.constant 0 : index
    %c0_3 = arith.constant 0 : index
    %4 = vector.load %arg2[%c0_2, %c0_3] : memref<32x128xbf16, #tpu.memory_space<vmem>>, vector<32x128xbf16>
    %c0_4 = arith.constant 0 : index
    %c0_5 = arith.constant 0 : index
    %5 = vector.load %arg3[%c0_4, %c0_5] : memref<128x1024xbf16, #tpu.memory_space<vmem>>, vector<128x1024xbf16>
    %cst = arith.constant dense<0.000000e+00> : vector<32x1024xf32>
    %6 = tpu.matmul %4, %5, %cst {dimension_numbers = #tpu.dot_dimension_numbers<[1], [0], [0], [1], [0, 0, 1, 1], [], []>} : vector<32x128xbf16>, vector<128x1024xbf16>, vector<32x1024xf32> -> vector<32x1024xf32>
    %7 = arith.addf %3, %6 : vector<32x1024xf32>
    %c0_6 = arith.constant 0 : index
    %c0_7 = arith.constant 0 : index
    %8 = vector.load %arg10[%c0_6, %c0_7] : memref<32x1024xf32, #tpu.memory_space<vmem>>, vector<32x1024xf32>
    tpu.vector_store %arg10[%c0_6, %c0_7], %7 {strides = array<i32>} : memref<32x1024xf32, #tpu.memory_space<vmem>>, vector<32x1024xf32>,
    %c6_i32 = arith.constant 6 : i32
    %9 = arith.cmpi eq, %arg1, %c6_i32 : i32
    %10 = arith.extui %9 : i1 to i32
    %c0_i32_8 = arith.constant 0 : i32
    %11 = arith.cmpi ne, %10, %c0_i32_8 : i32
    scf.if %11 {
      %c0_9 = arith.constant 0 : index
      %c0_10 = arith.constant 0 : index
      %12 = vector.load %arg10[%c0_9, %c0_10] : memref<32x1024xf32, #tpu.memory_space<vmem>>, vector<32x1024xf32>
      %cst_11 = arith.constant 0.000000e+00 : f32
      %13 = vector.broadcast %cst_11 : f32 to vector<32x1024xf32>
      %14 = arith.maximumf %12, %13 : vector<32x1024xf32>
      %15 = arith.truncf %14 : vector<32x1024xf32> to vector<32x1024xbf16>
      %c0_12 = arith.constant 0 : index
      %c0_13 = arith.constant 0 : index
      %16 = vector.load %arg5[%c0_12, %c0_13] : memref<1024x1024xbf16, #tpu.memory_space<vmem>>, vector<1024x1024xbf16>
      %cst_14 = arith.constant dense<0.000000e+00> : vector<32x1024xf32>
      %17 = tpu.matmul %15, %16, %cst_14 {dimension_numbers = #tpu.dot_dimension_numbers<[1], [0], [0], [1], [0, 0, 1, 1], [], []>} : vector<32x1024xbf16>, vector<1024x1024xbf16>, vector<32x1024xf32> -> vector<32x1024xf32>
      %c0_15 = arith.constant 0 : index
      %c0_16 = arith.constant 0 : index
      %18 = vector.load %arg6[%c0_15, %c0_16] : memref<1x1024xf32, #tpu.memory_space<vmem>>, vector<1x1024xf32>
      %19 = vector.broadcast %18 : vector<1x1024xf32> to vector<32x1024xf32>
      %20 = arith.addf %17, %19 : vector<32x1024xf32>
      %cst_17 = arith.constant 0.000000e+00 : f32
      %21 = vector.broadcast %cst_17 : f32 to vector<32x1024xf32>
      %22 = arith.maximumf %20, %21 : vector<32x1024xf32>
      %23 = arith.truncf %22 : vector<32x1024xf32> to vector<32x1024xbf16>
      %c0_18 = arith.constant 0 : index
      %c0_19 = arith.constant 0 : index
      %24 = vector.load %arg7[%c0_18, %c0_19] : memref<1024x128xbf16, #tpu.memory_space<vmem>>, vector<1024x128xbf16>
      %cst_20 = arith.constant dense<0.000000e+00> : vector<32x128xf32>
      %25 = tpu.matmul %23, %24, %cst_20 {dimension_numbers = #tpu.dot_dimension_numbers<[1], [0], [0], [1], [0, 0, 1, 1], [], []>} : vector<32x1024xbf16>, vector<1024x128xbf16>, vector<32x128xf32> -> vector<32x128xf32>
      %c0_21 = arith.constant 0 : index
      %c0_22 = arith.constant 0 : index
      %26 = vector.load %arg8[%c0_21, %c0_22] : memref<1x128xf32, #tpu.memory_space<vmem>>, vector<1x128xf32>
      %27 = vector.broadcast %26 : vector<1x128xf32> to vector<32x128xf32>
      %28 = arith.addf %25, %27 : vector<32x128xf32>
      %c0_23 = arith.constant 0 : index
      %c0_24 = arith.constant 0 : index
      %29 = vector.load %arg9[%c0_23, %c0_24] : memref<32x128xf32, #tpu.memory_space<vmem>>, vector<32x128xf32>
      tpu.vector_store %arg9[%c0_23, %c0_24], %28 {strides = array<i32>} : memref<32x128xf32, #tpu.memory_space<vmem>>, vector<32x128xf32>,
    } else {
    }
    return
  }
  func.func @transform_0(%arg0: i32, %arg1: i32) -> (i32, i32) {
    %c0_i32 = arith.constant 0 : i32
    return %arg0, %arg1 : i32, i32
  }
  func.func @transform_1(%arg0: i32, %arg1: i32) -> (i32, i32) {
    %c0_i32 = arith.constant 0 : i32
    %c0_i32_0 = arith.constant 0 : i32
    return %arg1, %c0_i32 : i32, i32
  }
  func.func @transform_2(%arg0: i32, %arg1: i32) -> (i32, i32) {
    %c0_i32 = arith.constant 0 : i32
    %c0_i32_0 = arith.constant 0 : i32
    %c0_i32_1 = arith.constant 0 : i32
    return %c0_i32, %c0_i32_0 : i32, i32
  }
  func.func @transform_3(%arg0: i32, %arg1: i32) -> (i32, i32) {
    %c0_i32 = arith.constant 0 : i32
    %c0_i32_0 = arith.constant 0 : i32
    %c0_i32_1 = arith.constant 0 : i32
    return %c0_i32, %c0_i32_0 : i32, i32
  }
  func.func @transform_4(%arg0: i32, %arg1: i32) -> (i32, i32) {
    %c0_i32 = arith.constant 0 : i32
    %c0_i32_0 = arith.constant 0 : i32
    %c0_i32_1 = arith.constant 0 : i32
    return %c0_i32, %c0_i32_0 : i32, i32
  }
  func.func @transform_5(%arg0: i32, %arg1: i32) -> (i32, i32) {
    %c0_i32 = arith.constant 0 : i32
    %c0_i32_0 = arith.constant 0 : i32
    %c0_i32_1 = arith.constant 0 : i32
    return %c0_i32, %c0_i32_0 : i32, i32
  }
  func.func @transform_6(%arg0: i32, %arg1: i32) -> (i32, i32) {
    %c0_i32 = arith.constant 0 : i32
    %c0_i32_0 = arith.constant 0 : i32
    %c0_i32_1 = arith.constant 0 : i32
    return %c0_i32, %c0_i32_0 : i32, i32
  }
  func.func @transform_7(%arg0: i32, %arg1: i32) -> (i32, i32) {
    %c0_i32 = arith.constant 0 : i32
    %c0_i32_0 = arith.constant 0 : i32
    return %arg0, %c0_i32 : i32, i32
  }
}

</mosaic_0001>

<llo_original>
// kernel: roi_head_forward.1
$region0: #{roi_head_forward.1}
  #allocation0 [shape = 'u32[]', space=smem, size = 0x4, offset = 0x4, fixed_abs, tag = 'smem constant byte address 0x4 - core index']
  #allocation1 [shape = 'u32[144,128]{1,0:T(1,128)}', space=vmem, size = 0x12000, scoped, tag = 'internal scratch']
  #allocation2 [shape = 'f32[32,1024]{1,0:T(8,128)}', space=vmem, size = 0x20000, scoped, tag = 'scratch operand']
  %s0 = inlined_call_operand.vmem [shape: bf16[32,896], index: 0, kind: input, shape index: {}]
  %s1 = inlined_call_operand.vmem [shape: bf16[896,1024], index: 1, kind: input, shape index: {}]
  %s2 = inlined_call_operand.vmem [shape: f32[1,1024], index: 2, kind: input, shape index: {}]
  %s3 = inlined_call_operand.vmem [shape: bf16[1024,1024], index: 3, kind: input, shape index: {}]
  %s4 = inlined_call_operand.vmem [shape: f32[1,1024], index: 4, kind: input, shape index: {}]
  %s5 = inlined_call_operand.vmem [shape: bf16[1024,128], index: 5, kind: input, shape index: {}]
  %s6 = inlined_call_operand.vmem [shape: f32[1,128], index: 6, kind: input, shape index: {}]
  %s7 = inlined_call_operand.vmem [shape: f32[32,128], index: 7, kind: output, shape index: {}]
  %s8 = sld [smem:[#allocation0]]
  $region110: #{roi_head_forward.1} parent=0
    _
  %s10 = ssub.s32 1, %s8
  %s11 = scalar_select 0, %s10, %s8
  $region1: #{roi_head_forward.1} parent=0
    #allocation3 [shape = 'u8[16384]{0}', space=vmem, size = 0x4000, scoped, tag = 'input window, operand 0']
    loop: start=0, step=1, limit=9
    $region2: #{roi_head_forward.1} parent=1 // loop_pre_header
      _
    $region3: #{roi_head_forward.1} parent=1 // loop_header
      %s13 = sphi 0, %s17
      %p14 = scmp.ge.s32.totalorder %s13, 9
      %s20 = sphi 0, %s32
      %s21 = sphi 0, %s28
      %s22 = sphi 0, %s20
      %s23 = sphi 0, %s21
      %s24 = sphi 0, %s22
      %s25 = sphi 0, %s23
      %s37 = sphi 0, %s39
      %s40 = sphi 0, %s37
      %s41 = sphi 0, %s40
      %s57 = sphi 0, %s41
      %s63 = sphi 0, %s65
      %s66 = sphi 0, %s63
      %s67 = sphi 0, %s66
      %s83 = sphi 0, %s67
      %s87 = sphi 0, %s87
      %s89 = sphi 0, %s87
      %s90 = sphi 0, %s89
      %s104 = sphi 0, %s90
      %s108 = sphi 0, %s108
      %s110 = sphi 0, %s108
      %s111 = sphi 0, %s110
      %s125 = sphi 0, %s111
      %s129 = sphi 0, %s129
      %s131 = sphi 0, %s129
      %s132 = sphi 0, %s131
      %s146 = sphi 0, %s132
      %s150 = sphi 0, %s150
      %s152 = sphi 0, %s150
      %s153 = sphi 0, %s152
      %s167 = sphi 0, %s153
      %s171 = sphi 0, %s171
      %s173 = sphi 0, %s171
      %s174 = sphi 0, %s173
      %s188 = sphi 0, %s174
      %s194 = sphi 0, %s196
      %s197 = sphi 0, %s194
      %s198 = sphi 0, %s197
      %s214 = sphi 0, %s198
    $region4: #{roi_head_forward.1} parent=1 // loop_header_branch
      %16 = sbr.rel (%p14) target = $region8
    $region5: #{roi_head_forward.1} parent=1 // loop_body
      %s18 = ssub.s32 %s13, 1
      %s19 = ssub.s32 %s13, 2
      %s26 = sadd.s32 1, %s21
      %p27 = scmp.ge.s32.totalorder %s26, 7
      %s28 = scalar_select %p27, 0, %s26
      %s29 = sadd.s32 1, %s20
      %s30 = scalar_select %p27, %s29, %s20
      %p31 = scmp.ge.s32.totalorder %s30, 1
      %s32 = scalar_select %p31, 0, %s30
      %s33 = ssub.s32 %s20, %s32
      %s34 = ssub.s32 %s21, %s28
      %s35 = sor.u32 %s33, %s34
      %p36 = scmp.eq.s32.totalorder %s35, 0
      %s38 = sadd.s32 %s37, 1
      %s39 = scalar_select %p36, %s37, %s38
      %p42 = pneg %p36
      %p43 = scmp.eq.s32.totalorder %s13, 6
      %p44 = por %p42, %p43
      %p45 = scmp.ne.s32.totalorder %s37, %s40
      %p46 = scmp.eq.s32.totalorder %s13, 0
      %p47 = por %p45, %p46
      %p48 = scmp.ne.s32.totalorder %s37, %s40
      %p49 = scmp.eq.s32.totalorder %s18, 6
      %p50 = por %p48, %p49
      %p51 = scmp.ne.s32.totalorder %s40, %s41
      %p52 = scmp.eq.s32.totalorder %s18, 0
      %p53 = por %p51, %p52
      %p54 = scmp.ne.s32.totalorder %s40, %s41
      %p55 = scmp.eq.s32.totalorder %s19, 6
      %p56 = por %p54, %p55
      %p58 = scmp.ne.s32.totalorder %s41, %s57
      %p59 = scmp.eq.s32.totalorder %s19, 0
      %p60 = por %p58, %p59
      %s61 = ssub.s32 %s21, %s28
      %p62 = scmp.eq.s32.totalorder %s61, 0
      %s64 = sadd.s32 %s63, 1
      %s65 = scalar_select %p62, %s63, %s64
      %p68 = pneg %p62
      %p69 = scmp.eq.s32.totalorder %s13, 6
      %p70 = por %p68, %p69
      %p71 = scmp.ne.s32.totalorder %s63, %s66
      %p72 = scmp.eq.s32.totalorder %s13, 0
      %p73 = por %p71, %p72
      %p74 = scmp.ne.s32.totalorder %s63, %s66
      %p75 = scmp.eq.s32.totalorder %s18, 6
      %p76 = por %p74, %p75
      %p77 = scmp.ne.s32.totalorder %s66, %s67
      %p78 = scmp.eq.s32.totalorder %s18, 0
      %p79 = por %p77, %p78
      %p80 = scmp.ne.s32.totalorder %s66, %s67
      %p81 = scmp.eq.s32.totalorder %s19, 6
      %p82 = por %p80, %p81
      %p84 = scmp.ne.s32.totalorder %s67, %s83
      %p85 = scmp.eq.s32.totalorder %s19, 0
      %p86 = por %p84, %p85
      %s88 = sadd.s32 %s87, 1
      %p91 = scmp.eq.s32.totalorder %s13, 6
      %p92 = scmp.ne.s32.totalorder %s87, %s89
      %p93 = scmp.eq.s32.totalorder %s13, 0
      %p94 = por %p92, %p93
      %p95 = scmp.ne.s32.totalorder %s87, %s89
      %p96 = scmp.eq.s32.totalorder %s18, 6
      %p97 = por %p95, %p96
      %p98 = scmp.ne.s32.totalorder %s89, %s90
      %p99 = scmp.eq.s32.totalorder %s18, 0
      %p100 = por %p98, %p99
      %p101 = scmp.ne.s32.totalorder %s89, %s90
      %p102 = scmp.eq.s32.totalorder %s19, 6
      %p103 = por %p101, %p102
      %p105 = scmp.ne.s32.totalorder %s90, %s104
      %p106 = scmp.eq.s32.totalorder %s19, 0
      %p107 = por %p105, %p106
      %s109 = sadd.s32 %s108, 1
      %p112 = scmp.eq.s32.totalorder %s13, 6
      %p113 = scmp.ne.s32.totalorder %s108, %s110
      %p114 = scmp.eq.s32.totalorder %s13, 0
      %p115 = por %p113, %p114
      %p116 = scmp.ne.s32.totalorder %s108, %s110
      %p117 = scmp.eq.s32.totalorder %s18, 6
      %p118 = por %p116, %p117
      %p119 = scmp.ne.s32.totalorder %s110, %s111
      %p120 = scmp.eq.s32.totalorder %s18, 0
      %p121 = por %p119, %p120
      %p122 = scmp.ne.s32.totalorder %s110, %s111
      %p123 = scmp.eq.s32.totalorder %s19, 6
      %p124 = por %p122, %p123
      %p126 = scmp.ne.s32.totalorder %s111, %s125
      %p127 = scmp.eq.s32.totalorder %s19, 0
      %p128 = por %p126, %p127
      %s130 = sadd.s32 %s129, 1
      %p133 = scmp.eq.s32.totalorder %s13, 6
      %p134 = scmp.ne.s32.totalorder %s129, %s131
      %p135 = scmp.eq.s32.totalorder %s13, 0
      %p136 = por %p134, %p135
      %p137 = scmp.ne.s32.totalorder %s129, %s131
      %p138 = scmp.eq.s32.totalorder %s18, 6
      %p139 = por %p137, %p138
      %p140 = scmp.ne.s32.totalorder %s131, %s132
      %p141 = scmp.eq.s32.totalorder %s18, 0
      %p142 = por %p140, %p141
      %p143 = scmp.ne.s32.totalorder %s131, %s132
      %p144 = scmp.eq.s32.totalorder %s19, 6
      %p145 = por %p143, %p144
      %p147 = scmp.ne.s32.totalorder %s132, %s146
      %p148 = scmp.eq.s32.totalorder %s19, 0
      %p149 = por %p147, %p148
      %s151 = sadd.s32 %s150, 1
      %p154 = scmp.eq.s32.totalorder %s13, 6
      %p155 = scmp.ne.s32.totalorder %s150, %s152
      %p156 = scmp.eq.s32.totalorder %s13, 0
      %p157 = por %p155, %p156
      %p158 = scmp.ne.s32.totalorder %s150, %s152
      %p159 = scmp.eq.s32.totalorder %s18, 6
      %p160 = por %p158, %p159
      %p161 = scmp.ne.s32.totalorder %s152, %s153
      %p162 = scmp.eq.s32.totalorder %s18, 0
      %p163 = por %p161, %p162
      %p164 = scmp.ne.s32.totalorder %s152, %s153
      %p165 = scmp.eq.s32.totalorder %s19, 6
      %p166 = por %p164, %p165
      %p168 = scmp.ne.s32.totalorder %s153, %s167
      %p169 = scmp.eq.s32.totalorder %s19, 0
      %p170 = por %p168, %p169
      %s172 = sadd.s32 %s171, 1
      %p175 = scmp.eq.s32.totalorder %s13, 6
      %p176 = scmp.ne.s32.totalorder %s171, %s173
      %p177 = scmp.eq.s32.totalorder %s13, 0
      %p178 = por %p176, %p177
      %p179 = scmp.ne.s32.totalorder %s171, %s173
      %p180 = scmp.eq.s32.totalorder %s18, 6
      %p181 = por %p179, %p180
      %p182 = scmp.ne.s32.totalorder %s173, %s174
      %p183 = scmp.eq.s32.totalorder %s18, 0
      %p184 = por %p182, %p183
      %p185 = scmp.ne.s32.totalorder %s173, %s174
      %p186 = scmp.eq.s32.totalorder %s19, 6
      %p187 = por %p185, %p186
      %p189 = scmp.ne.s32.totalorder %s174, %s188
      %p190 = scmp.eq.s32.totalorder %s19, 0
      %p191 = por %p189, %p190
      %s192 = ssub.s32 %s20, %s32
      %p193 = scmp.eq.s32.totalorder %s192, 0
      %s195 = sadd.s32 %s194, 1
      %s196 = scalar_select %p193, %s194, %s195
      %p199 = pneg %p193
      %p200 = scmp.eq.s32.totalorder %s13, 6
      %p201 = por %p199, %p200
      %p202 = scmp.ne.s32.totalorder %s194, %s197
      %p203 = scmp.eq.s32.totalorder %s13, 0
      %p204 = por %p202, %p203
      %p205 = scmp.ne.s32.totalorder %s194, %s197
      %p206 = scmp.eq.s32.totalorder %s18, 6
      %p207 = por %p205, %p206
      %p208 = scmp.ne.s32.totalorder %s197, %s198
      %p209 = scmp.eq.s32.totalorder %s18, 0
      %p210 = por %p208, %p209
      %p211 = scmp.ne.s32.totalorder %s197, %s198
      %p212 = scmp.eq.s32.totalorder %s19, 6
      %p213 = por %p211, %p212
      %p215 = scmp.ne.s32.totalorder %s198, %s214
      %p216 = scmp.eq.s32.totalorder %s19, 0
      %p217 = por %p215, %p216
      %p218 = scmp.le.s32.totalorder 1, %s13
      %p219 = scmp.lt.s32.totalorder %s13, 8
      %p220 = pnand %p218, %p219
      %p221 = pneg %p220
      // Predicated region
      $region9: #{roi_head_forward.1} parent=5 // pred_check
        _
      $region10: #{roi_head_forward.1} parent=5 // pred_check_branch
        %223 = sbr.rel (%p220) target = $region12
      $region11: #{roi_head_forward.1} parent=5 // pred_region
        %s224 = ssub.s32 %s13, 1
        // Predicated region
        $region13: #{roi_head_forward.1} parent=11 // pred_check
          %p225 = pneg %p100
        $region14: #{roi_head_forward.1} parent=11 // pred_check_branch
          %227 = sbr.rel (%p225) target = $region16
        $region15: #{roi_head_forward.1} parent=11 // pred_region
          _
        $region16: #{roi_head_forward.1} parent=11 // pred_fallthru
          _
        // Predicated region
        $region17: #{roi_head_forward.1} parent=11 // pred_check
          %p228 = pneg %p121
        $region18: #{roi_head_forward.1} parent=11 // pred_check_branch
          %230 = sbr.rel (%p228) target = $region20
        $region19: #{roi_head_forward.1} parent=11 // pred_region
          _
        $region20: #{roi_head_forward.1} parent=11 // pred_fallthru
          _
        // Predicated region
        $region21: #{roi_head_forward.1} parent=11 // pred_check
          %p231 = pneg %p142
        $region22: #{roi_head_forward.1} parent=11 // pred_check_branch
          %233 = sbr.rel (%p231) target = $region24
        $region23: #{roi_head_forward.1} parent=11 // pred_region
          _
        $region24: #{roi_head_forward.1} parent=11 // pred_fallthru
          _
        // Predicated region
        $region25: #{roi_head_forward.1} parent=11 // pred_check
          %p234 = pneg %p163
        $region26: #{roi_head_forward.1} parent=11 // pred_check_branch
          %236 = sbr.rel (%p234) target = $region28
        $region27: #{roi_head_forward.1} parent=11 // pred_region
          _
        $region28: #{roi_head_forward.1} parent=11 // pred_fallthru
          _
        // Predicated region
        $region29: #{roi_head_forward.1} parent=11 // pred_check
          %p237 = pneg %p184
        $region30: #{roi_head_forward.1} parent=11 // pred_check_branch
          %239 = sbr.rel (%p237) target = $region32
        $region31: #{roi_head_forward.1} parent=11 // pred_region
          _
        $region32: #{roi_head_forward.1} parent=11 // pred_fallthru
          _
      $region12: #{roi_head_forward.1} parent=5 // pred_fallthru
        _
      %p240 = scmp.lt.s32.totalorder %s13, 7
      // Predicated region
      $region33: #{roi_head_forward.1} parent=5 // pred_check
        %p241 = pneg %p240
      $region34: #{roi_head_forward.1} parent=5 // pred_check_branch
        %243 = sbr.rel (%p241) target = $region36
      $region35: #{roi_head_forward.1} parent=5 // pred_region
        // Predicated region
        $region37: #{roi_head_forward.1} parent=35 // pred_check
          %p244 = pneg %p47
        $region38: #{roi_head_forward.1} parent=35 // pred_check_branch
          %246 = sbr.rel (%p244) target = $region40
        $region39: #{roi_head_forward.1} parent=35 // pred_region
          %s247 = sand.u32 %s37, 1
          %s248 = sand.u32 %s37, 1
          %s249 = smul.addr %s248, 16
          %s250 = scalar_lea.vmem [#allocation3], %s249
          %s251 = smul.u32 4, %s20
          %s252 = smul.addr %s251, 7
          %s253 = sadd.s32 %s21, %s252
          %s254 = smul.addr %s253, 4
          %s255 = scalar_lea.vmem %s0, %s254
          // Predicated region
          $region41: #{roi_head_forward.1} parent=39 // pred_check
            _
          $region42: #{roi_head_forward.1} parent=39 // pred_check_branch
            %257 = sbr.rel (0) target = $region44
          $region43: #{roi_head_forward.1} parent=39 // pred_region
            // Predicated region
            $region45: #{roi_head_forward.1} parent=43 // pred_check
              _
            $region46: #{roi_head_forward.1} parent=43 // pred_check_branch
              %259 = sbr.rel target = $region48
            $region47: #{roi_head_forward.1} parent=43 // pred_region
              // Predicated region
              $region60: #{roi_head_forward.1} parent=47 // pred_check
                _
              $region61: #{roi_head_forward.1} parent=47 // pred_check_branch
                %280 = sbr.rel (0) target = $region63
              $region62: #{roi_head_forward.1} parent=47 // pred_region
                loop: start=0, step=1, limit=1
                $region64: #{roi_head_forward.1} parent=62 // loop_pre_header
                  _
                $region65: #{roi_head_forward.1} parent=62 // loop_header
                  %s282 = sphi 0, %s286
                  %p283 = scmp.ge.s32.totalorder %s282, 1
                  %s287 = sphi %s255, %s255
                  %s288 = sphi %s250, %s250
                $region66: #{roi_head_forward.1} parent=62 // loop_header_branch
                  %285 = sbr.rel (%p283) target = $region70
                $region67: #{roi_head_forward.1} parent=62 // loop_body
                  _
                $region68: #{roi_head_forward.1} parent=62 // loop_footer
                  %s286 = sadd.s32 1, %s282
                $region69: #{roi_head_forward.1} parent=62 // loop_footer_branch
                  %281 = sbr.rel target = $region65
                $region70: #{roi_head_forward.1} parent=62 // loop_exit
                  _
                loop: start=0, step=1, limit=1
                $region71: #{roi_head_forward.1} parent=62 // loop_pre_header
                  _
                $region72: #{roi_head_forward.1} parent=62 // loop_header
                  %s291 = sphi 0, %s295
                  %p292 = scmp.ge.s32.totalorder %s291, 1
                  %s296 = sphi %s255, %s255
                  %s297 = sphi %s250, %s250
                $region73: #{roi_head_forward.1} parent=62 // loop_header_branch
                  %294 = sbr.rel (%p292) target = $region77
                $region74: #{roi_head_forward.1} parent=62 // loop_body
                  %v298 = vld [vmem:[%s296] sm:$0xf]
                  %299 = vst [vmem:[%s297] sm:$0xf] %v298
                  %v300 = vld [vmem:[%s296 + $0x1c] sm:$0xf]
                  %301 = vst [vmem:[%s297 + $0x4] sm:$0xf] %v300
                  %v302 = vld [vmem:[%s296 + $0x38] sm:$0xf]
                  %303 = vst [vmem:[%s297 + $0x8] sm:$0xf] %v302
                  %v304 = vld [vmem:[%s296 + $0x54] sm:$0xf]
                  %305 = vst [vmem:[%s297 + $0xc] sm:$0xf] %v304
                $region75: #{roi_head_forward.1} parent=62 // loop_footer
                  %s295 = sadd.s32 1, %s291
                $region76: #{roi_head_forward.1} parent=62 // loop_footer_branch
                  %290 = sbr.rel target = $region72
                $region77: #{roi_head_forward.1} parent=62 // loop_exit
                  _
              $region63: #{roi_head_forward.1} parent=47 // pred_fallthru
                _
            $region48: #{roi_head_forward.1} parent=43 // pred_fallthru
              _
            // Predicated region
            $region49: #{roi_head_forward.1} parent=43 // pred_check
              _
            $region50: #{roi_head_forward.1} parent=43 // pred_check_branch
              %261 = sbr.rel (0) target = $region52
            $region51: #{roi_head_forward.1} parent=43 // pred_region
              loop: start=0, step=1, limit=1
              $region53: #{roi_head_forward.1} parent=51 // loop_pre_header
                _
              $region54: #{roi_head_forward.1} parent=51 // loop_header
                %s264 = sphi 0, %s268
                %p265 = scmp.ge.s32.totalorder %s264, 1
                %s269 = sphi %s255, %s255
                %s270 = sphi %s250, %s250
              $region55: #{roi_head_forward.1} parent=51 // loop_header_branch
                %267 = sbr.rel (%p265) target = $region59
              $region56: #{roi_head_forward.1} parent=51 // loop_body
                %v271 = vld [vmem:[%s269] sm:$0xf]
                %272 = vst [vmem:[%s270] sm:$0xf] %v271
                %v273 = vld [vmem:[%s269 + $0x1c] sm:$0xf]
                %274 = vst [vmem:[%s270 + $0x4] sm:$0xf] %v273
                %v275 = vld [vmem:[%s269 + $0x38] sm:$0xf]
                %276 = vst [vmem:[%s270 + $0x8] sm:$0xf] %v275
                %v277 = vld [vmem:[%s269 + $0x54] sm:$0xf]
                %278 = vst [vmem:[%s270 + $0xc] sm:$0xf] %v277
              $region57: #{roi_head_forward.1} parent=51 // loop_footer
                %s268 = sadd.s32 1, %s264
              $region58: #{roi_head_forward.1} parent=51 // loop_footer_branch
                %263 = sbr.rel target = $region54
              $region59: #{roi_head_forward.1} parent=51 // loop_exit
                _
            $region52: #{roi_head_forward.1} parent=43 // pred_fallthru
              _
          $region44: #{roi_head_forward.1} parent=39 // pred_fallthru
            _
          %306 = vnop
        $region40: #{roi_head_forward.1} parent=35 // pred_fallthru
          _
        // Predicated region
        $region78: #{roi_head_forward.1} parent=35 // pred_check
          %p307 = pneg %p73
        $region79: #{roi_head_forward.1} parent=35 // pred_check_branch
          %309 = sbr.rel (%p307) target = $region81
        $region80: #{roi_head_forward.1} parent=35 // pred_region
          %s310 = smul.u32 16, %s21
          %p311 = scmp.lt.s32.totalorder %s310, 111
          %s312 = scalar_select %p311, %s310, 111
          %s313 = smul.addr %s312, 8
          %s314 = smul.addr %s313, 4
          %s315 = scalar_lea.vmem %s1, %s314
          %s316 = smul.u32 16, %s21
        $region81: #{roi_head_forward.1} parent=35 // pred_fallthru
          _
      $region36: #{roi_head_forward.1} parent=5 // pred_fallthru
        _
      %p317 = scmp.le.s32.totalorder 1, %s13
      %p318 = scmp.lt.s32.totalorder %s13, 8
      %p319 = pnand %p317, %p318
      %p320 = pneg %p319
      // Predicated region
      $region82: #{roi_head_forward.1} parent=5 // pred_check
        _
      $region83: #{roi_head_forward.1} parent=5 // pred_check_branch
        %322 = sbr.rel (%p319) target = $region85
      $region84: #{roi_head_forward.1} parent=5 // pred_region
        %s323 = ssub.s32 %s13, 1
        %s324 = sand.u32 %s40, 1
        %s325 = sand.u32 %s40, 1
        %s326 = smul.addr %s325, 16
        %s327 = scalar_lea.vmem [#allocation3], %s326
        // Predicated region
        $region86: #{roi_head_forward.1} parent=84 // pred_check
          %p328 = pneg %p53
        $region87: #{roi_head_forward.1} parent=84 // pred_check_branch
          %330 = sbr.rel (%p328) target = $region89
        $region88: #{roi_head_forward.1} parent=84 // pred_region
          _
        $region89: #{roi_head_forward.1} parent=84 // pred_fallthru
          _
        %s331 = sand.u32 %s40, 1
        %s332 = sand.u32 %s40, 1
        %s333 = smul.addr %s332, 16
        %s334 = scalar_lea.vmem [#allocation3], %s333
        %p335 = pneg %p53
        %p336 = pneg %p50
        %s337 = smul.u32 16, %s23
        %p338 = scmp.lt.s32.totalorder %s337, 111
        %s339 = scalar_select %p338, %s337, 111
        %s340 = smul.addr %s339, 8
        %s341 = smul.addr %s340, 4
        %s342 = scalar_lea.vmem %s1, %s341
        %p343 = pneg %p79
        %p344 = pneg %p76
        %p345 = pneg %p100
        %p346 = pneg %p97
        %p347 = pneg %p121
        %p348 = pneg %p118
        %p349 = pneg %p142
        %p350 = pneg %p139
        %p351 = pneg %p163
        %p352 = pneg %p160
        %p353 = pneg %p184
        %p354 = pneg %p181
        %p355 = pneg %p210
        %p356 = pneg %p207
        %s357 = smul.u32 4, %s22
        %p358 = scmp.lt.s32.totalorder %s357, 3
        %s359 = scalar_select %p358, %s357, 3
        %s360 = smul.addr %s359, 8
        %s361 = scalar_lea.vmem %s7, %s360
        %s362 = smul.u32 4, %s22
        %s363 = smul.u32 16, %s23
        %p364 = scmp.lt.s32.totalorder %s363, 111
        %s365 = scalar_select %p364, %s363, 111
        %s366 = smul.addr %s365, 8
        %s367 = smul.addr %s366, 4
        %s368 = scalar_lea.vmem %s1, %s367
        %s369 = smul.u32 16, %s23
        %s370 = smul.u32 4, %s22
        %p371 = scmp.lt.s32.totalorder %s370, 3
        %s372 = scalar_select %p371, %s370, 3
        %s373 = smul.addr %s372, 8
        %s374 = scalar_lea.vmem %s7, %s373
        %s375 = smul.u32 4, %s22
        %p377 = scmp.eq.s32.totalorder %s23, 0
        // Predicated region
        $region90: #{roi_head_forward.1} parent=84 // pred_check
          %p378 = pneg %p377
        $region91: #{roi_head_forward.1} parent=84 // pred_check_branch
          %380 = sbr.rel (%p378) target = $region93
        $region92: #{roi_head_forward.1} parent=84 // pred_region
          %v381 = vld [vmem:[%s2] sm:$0xff]
          %v383 = vlaneseq
          %v384 = vshrl.u32 %v383, 7
          %v385 = vsub.s32 0, %v384
          %v386 = vrot.slane %v381, %v385
          %v387 = vlaneseq
          %v388 = vshrl.u32 %v387, 7
          %v389 = vsub.s32 1, %v388
          %v390 = vrot.slane %v381, %v389
          %v391 = vlaneseq
          %v392 = vshrl.u32 %v391, 7
          %v393 = vsub.s32 2, %v392
          %v394 = vrot.slane %v381, %v393
          %v395 = vlaneseq
          %v396 = vshrl.u32 %v395, 7
          %v397 = vsub.s32 3, %v396
          %v398 = vrot.slane %v381, %v397
          %v399 = vlaneseq
          %v400 = vshrl.u32 %v399, 7
          %v401 = vsub.s32 4, %v400
          %v402 = vrot.slane %v381, %v401
          %v403 = vlaneseq
          %v404 = vshrl.u32 %v403, 7
          %v405 = vsub.s32 5, %v404
          %v406 = vrot.slane %v381, %v405
          %v407 = vlaneseq
          %v408 = vshrl.u32 %v407, 7
          %v409 = vsub.s32 6, %v408
          %v410 = vrot.slane %v381, %v409
          %v411 = vlaneseq
          %v412 = vshrl.u32 %v411, 7
          %v413 = vsub.s32 7, %v412
          %v414 = vrot.slane %v381, %v413
          %423 = vst [vmem:[#allocation2] sm:$0xff] %v386
          %424 = vst [vmem:[#allocation2 + $0x8] sm:$0xff] %v390
          %425 = vst [vmem:[#allocation2 + $0x10] sm:$0xff] %v394
          %426 = vst [vmem:[#allocation2 + $0x18] sm:$0xff] %v398
          %427 = vst [vmem:[#allocation2 + $0x20] sm:$0xff] %v402
          %428 = vst [vmem:[#allocation2 + $0x28] sm:$0xff] %v406
          %429 = vst [vmem:[#allocation2 + $0x30] sm:$0xff] %v410
          %430 = vst [vmem:[#allocation2 + $0x38] sm:$0xff] %v414
          %431 = vst [vmem:[#allocation2 + $0x40] sm:$0xff] %v386
          %432 = vst [vmem:[#allocation2 + $0x48] sm:$0xff] %v390
          %433 = vst [vmem:[#allocation2 + $0x50] sm:$0xff] %v394
          %434 = vst [vmem:[#allocation2 + $0x58] sm:$0xff] %v398
          %435 = vst [vmem:[#allocation2 + $0x60] sm:$0xff] %v402
          %436 = vst [vmem:[#allocation2 + $0x68] sm:$0xff] %v406
          %437 = vst [vmem:[#allocation2 + $0x70] sm:$0xff] %v410
          %438 = vst [vmem:[#allocation2 + $0x78] sm:$0xff] %v414
          %439 = vst [vmem:[#allocation2 + $0x80] sm:$0xff] %v386
          %440 = vst [vmem:[#allocation2 + $0x88] sm:$0xff] %v390
          %441 = vst [vmem:[#allocation2 + $0x90] sm:$0xff] %v394
          %442 = vst [vmem:[#allocation2 + $0x98] sm:$0xff] %v398
          %443 = vst [vmem:[#allocation2 + $0xa0] sm:$0xff] %v402
          %444 = vst [vmem:[#allocation2 + $0xa8] sm:$0xff] %v406
          %445 = vst [vmem:[#allocation2 + $0xb0] sm:$0xff] %v410
          %446 = vst [vmem:[#allocation2 + $0xb8] sm:$0xff] %v414
          %447 = vst [vmem:[#allocation2 + $0xc0] sm:$0xff] %v386
          %448 = vst [vmem:[#allocation2 + $0xc8] sm:$0xff] %v390
          %449 = vst [vmem:[#allocation2 + $0xd0] sm:$0xff] %v394
          %450 = vst [vmem:[#allocation2 + $0xd8] sm:$0xff] %v398
          %451 = vst [vmem:[#allocation2 + $0xe0] sm:$0xff] %v402
          %452 = vst [vmem:[#allocation2 + $0xe8] sm:$0xff] %v406
          %453 = vst [vmem:[#allocation2 + $0xf0] sm:$0xff] %v410
          %454 = vst [vmem:[#allocation2 + $0xf8] sm:$0xff] %v414
        $region93: #{roi_head_forward.1} parent=84 // pred_fallthru
          _
        %v455 = vld [vmem:[#allocation2] sm:$0xff]
        %v456 = vld [vmem:[#allocation2 + $0x8] sm:$0xff]
        %v457 = vld [vmem:[#allocation2 + $0x10] sm:$0xff]
        %v458 = vld [vmem:[#allocation2 + $0x18] sm:$0xff]
        %v459 = vld [vmem:[#allocation2 + $0x20] sm:$0xff]
        %v460 = vld [vmem:[#allocation2 + $0x28] sm:$0xff]
        %v461 = vld [vmem:[#allocation2 + $0x30] sm:$0xff]
        %v462 = vld [vmem:[#allocation2 + $0x38] sm:$0xff]
        %v463 = vld [vmem:[#allocation2 + $0x40] sm:$0xff]
        %v464 = vld [vmem:[#allocation2 + $0x48] sm:$0xff]
        %v465 = vld [vmem:[#allocation2 + $0x50] sm:$0xff]
        %v466 = vld [vmem:[#allocation2 + $0x58] sm:$0xff]
        %v467 = vld [vmem:[#allocation2 + $0x60] sm:$0xff]
        %v468 = vld [vmem:[#allocation2 + $0x68] sm:$0xff]
        %v469 = vld [vmem:[#allocation2 + $0x70] sm:$0xff]
        %v470 = vld [vmem:[#allocation2 + $0x78] sm:$0xff]
        %v471 = vld [vmem:[#allocation2 + $0x80] sm:$0xff]
        %v472 = vld [vmem:[#allocation2 + $0x88] sm:$0xff]
        %v473 = vld [vmem:[#allocation2 + $0x90] sm:$0xff]
        %v474 = vld [vmem:[#allocation2 + $0x98] sm:$0xff]
        %v475 = vld [vmem:[#allocation2 + $0xa0] sm:$0xff]
        %v476 = vld [vmem:[#allocation2 + $0xa8] sm:$0xff]
        %v477 = vld [vmem:[#allocation2 + $0xb0] sm:$0xff]
        %v478 = vld [vmem:[#allocation2 + $0xb8] sm:$0xff]
        %v479 = vld [vmem:[#allocation2 + $0xc0] sm:$0xff]
        %v480 = vld [vmem:[#allocation2 + $0xc8] sm:$0xff]
        %v481 = vld [vmem:[#allocation2 + $0xd0] sm:$0xff]
        %v482 = vld [vmem:[#allocation2 + $0xd8] sm:$0xff]
        %v483 = vld [vmem:[#allocation2 + $0xe0] sm:$0xff]
        %v484 = vld [vmem:[#allocation2 + $0xe8] sm:$0xff]
        %v485 = vld [vmem:[#allocation2 + $0xf0] sm:$0xff]
        %v486 = vld [vmem:[#allocation2 + $0xf8] sm:$0xff]
        %v487 = vld [vmem:[%s327] sm:$0xf]
        %v488 = vld [vmem:[%s327 + $0x4] sm:$0xf]
        %v489 = vld [vmem:[%s327 + $0x8] sm:$0xf]
        %v490 = vld [vmem:[%s327 + $0xc] sm:$0xf]
        %v491 = vld [vmem:[%s368] sm:$0xff]
        %v492 = vld [vmem:[%s368 + $0x8] sm:$0xff]
        %v493 = vld [vmem:[%s368 + $0x10] sm:$0xff]
        %v494 = vld [vmem:[%s368 + $0x18] sm:$0xff]
        %v495 = vld [vmem:[%s368 + $0x20] sm:$0xff]
        %v496 = vld [vmem:[%s368 + $0x28] sm:$0xff]
        %v497 = vld [vmem:[%s368 + $0x30] sm:$0xff]
        %v498 = vld [vmem:[%s368 + $0x38] sm:$0xff]
        %v499 = vld [vmem:[%s368 + $0x40] sm:$0xff]
        %v500 = vld [vmem:[%s368 + $0x48] sm:$0xff]
        %v501 = vld [vmem:[%s368 + $0x50] sm:$0xff]
        %v502 = vld [vmem:[%s368 + $0x58] sm:$0xff]
        %v503 = vld [vmem:[%s368 + $0x60] sm:$0xff]
        %v504 = vld [vmem:[%s368 + $0x68] sm:$0xff]
        %v505 = vld [vmem:[%s368 + $0x70] sm:$0xff]
        %v506 = vld [vmem:[%s368 + $0x78] sm:$0xff]
        %v507 = vld [vmem:[%s368 + $0x80] sm:$0xff]
        %v508 = vld [vmem:[%s368 + $0x88] sm:$0xff]
        %v509 = vld [vmem:[%s368 + $0x90] sm:$0xff]
        %v510 = vld [vmem:[%s368 + $0x98] sm:$0xff]
        %v511 = vld [vmem:[%s368 + $0xa0] sm:$0xff]
        %v512 = vld [vmem:[%s368 + $0xa8] sm:$0xff]
        %v513 = vld [vmem:[%s368 + $0xb0] sm:$0xff]
        %v514 = vld [vmem:[%s368 + $0xb8] sm:$0xff]
        %v515 = vld [vmem:[%s368 + $0xc0] sm:$0xff]
        %v516 = vld [vmem:[%s368 + $0xc8] sm:$0xff]
        %v517 = vld [vmem:[%s368 + $0xd0] sm:$0xff]
        %v518 = vld [vmem:[%s368 + $0xd8] sm:$0xff]
        %v519 = vld [vmem:[%s368 + $0xe0] sm:$0xff]
        %v520 = vld [vmem:[%s368 + $0xe8] sm:$0xff]
        %v521 = vld [vmem:[%s368 + $0xf0] sm:$0xff]
        %v522 = vld [vmem:[%s368 + $0xf8] sm:$0xff]
        %v523 = vld [vmem:[%s368 + $0x100] sm:$0xff]
        %v524 = vld [vmem:[%s368 + $0x108] sm:$0xff]
        %v525 = vld [vmem:[%s368 + $0x110] sm:$0xff]
        %v526 = vld [vmem:[%s368 + $0x118] sm:$0xff]
        %v527 = vld [vmem:[%s368 + $0x120] sm:$0xff]
        %v528 = vld [vmem:[%s368 + $0x128] sm:$0xff]
        %v529 = vld [vmem:[%s368 + $0x130] sm:$0xff]
        %v530 = vld [vmem:[%s368 + $0x138] sm:$0xff]
        %v531 = vld [vmem:[%s368 + $0x140] sm:$0xff]
        %v532 = vld [vmem:[%s368 + $0x148] sm:$0xff]
        %v533 = vld [vmem:[%s368 + $0x150] sm:$0xff]
        %v534 = vld [vmem:[%s368 + $0x158] sm:$0xff]
        %v535 = vld [vmem:[%s368 + $0x160] sm:$0xff]
        %v536 = vld [vmem:[%s368 + $0x168] sm:$0xff]
        %v537 = vld [vmem:[%s368 + $0x170] sm:$0xff]
        %v538 = vld [vmem:[%s368 + $0x178] sm:$0xff]
        %v539 = vld [vmem:[%s368 + $0x180] sm:$0xff]
        %v540 = vld [vmem:[%s368 + $0x188] sm:$0xff]
        %v541 = vld [vmem:[%s368 + $0x190] sm:$0xff]
        %v542 = vld [vmem:[%s368 + $0x198] sm:$0xff]
        %v543 = vld [vmem:[%s368 + $0x1a0] sm:$0xff]
        %v544 = vld [vmem:[%s368 + $0x1a8] sm:$0xff]
        %v545 = vld [vmem:[%s368 + $0x1b0] sm:$0xff]
        %v546 = vld [vmem:[%s368 + $0x1b8] sm:$0xff]
        %v547 = vld [vmem:[%s368 + $0x1c0] sm:$0xff]
        %v548 = vld [vmem:[%s368 + $0x1c8] sm:$0xff]
        %v549 = vld [vmem:[%s368 + $0x1d0] sm:$0xff]
        %v550 = vld [vmem:[%s368 + $0x1d8] sm:$0xff]
        %v551 = vld [vmem:[%s368 + $0x1e0] sm:$0xff]
        %v552 = vld [vmem:[%s368 + $0x1e8] sm:$0xff]
        %v553 = vld [vmem:[%s368 + $0x1f0] sm:$0xff]
        %v554 = vld [vmem:[%s368 + $0x1f8] sm:$0xff]
        %v559 = vunpack.c.l.b16 %v487
        %v560 = vunpack.c.l.b16 %v488
        %v561 = vunpack.c.l.b16 %v489
        %v562 = vunpack.c.l.b16 %v490
        %v563 = vpack.c.b16 %v560, %v559
        %v564 = vpack.c.b16 %v562, %v561
        %v631 = vunpack.c.l.b16 %v491
        %v632 = vunpack.c.h.b16 %v491
        %v633 = vunpack.c.l.b16 %v492
        %v634 = vunpack.c.h.b16 %v492
        %v635 = vunpack.c.l.b16 %v493
        %v636 = vunpack.c.h.b16 %v493
        %v637 = vunpack.c.l.b16 %v494
        %v638 = vunpack.c.h.b16 %v494
        %v639 = vunpack.c.l.b16 %v495
        %v640 = vunpack.c.h.b16 %v495
        %v641 = vunpack.c.l.b16 %v496
        %v642 = vunpack.c.h.b16 %v496
        %v643 = vunpack.c.l.b16 %v497
        %v644 = vunpack.c.h.b16 %v497
        %v645 = vunpack.c.l.b16 %v498
        %v646 = vunpack.c.h.b16 %v498
        %v647 = vunpack.c.l.b16 %v499
        %v648 = vunpack.c.h.b16 %v499
        %v649 = vunpack.c.l.b16 %v500
        %v650 = vunpack.c.h.b16 %v500
        %v651 = vunpack.c.l.b16 %v501
        %v652 = vunpack.c.h.b16 %v501
        %v653 = vunpack.c.l.b16 %v502
        %v654 = vunpack.c.h.b16 %v502
        %v655 = vunpack.c.l.b16 %v503
        %v656 = vunpack.c.h.b16 %v503
        %v657 = vunpack.c.l.b16 %v504
        %v658 = vunpack.c.h.b16 %v504
        %v659 = vunpack.c.l.b16 %v505
        %v660 = vunpack.c.h.b16 %v505
        %v661 = vunpack.c.l.b16 %v506
        %v662 = vunpack.c.h.b16 %v506
        %v663 = vunpack.c.l.b16 %v507
        %v664 = vunpack.c.h.b16 %v507
        %v665 = vunpack.c.l.b16 %v508
        %v666 = vunpack.c.h.b16 %v508
        %v667 = vunpack.c.l.b16 %v509
        %v668 = vunpack.c.h.b16 %v509
        %v669 = vunpack.c.l.b16 %v510
        %v670 = vunpack.c.h.b16 %v510
        %v671 = vunpack.c.l.b16 %v511
        %v672 = vunpack.c.h.b16 %v511
        %v673 = vunpack.c.l.b16 %v512
        %v674 = vunpack.c.h.b16 %v512
        %v675 = vunpack.c.l.b16 %v513
        %v676 = vunpack.c.h.b16 %v513
        %v677 = vunpack.c.l.b16 %v514
        %v678 = vunpack.c.h.b16 %v514
        %v679 = vunpack.c.l.b16 %v515
        %v680 = vunpack.c.h.b16 %v515
        %v681 = vunpack.c.l.b16 %v516
        %v682 = vunpack.c.h.b16 %v516
        %v683 = vunpack.c.l.b16 %v517
        %v684 = vunpack.c.h.b16 %v517
        %v685 = vunpack.c.l.b16 %v518
        %v686 = vunpack.c.h.b16 %v518
        %v687 = vunpack.c.l.b16 %v519
        %v688 = vunpack.c.h.b16 %v519
        %v689 = vunpack.c.l.b16 %v520
        %v690 = vunpack.c.h.b16 %v520
        %v691 = vunpack.c.l.b16 %v521
        %v692 = vunpack.c.h.b16 %v521
        %v693 = vunpack.c.l.b16 %v522
        %v694 = vunpack.c.h.b16 %v522
        %v695 = vunpack.c.l.b16 %v523
        %v696 = vunpack.c.h.b16 %v523
        %v697 = vunpack.c.l.b16 %v524
        %v698 = vunpack.c.h.b16 %v524
        %v699 = vunpack.c.l.b16 %v525
        %v700 = vunpack.c.h.b16 %v525
        %v701 = vunpack.c.l.b16 %v526
        %v702 = vunpack.c.h.b16 %v526
        %v703 = vunpack.c.l.b16 %v527
        %v704 = vunpack.c.h.b16 %v527
        %v705 = vunpack.c.l.b16 %v528
        %v706 = vunpack.c.h.b16 %v528
        %v707 = vunpack.c.l.b16 %v529
        %v708 = vunpack.c.h.b16 %v529
        %v709 = vunpack.c.l.b16 %v530
        %v710 = vunpack.c.h.b16 %v530
        %v711 = vunpack.c.l.b16 %v531
        %v712 = vunpack.c.h.b16 %v531
        %v713 = vunpack.c.l.b16 %v532
        %v714 = vunpack.c.h.b16 %v532
        %v715 = vunpack.c.l.b16 %v533
        %v716 = vunpack.c.h.b16 %v533
        %v717 = vunpack.c.l.b16 %v534
        %v718 = vunpack.c.h.b16 %v534
        %v719 = vunpack.c.l.b16 %v535
        %v720 = vunpack.c.h.b16 %v535
        %v721 = vunpack.c.l.b16 %v536
        %v722 = vunpack.c.h.b16 %v536
        %v723 = vunpack.c.l.b16 %v537
        %v724 = vunpack.c.h.b16 %v537
        %v725 = vunpack.c.l.b16 %v538
        %v726 = vunpack.c.h.b16 %v538
        %v727 = vunpack.c.l.b16 %v539
        %v728 = vunpack.c.h.b16 %v539
        %v729 = vunpack.c.l.b16 %v540
        %v730 = vunpack.c.h.b16 %v540
        %v731 = vunpack.c.l.b16 %v541
        %v732 = vunpack.c.h.b16 %v541
        %v733 = vunpack.c.l.b16 %v542
        %v734 = vunpack.c.h.b16 %v542
        %v735 = vunpack.c.l.b16 %v543
        %v736 = vunpack.c.h.b16 %v543
        %v737 = vunpack.c.l.b16 %v544
        %v738 = vunpack.c.h.b16 %v544
        %v739 = vunpack.c.l.b16 %v545
        %v740 = vunpack.c.h.b16 %v545
        %v741 = vunpack.c.l.b16 %v546
        %v742 = vunpack.c.h.b16 %v546
        %v743 = vunpack.c.l.b16 %v547
        %v744 = vunpack.c.h.b16 %v547
        %v745 = vunpack.c.l.b16 %v548
        %v746 = vunpack.c.h.b16 %v548
        %v747 = vunpack.c.l.b16 %v549
        %v748 = vunpack.c.h.b16 %v549
        %v749 = vunpack.c.l.b16 %v550
        %v750 = vunpack.c.h.b16 %v550
        %v751 = vunpack.c.l.b16 %v551
        %v752 = vunpack.c.h.b16 %v551
        %v753 = vunpack.c.l.b16 %v552
        %v754 = vunpack.c.h.b16 %v552
        %v755 = vunpack.c.l.b16 %v553
        %v756 = vunpack.c.h.b16 %v553
        %v757 = vunpack.c.l.b16 %v554
        %v758 = vunpack.c.h.b16 %v554
        %v759 = vpack.c.b16 %v639, %v631
        %v760 = vpack.c.b16 %v640, %v632
        %v761 = vpack.c.b16 %v641, %v633
        %v762 = vpack.c.b16 %v642, %v634
        %v763 = vpack.c.b16 %v643, %v635
        %v764 = vpack.c.b16 %v644, %v636
        %v765 = vpack.c.b16 %v645, %v637
        %v766 = vpack.c.b16 %v646, %v638
        %v767 = vpack.c.b16 %v655, %v647
        %v768 = vpack.c.b16 %v656, %v648
        %v769 = vpack.c.b16 %v657, %v649
        %v770 = vpack.c.b16 %v658, %v650
        %v771 = vpack.c.b16 %v659, %v651
        %v772 = vpack.c.b16 %v660, %v652
        %v773 = vpack.c.b16 %v661, %v653
        %v774 = vpack.c.b16 %v662, %v654
        %v775 = vpack.c.b16 %v671, %v663
        %v776 = vpack.c.b16 %v672, %v664
        %v777 = vpack.c.b16 %v673, %v665
        %v778 = vpack.c.b16 %v674, %v666
        %v779 = vpack.c.b16 %v675, %v667
        %v780 = vpack.c.b16 %v676, %v668
        %v781 = vpack.c.b16 %v677, %v669
        %v782 = vpack.c.b16 %v678, %v670
        %v783 = vpack.c.b16 %v687, %v679
        %v784 = vpack.c.b16 %v688, %v680
        %v785 = vpack.c.b16 %v689, %v681
        %v786 = vpack.c.b16 %v690, %v682
        %v787 = vpack.c.b16 %v691, %v683
        %v788 = vpack.c.b16 %v692, %v684
        %v789 = vpack.c.b16 %v693, %v685
        %v790 = vpack.c.b16 %v694, %v686
        %v791 = vpack.c.b16 %v703, %v695
        %v792 = vpack.c.b16 %v704, %v696
        %v793 = vpack.c.b16 %v705, %v697
        %v794 = vpack.c.b16 %v706, %v698
        %v795 = vpack.c.b16 %v707, %v699
        %v796 = vpack.c.b16 %v708, %v700
        %v797 = vpack.c.b16 %v709, %v701
        %v798 = vpack.c.b16 %v710, %v702
        %v799 = vpack.c.b16 %v719, %v711
        %v800 = vpack.c.b16 %v720, %v712
        %v801 = vpack.c.b16 %v721, %v713
        %v802 = vpack.c.b16 %v722, %v714
        %v803 = vpack.c.b16 %v723, %v715
        %v804 = vpack.c.b16 %v724, %v716
        %v805 = vpack.c.b16 %v725, %v717
        %v806 = vpack.c.b16 %v726, %v718
        %v807 = vpack.c.b16 %v735, %v727
        %v808 = vpack.c.b16 %v736, %v728
        %v809 = vpack.c.b16 %v737, %v729
        %v810 = vpack.c.b16 %v738, %v730
        %v811 = vpack.c.b16 %v739, %v731
        %v812 = vpack.c.b16 %v740, %v732
        %v813 = vpack.c.b16 %v741, %v733
        %v814 = vpack.c.b16 %v742, %v734
        %v815 = vpack.c.b16 %v751, %v743
        %v816 = vpack.c.b16 %v752, %v744
        %v817 = vpack.c.b16 %v753, %v745
        %v818 = vpack.c.b16 %v754, %v746
        %v819 = vpack.c.b16 %v755, %v747
        %v820 = vpack.c.b16 %v756, %v748
        %v821 = vpack.c.b16 %v757, %v749
        %v822 = vpack.c.b16 %v758, %v750
        %887 = vmatprep.subr.bf16.mxu0 %v760
        %888 = vmatpush1.bf16.msra.mxu0 %v759
        %889 = vmatprep.subr.bf16.mxu0 %v768
        %890 = vmatpush1.bf16.msra.mxu0 %v767
        %891 = vmatprep.subr.bf16.mxu0 %v776
        %892 = vmatpush1.bf16.msra.mxu0 %v775
        %893 = vmatprep.subr.bf16.mxu0 %v784
        %894 = vmatpush1.bf16.msra.mxu0 %v783
        %895 = vmatprep.subr.bf16.mxu0 %v792
        %896 = vmatpush1.bf16.msra.mxu0 %v791
        %897 = vmatprep.subr.bf16.mxu0 %v800
        %898 = vmatpush1.bf16.msra.mxu0 %v799
        %899 = vmatprep.subr.bf16.mxu0 %v808
        %900 = vmatpush1.bf16.msra.mxu0 %v807
        %901 = vmatprep.subr.bf16.mxu0 %v816
        %902 = vmatpush1.bf16.msra.mxu0 %v815
        %903 = vmatprep.subr.bf16.mxu0 0
        %904 = vmatpush1.bf16.msra.mxu0 0
        %905 = vmatprep.subr.bf16.mxu0 0
        %906 = vmatpush1.bf16.msra.mxu0 0
        %907 = vmatprep.subr.bf16.mxu0 0
        %908 = vmatpush1.bf16.msra.mxu0 0
        %909 = vmatprep.subr.bf16.mxu0 0
        %910 = vmatpush1.bf16.msra.mxu0 0
        %911 = vmatprep.subr.bf16.mxu0 0
        %912 = vmatpush1.bf16.msra.mxu0 0
        %913 = vmatprep.subr.bf16.mxu0 0
        %914 = vmatpush1.bf16.msra.mxu0 0
        %915 = vmatprep.subr.bf16.mxu0 0
        %916 = vmatpush1.bf16.msra.mxu0 0
        %917 = vmatprep.subr.bf16.mxu0 0
        %918 = vmatpush1.bf16.msra.mxu0 0
        %919 = vmatprep.mubr.bf16.mxu0 0
        %920 = vmatmul.mubr.bf16.gmra.mrb[0].mxu0 %v563
        %v921 = vpop.f32.mrb[0].mxu0
        %v922 = vadd.f32 0.0, %v921
        %v923 = vpop.f32.mrb[0].mxu0
        %v924 = vadd.f32 0.0, %v923
        %v925 = vpop.f32.mrb[0].mxu0
        %v926 = vadd.f32 0.0, %v925
        %v927 = vpop.f32.mrb[0].mxu0
        %v928 = vadd.f32 0.0, %v927
        %929 = vmatprep.mubr.bf16.mxu0 0
        %930 = vmatmul.mubr.bf16.gmra.mrb[0].mxu0 %v564
        %v931 = vpop.f32.mrb[0].mxu0
        %v932 = vadd.f32 0.0, %v931
        %v933 = vpop.f32.mrb[0].mxu0
        %v934 = vadd.f32 0.0, %v933
        %v935 = vpop.f32.mrb[0].mxu0
        %v936 = vadd.f32 0.0, %v935
        %v937 = vpop.f32.mrb[0].mxu0
        %v938 = vadd.f32 0.0, %v937
        %939 = vdwg.mxu0
        %940 = vmatprep.subr.bf16.mxu0 %v762
        %941 = vmatpush1.bf16.msra.mxu0 %v761
        %942 = vmatprep.subr.bf16.mxu0 %v770
        %943 = vmatpush1.bf16.msra.mxu0 %v769
        %944 = vmatprep.subr.bf16.mxu0 %v778
        %945 = vmatpush1.bf16.msra.mxu0 %v777
        %946 = vmatprep.subr.bf16.mxu0 %v786
        %947 = vmatpush1.bf16.msra.mxu0 %v785
        %948 = vmatprep.subr.bf16.mxu0 %v794
        %949 = vmatpush1.bf16.msra.mxu0 %v793
        %950 = vmatprep.subr.bf16.mxu0 %v802
        %951 = vmatpush1.bf16.msra.mxu0 %v801
        %952 = vmatprep.subr.bf16.mxu0 %v810
        %953 = vmatpush1.bf16.msra.mxu0 %v809
        %954 = vmatprep.subr.bf16.mxu0 %v818
        %955 = vmatpush1.bf16.msra.mxu0 %v817
        %956 = vmatprep.subr.bf16.mxu0 0
        %957 = vmatpush1.bf16.msra.mxu0 0
        %958 = vmatprep.subr.bf16.mxu0 0
        %959 = vmatpush1.bf16.msra.mxu0 0
        %960 = vmatprep.subr.bf16.mxu0 0
        %961 = vmatpush1.bf16.msra.mxu0 0
        %962 = vmatprep.subr.bf16.mxu0 0
        %963 = vmatpush1.bf16.msra.mxu0 0
        %964 = vmatprep.subr.bf16.mxu0 0
        %965 = vmatpush1.bf16.msra.mxu0 0
        %966 = vmatprep.subr.bf16.mxu0 0
        %967 = vmatpush1.bf16.msra.mxu0 0
        %968 = vmatprep.subr.bf16.mxu0 0
        %969 = vmatpush1.bf16.msra.mxu0 0
        %970 = vmatprep.subr.bf16.mxu0 0
        %971 = vmatpush1.bf16.msra.mxu0 0
        %972 = vmatprep.mubr.bf16.mxu0 0
        %973 = vmatmul.mubr.bf16.gmra.mrb[0].mxu0 %v563
        %v974 = vpop.f32.mrb[0].mxu0
        %v975 = vadd.f32 0.0, %v974
        %v976 = vpop.f32.mrb[0].mxu0
        %v977 = vadd.f32 0.0, %v976
        %v978 = vpop.f32.mrb[0].mxu0
        %v979 = vadd.f32 0.0, %v978
        %v980 = vpop.f32.mrb[0].mxu0
        %v981 = vadd.f32 0.0, %v980
        %982 = vmatprep.mubr.bf16.mxu0 0
        %983 = vmatmul.mubr.bf16.gmra.mrb[0].mxu0 %v564
        %v984 = vpop.f32.mrb[0].mxu0
        %v985 = vadd.f32 0.0, %v984
        %v986 = vpop.f32.mrb[0].mxu0
        %v987 = vadd.f32 0.0, %v986
        %v988 = vpop.f32.mrb[0].mxu0
        %v989 = vadd.f32 0.0, %v988
        %v990 = vpop.f32.mrb[0].mxu0
        %v991 = vadd.f32 0.0, %v990
        %992 = vdwg.mxu0
        %993 = vmatprep.subr.bf16.mxu0 %v764
        %994 = vmatpush1.bf16.msra.mxu0 %v763
        %995 = vmatprep.subr.bf16.mxu0 %v772
        %996 = vmatpush1.bf16.msra.mxu0 %v771
        %997 = vmatprep.subr.bf16.mxu0 %v780
        %998 = vmatpush1.bf16.msra.mxu0 %v779
        %999 = vmatprep.subr.bf16.mxu0 %v788
        %1000 = vmatpush1.bf16.msra.mxu0 %v787
        %1001 = vmatprep.subr.bf16.mxu0 %v796
        %1002 = vmatpush1.bf16.msra.mxu0 %v795
        %1003 = vmatprep.subr.bf16.mxu0 %v804
        %1004 = vmatpush1.bf16.msra.mxu0 %v803
        %1005 = vmatprep.subr.bf16.mxu0 %v812
        %1006 = vmatpush1.bf16.msra.mxu0 %v811
        %1007 = vmatprep.subr.bf16.mxu0 %v820
        %1008 = vmatpush1.bf16.msra.mxu0 %v819
        %1009 = vmatprep.subr.bf16.mxu0 0
        %1010 = vmatpush1.bf16.msra.mxu0 0
        %1011 = vmatprep.subr.bf16.mxu0 0
        %1012 = vmatpush1.bf16.msra.mxu0 0
        %1013 = vmatprep.subr.bf16.mxu0 0
        %1014 = vmatpush1.bf16.msra.mxu0 0
        %1015 = vmatprep.subr.bf16.mxu0 0
        %1016 = vmatpush1.bf16.msra.mxu0 0
        %1017 = vmatprep.subr.bf16.mxu0 0
        %1018 = vmatpush1.bf16.msra.mxu0 0
        %1019 = vmatprep.subr.bf16.mxu0 0
        %1020 = vmatpush1.bf16.msra.mxu0 0
        %1021 = vmatprep.subr.bf16.mxu0 0
        %1022 = vmatpush1.bf16.msra.mxu0 0
        %1023 = vmatprep.subr.bf16.mxu0 0
        %1024 = vmatpush1.bf16.msra.mxu0 0
        %1025 = vmatprep.mubr.bf16.mxu0 0
        %1026 = vmatmul.mubr.bf16.gmra.mrb[0].mxu0 %v563
        %v1027 = vpop.f32.mrb[0].mxu0
        %v1028 = vadd.f32 0.0, %v1027
        %v1029 = vpop.f32.mrb[0].mxu0
        %v1030 = vadd.f32 0.0, %v1029
        %v1031 = vpop.f32.mrb[0].mxu0
        %v1032 = vadd.f32 0.0, %v1031
        %v1033 = vpop.f32.mrb[0].mxu0
        %v1034 = vadd.f32 0.0, %v1033
        %1035 = vmatprep.mubr.bf16.mxu0 0
        %1036 = vmatmul.mubr.bf16.gmra.mrb[0].mxu0 %v564
        %v1037 = vpop.f32.mrb[0].mxu0
        %v1038 = vadd.f32 0.0, %v1037
        %v1039 = vpop.f32.mrb[0].mxu0
        %v1040 = vadd.f32 0.0, %v1039
        %v1041 = vpop.f32.mrb[0].mxu0
        %v1042 = vadd.f32 0.0, %v1041
        %v1043 = vpop.f32.mrb[0].mxu0
        %v1044 = vadd.f32 0.0, %v1043
        %1045 = vdwg.mxu0
        %1046 = vmatprep.subr.bf16.mxu0 %v766
        %1047 = vmatpush1.bf16.msra.mxu0 %v765
        %1048 = vmatprep.subr.bf16.mxu0 %v774
        %1049 = vmatpush1.bf16.msra.mxu0 %v773
        %1050 = vmatprep.subr.bf16.mxu0 %v782
        %1051 = vmatpush1.bf16.msra.mxu0 %v781
        %1052 = vmatprep.subr.bf16.mxu0 %v790
        %1053 = vmatpush1.bf16.msra.mxu0 %v789
        %1054 = vmatprep.subr.bf16.mxu0 %v798
        %1055 = vmatpush1.bf16.msra.mxu0 %v797
        %1056 = vmatprep.subr.bf16.mxu0 %v806
        %1057 = vmatpush1.bf16.msra.mxu0 %v805
        %1058 = vmatprep.subr.bf16.mxu0 %v814
        %1059 = vmatpush1.bf16.msra.mxu0 %v813
        %1060 = vmatprep.subr.bf16.mxu0 %v822
        %1061 = vmatpush1.bf16.msra.mxu0 %v821
        %1062 = vmatprep.subr.bf16.mxu0 0
        %1063 = vmatpush1.bf16.msra.mxu0 0
        %1064 = vmatprep.subr.bf16.mxu0 0
        %1065 = vmatpush1.bf16.msra.mxu0 0
        %1066 = vmatprep.subr.bf16.mxu0 0
        %1067 = vmatpush1.bf16.msra.mxu0 0
        %1068 = vmatprep.subr.bf16.mxu0 0
        %1069 = vmatpush1.bf16.msra.mxu0 0
        %1070 = vmatprep.subr.bf16.mxu0 0
        %1071 = vmatpush1.bf16.msra.mxu0 0
        %1072 = vmatprep.subr.bf16.mxu0 0
        %1073 = vmatpush1.bf16.msra.mxu0 0
        %1074 = vmatprep.subr.bf16.mxu0 0
        %1075 = vmatpush1.bf16.msra.mxu0 0
        %1076 = vmatprep.subr.bf16.mxu0 0
        %1077 = vmatpush1.bf16.msra.mxu0 0
        %1078 = vmatprep.mubr.bf16.mxu0 0
        %1079 = vmatmul.mubr.bf16.gmra.mrb[0].mxu0 %v563
        %v1080 = vpop.f32.mrb[0].mxu0
        %v1081 = vadd.f32 0.0, %v1080
        %v1082 = vpop.f32.mrb[0].mxu0
        %v1083 = vadd.f32 0.0, %v1082
        %v1084 = vpop.f32.mrb[0].mxu0
        %v1085 = vadd.f32 0.0, %v1084
        %v1086 = vpop.f32.mrb[0].mxu0
        %v1087 = vadd.f32 0.0, %v1086
        %1088 = vmatprep.mubr.bf16.mxu0 0
        %1089 = vmatmul.mubr.bf16.gmra.mrb[0].mxu0 %v564
        %v1090 = vpop.f32.mrb[0].mxu0
        %v1091 = vadd.f32 0.0, %v1090
        %v1092 = vpop.f32.mrb[0].mxu0
        %v1093 = vadd.f32 0.0, %v1092
        %v1094 = vpop.f32.mrb[0].mxu0
        %v1095 = vadd.f32 0.0, %v1094
        %v1096 = vpop.f32.mrb[0].mxu0
        %v1097 = vadd.f32 0.0, %v1096
        %1098 = vdwg.mxu0
        %v1099 = vadd.f32 %v455, %v922
        %v1100 = vadd.f32 %v456, %v924
        %v1101 = vadd.f32 %v457, %v975
        %v1102 = vadd.f32 %v458, %v977
        %v1103 = vadd.f32 %v459, %v1028
        %v1104 = vadd.f32 %v460, %v1030
        %v1105 = vadd.f32 %v461, %v1081
        %v1106 = vadd.f32 %v462, %v1083
        %v1107 = vadd.f32 %v463, %v926
        %v1108 = vadd.f32 %v464, %v928
        %v1109 = vadd.f32 %v465, %v979
        %v1110 = vadd.f32 %v466, %v981
        %v1111 = vadd.f32 %v467, %v1032
        %v1112 = vadd.f32 %v468, %v1034
        %v1113 = vadd.f32 %v469, %v1085
        %v1114 = vadd.f32 %v470, %v1087
        %v1115 = vadd.f32 %v471, %v932
        %v1116 = vadd.f32 %v472, %v934
        %v1117 = vadd.f32 %v473, %v985
        %v1118 = vadd.f32 %v474, %v987
        %v1119 = vadd.f32 %v475, %v1038
        %v1120 = vadd.f32 %v476, %v1040
        %v1121 = vadd.f32 %v477, %v1091
        %v1122 = vadd.f32 %v478, %v1093
        %v1123 = vadd.f32 %v479, %v936
        %v1124 = vadd.f32 %v480, %v938
        %v1125 = vadd.f32 %v481, %v989
        %v1126 = vadd.f32 %v482, %v991
        %v1127 = vadd.f32 %v483, %v1042
        %v1128 = vadd.f32 %v484, %v1044
        %v1129 = vadd.f32 %v485, %v1095
        %v1130 = vadd.f32 %v486, %v1097
        %1131 = vst [vmem:[#allocation2] sm:$0xff] %v1099
        %1132 = vst [vmem:[#allocation2 + $0x8] sm:$0xff] %v1100
        %1133 = vst [vmem:[#allocation2 + $0x10] sm:$0xff] %v1101
        %1134 = vst [vmem:[#allocation2 + $0x18] sm:$0xff] %v1102
        %1135 = vst [vmem:[#allocation2 + $0x20] sm:$0xff] %v1103
        %1136 = vst [vmem:[#allocation2 + $0x28] sm:$0xff] %v1104
        %1137 = vst [vmem:[#allocation2 + $0x30] sm:$0xff] %v1105
        %1138 = vst [vmem:[#allocation2 + $0x38] sm:$0xff] %v1106
        %1139 = vst [vmem:[#allocation2 + $0x40] sm:$0xff] %v1107
        %1140 = vst [vmem:[#allocation2 + $0x48] sm:$0xff] %v1108
        %1141 = vst [vmem:[#allocation2 + $0x50] sm:$0xff] %v1109
        %1142 = vst [vmem:[#allocation2 + $0x58] sm:$0xff] %v1110
        %1143 = vst [vmem:[#allocation2 + $0x60] sm:$0xff] %v1111
        %1144 = vst [vmem:[#allocation2 + $0x68] sm:$0xff] %v1112
        %1145 = vst [vmem:[#allocation2 + $0x70] sm:$0xff] %v1113
        %1146 = vst [vmem:[#allocation2 + $0x78] sm:$0xff] %v1114
        %1147 = vst [vmem:[#allocation2 + $0x80] sm:$0xff] %v1115
        %1148 = vst [vmem:[#allocation2 + $0x88] sm:$0xff] %v1116
        %1149 = vst [vmem:[#allocation2 + $0x90] sm:$0xff] %v1117
        %1150 = vst [vmem:[#allocation2 + $0x98] sm:$0xff] %v1118
        %1151 = vst [vmem:[#allocation2 + $0xa0] sm:$0xff] %v1119
        %1152 = vst [vmem:[#allocation2 + $0xa8] sm:$0xff] %v1120
        %1153 = vst [vmem:[#allocation2 + $0xb0] sm:$0xff] %v1121
        %1154 = vst [vmem:[#allocation2 + $0xb8] sm:$0xff] %v1122
        %1155 = vst [vmem:[#allocation2 + $0xc0] sm:$0xff] %v1123
        %1156 = vst [vmem:[#allocation2 + $0xc8] sm:$0xff] %v1124
        %1157 = vst [vmem:[#allocation2 + $0xd0] sm:$0xff] %v1125
        %1158 = vst [vmem:[#allocation2 + $0xd8] sm:$0xff] %v1126
        %1159 = vst [vmem:[#allocation2 + $0xe0] sm:$0xff] %v1127
        %1160 = vst [vmem:[#allocation2 + $0xe8] sm:$0xff] %v1128
        %1161 = vst [vmem:[#allocation2 + $0xf0] sm:$0xff] %v1129
        %1162 = vst [vmem:[#allocation2 + $0xf8] sm:$0xff] %v1130
        %p1163 = scmp.eq.s32.totalorder %s23, 6
        // Predicated region
        $region94: #{roi_head_forward.1} parent=84 // pred_check
          %p1164 = pneg %p1163
        $region95: #{roi_head_forward.1} parent=84 // pred_check_branch
          %1166 = sbr.rel (%p1164) target = $region97
        $region96: #{roi_head_forward.1} parent=84 // pred_region
          %v1167 = vld [vmem:[#allocation2] sm:$0xff]
          %v1168 = vld [vmem:[#allocation2 + $0x8] sm:$0xff]
          %v1169 = vld [vmem:[#allocation2 + $0x10] sm:$0xff]
          %v1170 = vld [vmem:[#allocation2 + $0x18] sm:$0xff]
          %v1171 = vld [vmem:[#allocation2 + $0x20] sm:$0xff]
          %v1172 = vld [vmem:[#allocation2 + $0x28] sm:$0xff]
          %v1173 = vld [vmem:[#allocation2 + $0x30] sm:$0xff]
          %v1174 = vld [vmem:[#allocation2 + $0x38] sm:$0xff]
          %v1175 = vld [vmem:[#allocation2 + $0x40] sm:$0xff]
          %v1176 = vld [vmem:[#allocation2 + $0x48] sm:$0xff]
          %v1177 = vld [vmem:[#allocation2 + $0x50] sm:$0xff]
          %v1178 = vld [vmem:[#allocation2 + $0x58] sm:$0xff]
          %v1179 = vld [vmem:[#allocation2 + $0x60] sm:$0xff]
          %v1180 = vld [vmem:[#allocation2 + $0x68] sm:$0xff]
          %v1181 = vld [vmem:[#allocation2 + $0x70] sm:$0xff]
          %v1182 = vld [vmem:[#allocation2 + $0x78] sm:$0xff]
          %v1183 = vld [vmem:[#allocation2 + $0x80] sm:$0xff]
          %v1184 = vld [vmem:[#allocation2 + $0x88] sm:$0xff]
          %v1185 = vld [vmem:[#allocation2 + $0x90] sm:$0xff]
          %v1186 = vld [vmem:[#allocation2 + $0x98] sm:$0xff]
          %v1187 = vld [vmem:[#allocation2 + $0xa0] sm:$0xff]
          %v1188 = vld [vmem:[#allocation2 + $0xa8] sm:$0xff]
          %v1189 = vld [vmem:[#allocation2 + $0xb0] sm:$0xff]
          %v1190 = vld [vmem:[#allocation2 + $0xb8] sm:$0xff]
          %v1191 = vld [vmem:[#allocation2 + $0xc0] sm:$0xff]
          %v1192 = vld [vmem:[#allocation2 + $0xc8] sm:$0xff]
          %v1193 = vld [vmem:[#allocation2 + $0xd0] sm:$0xff]
          %v1194 = vld [vmem:[#allocation2 + $0xd8] sm:$0xff]
          %v1195 = vld [vmem:[#allocation2 + $0xe0] sm:$0xff]
          %v1196 = vld [vmem:[#allocation2 + $0xe8] sm:$0xff]
          %v1197 = vld [vmem:[#allocation2 + $0xf0] sm:$0xff]
          %v1198 = vld [vmem:[#allocation2 + $0xf8] sm:$0xff]
          %v1199 = vmax.f32 %v1167, 0.0
          %v1200 = vmax.f32 %v1168, 0.0
          %v1201 = vmax.f32 %v1169, 0.0
          %v1202 = vmax.f32 %v1170, 0.0
          %v1203 = vmax.f32 %v1171, 0.0
          %v1204 = vmax.f32 %v1172, 0.0
          %v1205 = vmax.f32 %v1173, 0.0
          %v1206 = vmax.f32 %v1174, 0.0
          %v1207 = vmax.f32 %v1175, 0.0
          %v1208 = vmax.f32 %v1176, 0.0
          %v1209 = vmax.f32 %v1177, 0.0
          %v1210 = vmax.f32 %v1178, 0.0
          %v1211 = vmax.f32 %v1179, 0.0
          %v1212 = vmax.f32 %v1180, 0.0
          %v1213 = vmax.f32 %v1181, 0.0
          %v1214 = vmax.f32 %v1182, 0.0
          %v1215 = vmax.f32 %v1183, 0.0
          %v1216 = vmax.f32 %v1184, 0.0
          %v1217 = vmax.f32 %v1185, 0.0
          %v1218 = vmax.f32 %v1186, 0.0
          %v1219 = vmax.f32 %v1187, 0.0
          %v1220 = vmax.f32 %v1188, 0.0
          %v1221 = vmax.f32 %v1189, 0.0
          %v1222 = vmax.f32 %v1190, 0.0
          %v1223 = vmax.f32 %v1191, 0.0
          %v1224 = vmax.f32 %v1192, 0.0
          %v1225 = vmax.f32 %v1193, 0.0
          %v1226 = vmax.f32 %v1194, 0.0
          %v1227 = vmax.f32 %v1195, 0.0
          %v1228 = vmax.f32 %v1196, 0.0
          %v1229 = vmax.f32 %v1197, 0.0
          %v1230 = vmax.f32 %v1198, 0.0
          %v1231 = vpack.c.bf16 %v1207, %v1199
          %v1232 = vpack.c.bf16 %v1208, %v1200
          %v1233 = vpack.c.bf16 %v1209, %v1201
          %v1234 = vpack.c.bf16 %v1210, %v1202
          %v1235 = vpack.c.bf16 %v1211, %v1203
          %v1236 = vpack.c.bf16 %v1212, %v1204
          %v1237 = vpack.c.bf16 %v1213, %v1205
          %v1238 = vpack.c.bf16 %v1214, %v1206
          %v1239 = vpack.c.bf16 %v1223, %v1215
          %v1240 = vpack.c.bf16 %v1224, %v1216
          %v1241 = vpack.c.bf16 %v1225, %v1217
          %v1242 = vpack.c.bf16 %v1226, %v1218
          %v1243 = vpack.c.bf16 %v1227, %v1219
          %v1244 = vpack.c.bf16 %v1228, %v1220
          %v1245 = vpack.c.bf16 %v1229, %v1221
          %v1246 = vpack.c.bf16 %v1230, %v1222
          %v1247 = vld [vmem:[%s3] sm:$0xff]
          %v1248 = vld [vmem:[%s3 + $0x8] sm:$0xff]
          %v1249 = vld [vmem:[%s3 + $0x10] sm:$0xff]
          %v1250 = vld [vmem:[%s3 + $0x18] sm:$0xff]
          %v1251 = vld [vmem:[%s3 + $0x20] sm:$0xff]
          %v1252 = vld [vmem:[%s3 + $0x28] sm:$0xff]
          %v1253 = vld [vmem:[%s3 + $0x30] sm:$0xff]
          %v1254 = vld [vmem:[%s3 + $0x38] sm:$0xff]
          %v1255 = vld [vmem:[%s3 + $0x40] sm:$0xff]
          %v1256 = vld [vmem:[%s3 + $0x48] sm:$0xff]
          %v1257 = vld [vmem:[%s3 + $0x50] sm:$0xff]
          %v1258 = vld [vmem:[%s3 + $0x58] sm:$0xff]
          %v1259 = vld [vmem:[%s3 + $0x60] sm:$0xff]
          %v1260 = vld [vmem:[%s3 + $0x68] sm:$0xff]
          %v1261 = vld [vmem:[%s3 + $0x70] sm:$0xff]
          %v1262 = vld [vmem:[%s3 + $0x78] sm:$0xff]
          %v1263 = vld [vmem:[%s3 + $0x80] sm:$0xff]
          %v1264 = vld [vmem:[%s3 + $0x88] sm:$0xff]
          %v1265 = vld [vmem:[%s3 + $0x90] sm:$0xff]
          %v1266 = vld [vmem:[%s3 + $0x98] sm:$0xff]
          %v1267 = vld [vmem:[%s3 + $0xa0] sm:$0xff]
          %v1268 = vld [vmem:[%s3 + $0xa8] sm:$0xff]
          %v1269 = vld [vmem:[%s3 + $0xb0] sm:$0xff]
          %v1270 = vld [vmem:[%s3 + $0xb8] sm:$0xff]
          %v1271 = vld [vmem:[%s3 + $0xc0] sm:$0xff]
          %v1272 = vld [vmem:[%s3 + $0xc8] sm:$0xff]
          %v1273 = vld [vmem:[%s3 + $0xd0] sm:$0xff]
          %v1274 = vld [vmem:[%s3 + $0xd8] sm:$0xff]
          %v1275 = vld [vmem:[%s3 + $0xe0] sm:$0xff]
          %v1276 = vld [vmem:[%s3 + $0xe8] sm:$0xff]
          %v1277 = vld [vmem:[%s3 + $0xf0] sm:$0xff]
          %v1278 = vld [vmem:[%s3 + $0xf8] sm:$0xff]
          %v1279 = vld [vmem:[%s3 + $0x100] sm:$0xff]
          %v1280 = vld [vmem:[%s3 + $0x108] sm:$0xff]
          %v1281 = vld [vmem:[%s3 + $0x110] sm:$0xff]
          %v1282 = vld [vmem:[%s3 + $0x118] sm:$0xff]
          %v1283 = vld [vmem:[%s3 + $0x120] sm:$0xff]
          %v1284 = vld [vmem:[%s3 + $0x128] sm:$0xff]
          %v1285 = vld [vmem:[%s3 + $0x130] sm:$0xff]
          %v1286 = vld [vmem:[%s3 + $0x138] sm:$0xff]
          %v1287 = vld [vmem:[%s3 + $0x140] sm:$0xff]
          %v1288 = vld [vmem:[%s3 + $0x148] sm:$0xff]
          %v1289 = vld [vmem:[%s3 + $0x150] sm:$0xff]
          %v1290 = vld [vmem:[%s3 + $0x158] sm:$0xff]
          %v1291 = vld [vmem:[%s3 + $0x160] sm:$0xff]
          %v1292 = vld [vmem:[%s3 + $0x168] sm:$0xff]
          %v1293 = vld [vmem:[%s3 + $0x170] sm:$0xff]
          %v1294 = vld [vmem:[%s3 + $0x178] sm:$0xff]
          %v1295 = vld [vmem:[%s3 + $0x180] sm:$0xff]
          %v1296 = vld [vmem:[%s3 + $0x188] sm:$0xff]
          %v1297 = vld [vmem:[%s3 + $0x190] sm:$0xff]
          %v1298 = vld [vmem:[%s3 + $0x198] sm:$0xff]
          %v1299 = vld [vmem:[%s3 + $0x1a0] sm:$0xff]
          %v1300 = vld [vmem:[%s3 + $0x1a8] sm:$0xff]
          %v1301 = vld [vmem:[%s3 + $0x1b0] sm:$0xff]
          %v1302 = vld [vmem:[%s3 + $0x1b8] sm:$0xff]
          %v1303 = vld [vmem:[%s3 + $0x1c0] sm:$0xff]
          %v1304 = vld [vmem:[%s3 + $0x1c8] sm:$0xff]
          %v1305 = vld [vmem:[%s3 + $0x1d0] sm:$0xff]
          %v1306 = vld [vmem:[%s3 + $0x1d8] sm:$0xff]
          %v1307 = vld [vmem:[%s3 + $0x1e0] sm:$0xff]
          %v1308 = vld [vmem:[%s3 + $0x1e8] sm:$0xff]
          %v1309 = vld [vmem:[%s3 + $0x1f0] sm:$0xff]
          %v1310 = vld [vmem:[%s3 + $0x1f8] sm:$0xff]
          %v1311 = vld [vmem:[%s3 + $0x200] sm:$0xff]
          %v1312 = vld [vmem:[%s3 + $0x208] sm:$0xff]
          %v1313 = vld [vmem:[%s3 + $0x210] sm:$0xff]
          %v1314 = vld [vmem:[%s3 + $0x218] sm:$0xff]
          %v1315 = vld [vmem:[%s3 + $0x220] sm:$0xff]
          %v1316 = vld [vmem:[%s3 + $0x228] sm:$0xff]
          %v1317 = vld [vmem:[%s3 + $0x230] sm:$0xff]
          %v1318 = vld [vmem:[%s3 + $0x238] sm:$0xff]
          %v1319 = vld [vmem:[%s3 + $0x240] sm:$0xff]
          %v1320 = vld [vmem:[%s3 + $0x248] sm:$0xff]
          %v1321 = vld [vmem:[%s3 + $0x250] sm:$0xff]
          %v1322 = vld [vmem:[%s3 + $0x258] sm:$0xff]
          %v1323 = vld [vmem:[%s3 + $0x260] sm:$0xff]
          %v1324 = vld [vmem:[%s3 + $0x268] sm:$0xff]
          %v1325 = vld [vmem:[%s3 + $0x270] sm:$0xff]
          %v1326 = vld [vmem:[%s3 + $0x278] sm:$0xff]
          %v1327 = vld [vmem:[%s3 + $0x280] sm:$0xff]
          %v1328 = vld [vmem:[%s3 + $0x288] sm:$0xff]
          %v1329 = vld [vmem:[%s3 + $0x290] sm:$0xff]
          %v1330 = vld [vmem:[%s3 + $0x298] sm:$0xff]
          %v1331 = vld [vmem:[%s3 + $0x2a0] sm:$0xff]
          %v1332 = vld [vmem:[%s3 + $0x2a8] sm:$0xff]
          %v1333 = vld [vmem:[%s3 + $0x2b0] sm:$0xff]
          %v1334 = vld [vmem:[%s3 + $0x2b8] sm:$0xff]
          %v1335 = vld [vmem:[%s3 + $0x2c0] sm:$0xff]
          %v1336 = vld [vmem:[%s3 + $0x2c8] sm:$0xff]
          %v1337 = vld [vmem:[%s3 + $0x2d0] sm:$0xff]
          %v1338 = vld [vmem:[%s3 + $0x2d8] sm:$0xff]
          %v1339 = vld [vmem:[%s3 + $0x2e0] sm:$0xff]
          %v1340 = vld [vmem:[%s3 + $0x2e8] sm:$0xff]
          %v1341 = vld [vmem:[%s3 + $0x2f0] sm:$0xff]
          %v1342 = vld [vmem:[%s3 + $0x2f8] sm:$0xff]
          %v1343 = vld [vmem:[%s3 + $0x300] sm:$0xff]
          %v1344 = vld [vmem:[%s3 + $0x308] sm:$0xff]
          %v1345 = vld [vmem:[%s3 + $0x310] sm:$0xff]
          %v1346 = vld [vmem:[%s3 + $0x318] sm:$0xff]
          %v1347 = vld [vmem:[%s3 + $0x320] sm:$0xff]
          %v1348 = vld [vmem:[%s3 + $0x328] sm:$0xff]
          %v1349 = vld [vmem:[%s3 + $0x330] sm:$0xff]
          %v1350 = vld [vmem:[%s3 + $0x338] sm:$0xff]
          %v1351 = vld [vmem:[%s3 + $0x340] sm:$0xff]
          %v1352 = vld [vmem:[%s3 + $0x348] sm:$0xff]
          %v1353 = vld [vmem:[%s3 + $0x350] sm:$0xff]
          %v1354 = vld [vmem:[%s3 + $0x358] sm:$0xff]
          %v1355 = vld [vmem:[%s3 + $0x360] sm:$0xff]
          %v1356 = vld [vmem:[%s3 + $0x368] sm:$0xff]
          %v1357 = vld [vmem:[%s3 + $0x370] sm:$0xff]
          %v1358 = vld [vmem:[%s3 + $0x378] sm:$0xff]
          %v1359 = vld [vmem:[%s3 + $0x380] sm:$0xff]
          %v1360 = vld [vmem:[%s3 + $0x388] sm:$0xff]
          %v1361 = vld [vmem:[%s3 + $0x390] sm:$0xff]
          %v1362 = vld [vmem:[%s3 + $0x398] sm:$0xff]
          %v1363 = vld [vmem:[%s3 + $0x3a0] sm:$0xff]
          %v1364 = vld [vmem:[%s3 + $0x3a8] sm:$0xff]
          %v1365 = vld [vmem:[%s3 + $0x3b0] sm:$0xff]
          %v1366 = vld [vmem:[%s3 + $0x3b8] sm:$0xff]
          %v1367 = vld [vmem:[%s3 + $0x3c0] sm:$0xff]
          %v1368 = vld [vmem:[%s3 + $0x3c8] sm:$0xff]
          %v1369 = vld [vmem:[%s3 + $0x3d0] sm:$0xff]
          %v1370 = vld [vmem:[%s3 + $0x3d8] sm:$0xff]
          %v1371 = vld [vmem:[%s3 + $0x3e0] sm:$0xff]
          %v1372 = vld [vmem:[%s3 + $0x3e8] sm:$0xff]
          %v1373 = vld [vmem:[%s3 + $0x3f0] sm:$0xff]
          %v1374 = vld [vmem:[%s3 + $0x3f8] sm:$0xff]
          %v1375 = vld [vmem:[%s3 + $0x400] sm:$0xff]
          %v1376 = vld [vmem:[%s3 + $0x408] sm:$0xff]
          %v1377 = vld [vmem:[%s3 + $0x410] sm:$0xff]
          %v1378 = vld [vmem:[%s3 + $0x418] sm:$0xff]
          %v1379 = vld [vmem:[%s3 + $0x420] sm:$0xff]
          %v1380 = vld [vmem:[%s3 + $0x428] sm:$0xff]
          %v1381 = vld [vmem:[%s3 + $0x430] sm:$0xff]
          %v1382 = vld [vmem:[%s3 + $0x438] sm:$0xff]
          %v1383 = vld [vmem:[%s3 + $0x440] sm:$0xff]
          %v1384 = vld [vmem:[%s3 + $0x448] sm:$0xff]
          %v1385 = vld [vmem:[%s3 + $0x450] sm:$0xff]
          %v1386 = vld [vmem:[%s3 + $0x458] sm:$0xff]
          %v1387 = vld [vmem:[%s3 + $0x460] sm:$0xff]
          %v1388 = vld [vmem:[%s3 + $0x468] sm:$0xff]
          %v1389 = vld [vmem:[%s3 + $0x470] sm:$0xff]
          %v1390 = vld [vmem:[%s3 + $0x478] sm:$0xff]
          %v1391 = vld [vmem:[%s3 + $0x480] sm:$0xff]
          %v1392 = vld [vmem:[%s3 + $0x488] sm:$0xff]
          %v1393 = vld [vmem:[%s3 + $0x490] sm:$0xff]
          %v1394 = vld [vmem:[%s3 + $0x498] sm:$0xff]
          %v1395 = vld [vmem:[%s3 + $0x4a0] sm:$0xff]
          %v1396 = vld [vmem:[%s3 + $0x4a8] sm:$0xff]
          %v1397 = vld [vmem:[%s3 + $0x4b0] sm:$0xff]
          %v1398 = vld [vmem:[%s3 + $0x4b8] sm:$0xff]
          %v1399 = vld [vmem:[%s3 + $0x4c0] sm:$0xff]
          %v1400 = vld [vmem:[%s3 + $0x4c8] sm:$0xff]
          %v1401 = vld [vmem:[%s3 + $0x4d0] sm:$0xff]
          %v1402 = vld [vmem:[%s3 + $0x4d8] sm:$0xff]
          %v1403 = vld [vmem:[%s3 + $0x4e0] sm:$0xff]
          %v1404 = vld [vmem:[%s3 + $0x4e8] sm:$0xff]
          %v1405 = vld [vmem:[%s3 + $0x4f0] sm:$0xff]
          %v1406 = vld [vmem:[%s3 + $0x4f8] sm:$0xff]
          %v1407 = vld [vmem:[%s3 + $0x500] sm:$0xff]
          %v1408 = vld [vmem:[%s3 + $0x508] sm:$0xff]
          %v1409 = vld [vmem:[%s3 + $0x510] sm:$0xff]
          %v1410 = vld [vmem:[%s3 + $0x518] sm:$0xff]
          %v1411 = vld [vmem:[%s3 + $0x520] sm:$0xff]
          %v1412 = vld [vmem:[%s3 + $0x528] sm:$0xff]
          %v1413 = vld [vmem:[%s3 + $0x530] sm:$0xff]
          %v1414 = vld [vmem:[%s3 + $0x538] sm:$0xff]
          %v1415 = vld [vmem:[%s3 + $0x540] sm:$0xff]
          %v1416 = vld [vmem:[%s3 + $0x548] sm:$0xff]
          %v1417 = vld [vmem:[%s3 + $0x550] sm:$0xff]
          %v1418 = vld [vmem:[%s3 + $0x558] sm:$0xff]
          %v1419 = vld [vmem:[%s3 + $0x560] sm:$0xff]
          %v1420 = vld [vmem:[%s3 + $0x568] sm:$0xff]
          %v1421 = vld [vmem:[%s3 + $0x570] sm:$0xff]
          %v1422 = vld [vmem:[%s3 + $0x578] sm:$0xff]
          %v1423 = vld [vmem:[%s3 + $0x580] sm:$0xff]
          %v1424 = vld [vmem:[%s3 + $0x588] sm:$0xff]
          %v1425 = vld [vmem:[%s3 + $0x590] sm:$0xff]
          %v1426 = vld [vmem:[%s3 + $0x598] sm:$0xff]
          %v1427 = vld [vmem:[%s3 + $0x5a0] sm:$0xff]
          %v1428 = vld [vmem:[%s3 + $0x5a8] sm:$0xff]
          %v1429 = vld [vmem:[%s3 + $0x5b0] sm:$0xff]
          %v1430 = vld [vmem:[%s3 + $0x5b8] sm:$0xff]
          %v1431 = vld [vmem:[%s3 + $0x5c0] sm:$0xff]
          %v1432 = vld [vmem:[%s3 + $0x5c8] sm:$0xff]
          %v1433 = vld [vmem:[%s3 + $0x5d0] sm:$0xff]
          %v1434 = vld [vmem:[%s3 + $0x5d8] sm:$0xff]
          %v1435 = vld [vmem:[%s3 + $0x5e0] sm:$0xff]
          %v1436 = vld [vmem:[%s3 + $0x5e8] sm:$0xff]
          %v1437 = vld [vmem:[%s3 + $0x5f0] sm:$0xff]
          %v1438 = vld [vmem:[%s3 + $0x5f8] sm:$0xff]
          %v1439 = vld [vmem:[%s3 + $0x600] sm:$0xff]
          %v1440 = vld [vmem:[%s3 + $0x608] sm:$0xff]
          %v1441 = vld [vmem:[%s3 + $0x610] sm:$0xff]
          %v1442 = vld [vmem:[%s3 + $0x618] sm:$0xff]
          %v1443 = vld [vmem:[%s3 + $0x620] sm:$0xff]
          %v1444 = vld [vmem:[%s3 + $0x628] sm:$0xff]
          %v1445 = vld [vmem:[%s3 + $0x630] sm:$0xff]
          %v1446 = vld [vmem:[%s3 + $0x638] sm:$0xff]
          %v1447 = vld [vmem:[%s3 + $0x640] sm:$0xff]
          %v1448 = vld [vmem:[%s3 + $0x648] sm:$0xff]
          %v1449 = vld [vmem:[%s3 + $0x650] sm:$0xff]
          %v1450 = vld [vmem:[%s3 + $0x658] sm:$0xff]
          %v1451 = vld [vmem:[%s3 + $0x660] sm:$0xff]
          %v1452 = vld [vmem:[%s3 + $0x668] sm:$0xff]
          %v1453 = vld [vmem:[%s3 + $0x670] sm:$0xff]
          %v1454 = vld [vmem:[%s3 + $0x678] sm:$0xff]
          %v1455 = vld [vmem:[%s3 + $0x680] sm:$0xff]
          %v1456 = vld [vmem:[%s3 + $0x688] sm:$0xff]
          %v1457 = vld [vmem:[%s3 + $0x690] sm:$0xff]
          %v1458 = vld [vmem:[%s3 + $0x698] sm:$0xff]
          %v1459 = vld [vmem:[%s3 + $0x6a0] sm:$0xff]
          %v1460 = vld [vmem:[%s3 + $0x6a8] sm:$0xff]
          %v1461 = vld [vmem:[%s3 + $0x6b0] sm:$0xff]
          %v1462 = vld [vmem:[%s3 + $0x6b8] sm:$0xff]
          %v1463 = vld [vmem:[%s3 + $0x6c0] sm:$0xff]
          %v1464 = vld [vmem:[%s3 + $0x6c8] sm:$0xff]
          %v1465 = vld [vmem:[%s3 + $0x6d0] sm:$0xff]
          %v1466 = vld [vmem:[%s3 + $0x6d8] sm:$0xff]
          %v1467 = vld [vmem:[%s3 + $0x6e0] sm:$0xff]
          %v1468 = vld [vmem:[%s3 + $0x6e8] sm:$0xff]
          %v1469 = vld [vmem:[%s3 + $0x6f0] sm:$0xff]
          %v1470 = vld [vmem:[%s3 + $0x6f8] sm:$0xff]
          %v1471 = vld [vmem:[%s3 + $0x700] sm:$0xff]
          %v1472 = vld [vmem:[%s3 + $0x708] sm:$0xff]
          %v1473 = vld [vmem:[%s3 + $0x710] sm:$0xff]
          %v1474 = vld [vmem:[%s3 + $0x718] sm:$0xff]
          %v1475 = vld [vmem:[%s3 + $0x720] sm:$0xff]
          %v1476 = vld [vmem:[%s3 + $0x728] sm:$0xff]
          %v1477 = vld [vmem:[%s3 + $0x730] sm:$0xff]
          %v1478 = vld [vmem:[%s3 + $0x738] sm:$0xff]
          %v1479 = vld [vmem:[%s3 + $0x740] sm:$0xff]
          %v1480 = vld [vmem:[%s3 + $0x748] sm:$0xff]
          %v1481 = vld [vmem:[%s3 + $0x750] sm:$0xff]
          %v1482 = vld [vmem:[%s3 + $0x758] sm:$0xff]
          %v1483 = vld [vmem:[%s3 + $0x760] sm:$0xff]
          %v1484 = vld [vmem:[%s3 + $0x768] sm:$0xff]
          %v1485 = vld [vmem:[%s3 + $0x770] sm:$0xff]
          %v1486 = vld [vmem:[%s3 + $0x778] sm:$0xff]
          %v1487 = vld [vmem:[%s3 + $0x780] sm:$0xff]
          %v1488 = vld [vmem:[%s3 + $0x788] sm:$0xff]
          %v1489 = vld [vmem:[%s3 + $0x790] sm:$0xff]
          %v1490 = vld [vmem:[%s3 + $0x798] sm:$0xff]
          %v1491 = vld [vmem:[%s3 + $0x7a0] sm:$0xff]
          %v1492 = vld [vmem:[%s3 + $0x7a8] sm:$0xff]
          %v1493 = vld [vmem:[%s3 + $0x7b0] sm:$0xff]
          %v1494 = vld [vmem:[%s3 + $0x7b8] sm:$0xff]
          %v1495 = vld [vmem:[%s3 + $0x7c0] sm:$0xff]
          %v1496 = vld [vmem:[%s3 + $0x7c8] sm:$0xff]
          %v1497 = vld [vmem:[%s3 + $0x7d0] sm:$0xff]
          %v1498 = vld [vmem:[%s3 + $0x7d8] sm:$0xff]
          %v1499 = vld [vmem:[%s3 + $0x7e0] sm:$0xff]
          %v1500 = vld [vmem:[%s3 + $0x7e8] sm:$0xff]
          %v1501 = vld [vmem:[%s3 + $0x7f0] sm:$0xff]
          %v1502 = vld [vmem:[%s3 + $0x7f8] sm:$0xff]
          %v1503 = vld [vmem:[%s3 + $0x800] sm:$0xff]
          %v1504 = vld [vmem:[%s3 + $0x808] sm:$0xff]
          %v1505 = vld [vmem:[%s3 + $0x810] sm:$0xff]
          %v1506 = vld [vmem:[%s3 + $0x818] sm:$0xff]
          %v1507 = vld [vmem:[%s3 + $0x820] sm:$0xff]
          %v1508 = vld [vmem:[%s3 + $0x828] sm:$0xff]
          %v1509 = vld [vmem:[%s3 + $0x830] sm:$0xff]
          %v1510 = vld [vmem:[%s3 + $0x838] sm:$0xff]
          %v1511 = vld [vmem:[%s3 + $0x840] sm:$0xff]
          %v1512 = vld [vmem:[%s3 + $0x848] sm:$0xff]
          %v1513 = vld [vmem:[%s3 + $0x850] sm:$0xff]
          %v1514 = vld [vmem:[%s3 + $0x858] sm:$0xff]
          %v1515 = vld [vmem:[%s3 + $0x860] sm:$0xff]
          %v1516 = vld [vmem:[%s3 + $0x868] sm:$0xff]
          %v1517 = vld [vmem:[%s3 + $0x870] sm:$0xff]
          %v1518 = vld [vmem:[%s3 + $0x878] sm:$0xff]
          %v1519 = vld [vmem:[%s3 + $0x880] sm:$0xff]
          %v1520 = vld [vmem:[%s3 + $0x888] sm:$0xff]
          %v1521 = vld [vmem:[%s3 + $0x890] sm:$0xff]
          %v1522 = vld [vmem:[%s3 + $0x898] sm:$0xff]
          %v1523 = vld [vmem:[%s3 + $0x8a0] sm:$0xff]
          %v1524 = vld [vmem:[%s3 + $0x8a8] sm:$0xff]
          %v1525 = vld [vmem:[%s3 + $0x8b0] sm:$0xff]
          %v1526 = vld [vmem:[%s3 + $0x8b8] sm:$0xff]
          %v1527 = vld [vmem:[%s3 + $0x8c0] sm:$0xff]
          %v1528 = vld [vmem:[%s3 + $0x8c8] sm:$0xff]
          %v1529 = vld [vmem:[%s3 + $0x8d0] sm:$0xff]
          %v1530 = vld [vmem:[%s3 + $0x8d8] sm:$0xff]
          %v1531 = vld [vmem:[%s3 + $0x8e0] sm:$0xff]
          %v1532 = vld [vmem:[%s3 + $0x8e8] sm:$0xff]
          %v1533 = vld [vmem:[%s3 + $0x8f0] sm:$0xff]
          %v1534 = vld [vmem:[%s3 + $0x8f8] sm:$0xff]
          %v1535 = vld [vmem:[%s3 + $0x900] sm:$0xff]
          %v1536 = vld [vmem:[%s3 + $0x908] sm:$0xff]
          %v1537 = vld [vmem:[%s3 + $0x910] sm:$0xff]
          %v1538 = vld [vmem:[%s3 + $0x918] sm:$0xff]
          %v1539 = vld [vmem:[%s3 + $0x920] sm:$0xff]
          %v1540 = vld [vmem:[%s3 + $0x928] sm:$0xff]
          %v1541 = vld [vmem:[%s3 + $0x930] sm:$0xff]
          %v1542 = vld [vmem:[%s3 + $0x938] sm:$0xff]
          %v1543 = vld [vmem:[%s3 + $0x940] sm:$0xff]
          %v1544 = vld [vmem:[%s3 + $0x948] sm:$0xff]
          %v1545 = vld [vmem:[%s3 + $0x950] sm:$0xff]
          %v1546 = vld [vmem:[%s3 + $0x958] sm:$0xff]
          %v1547 = vld [vmem:[%s3 + $0x960] sm:$0xff]
          %v1548 = vld [vmem:[%s3 + $0x968] sm:$0xff]
          %v1549 = vld [vmem:[%s3 + $0x970] sm:$0xff]
          %v1550 = vld [vmem:[%s3 + $0x978] sm:$0xff]
          %v1551 = vld [vmem:[%s3 + $0x980] sm:$0xff]
          %v1552 = vld [vmem:[%s3 + $0x988] sm:$0xff]
          %v1553 = vld [vmem:[%s3 + $0x990] sm:$0xff]
          %v1554 = vld [vmem:[%s3 + $0x998] sm:$0xff]
          %v1555 = vld [vmem:[%s3 + $0x9a0] sm:$0xff]
          %v1556 = vld [vmem:[%s3 + $0x9a8] sm:$0xff]
          %v1557 = vld [vmem:[%s3 + $0x9b0] sm:$0xff]
          %v1558 = vld [vmem:[%s3 + $0x9b8] sm:$0xff]
          %v1559 = vld [vmem:[%s3 + $0x9c0] sm:$0xff]
          %v1560 = vld [vmem:[%s3 + $0x9c8] sm:$0xff]
          %v1561 = vld [vmem:[%s3 + $0x9d0] sm:$0xff]
          %v1562 = vld [vmem:[%s3 + $0x9d8] sm:$0xff]
          %v1563 = vld [vmem:[%s3 + $0x9e0] sm:$0xff]
          %v1564 = vld [vmem:[%s3 + $0x9e8] sm:$0xff]
          %v1565 = vld [vmem:[%s3 + $0x9f0] sm:$0xff]
          %v1566 = vld [vmem:[%s3 + $0x9f8] sm:$0xff]
          %v1567 = vld [vmem:[%s3 + $0xa00] sm:$0xff]
          %v1568 = vld [vmem:[%s3 + $0xa08] sm:$0xff]
          %v1569 = vld [vmem:[%s3 + $0xa10] sm:$0xff]
          %v1570 = vld [vmem:[%s3 + $0xa18] sm:$0xff]
          %v1571 = vld [vmem:[%s3 + $0xa20] sm:$0xff]
          %v1572 = vld [vmem:[%s3 + $0xa28] sm:$0xff]
          %v1573 = vld [vmem:[%s3 + $0xa30] sm:$0xff]
          %v1574 = vld [vmem:[%s3 + $0xa38] sm:$0xff]
          %v1575 = vld [vmem:[%s3 + $0xa40] sm:$0xff]
          %v1576 = vld [vmem:[%s3 + $0xa48] sm:$0xff]
          %v1577 = vld [vmem:[%s3 + $0xa50] sm:$0xff]
          %v1578 = vld [vmem:[%s3 + $0xa58] sm:$0xff]
          %v1579 = vld [vmem:[%s3 + $0xa60] sm:$0xff]
          %v1580 = vld [vmem:[%s3 + $0xa68] sm:$0xff]
          %v1581 = vld [vmem:[%s3 + $0xa70] sm:$0xff]
          %v1582 = vld [vmem:[%s3 + $0xa78] sm:$0xff]
          %v1583 = vld [vmem:[%s3 + $0xa80] sm:$0xff]
          %v1584 = vld [vmem:[%s3 + $0xa88] sm:$0xff]
          %v1585 = vld [vmem:[%s3 + $0xa90] sm:$0xff]
          %v1586 = vld [vmem:[%s3 + $0xa98] sm:$0xff]
          %v1587 = vld [vmem:[%s3 + $0xaa0] sm:$0xff]
          %v1588 = vld [vmem:[%s3 + $0xaa8] sm:$0xff]
          %v1589 = vld [vmem:[%s3 + $0xab0] sm:$0xff]
          %v1590 = vld [vmem:[%s3 + $0xab8] sm:$0xff]
          %v1591 = vld [vmem:[%s3 + $0xac0] sm:$0xff]
          %v1592 = vld [vmem:[%s3 + $0xac8] sm:$0xff]
          %v1593 = vld [vmem:[%s3 + $0xad0] sm:$0xff]
          %v1594 = vld [vmem:[%s3 + $0xad8] sm:$0xff]
          %v1595 = vld [vmem:[%s3 + $0xae0] sm:$0xff]
          %v1596 = vld [vmem:[%s3 + $0xae8] sm:$0xff]
          %v1597 = vld [vmem:[%s3 + $0xaf0] sm:$0xff]
          %v1598 = vld [vmem:[%s3 + $0xaf8] sm:$0xff]
          %v1599 = vld [vmem:[%s3 + $0xb00] sm:$0xff]
          %v1600 = vld [vmem:[%s3 + $0xb08] sm:$0xff]
          %v1601 = vld [vmem:[%s3 + $0xb10] sm:$0xff]
          %v1602 = vld [vmem:[%s3 + $0xb18] sm:$0xff]
          %v1603 = vld [vmem:[%s3 + $0xb20] sm:$0xff]
          %v1604 = vld [vmem:[%s3 + $0xb28] sm:$0xff]
          %v1605 = vld [vmem:[%s3 + $0xb30] sm:$0xff]
          %v1606 = vld [vmem:[%s3 + $0xb38] sm:$0xff]
          %v1607 = vld [vmem:[%s3 + $0xb40] sm:$0xff]
          %v1608 = vld [vmem:[%s3 + $0xb48] sm:$0xff]
          %v1609 = vld [vmem:[%s3 + $0xb50] sm:$0xff]
          %v1610 = vld [vmem:[%s3 + $0xb58] sm:$0xff]
          %v1611 = vld [vmem:[%s3 + $0xb60] sm:$0xff]
          %v1612 = vld [vmem:[%s3 + $0xb68] sm:$0xff]
          %v1613 = vld [vmem:[%s3 + $0xb70] sm:$0xff]
          %v1614 = vld [vmem:[%s3 + $0xb78] sm:$0xff]
          %v1615 = vld [vmem:[%s3 + $0xb80] sm:$0xff]
          %v1616 = vld [vmem:[%s3 + $0xb88] sm:$0xff]
          %v1617 = vld [vmem:[%s3 + $0xb90] sm:$0xff]
          %v1618 = vld [vmem:[%s3 + $0xb98] sm:$0xff]
          %v1619 = vld [vmem:[%s3 + $0xba0] sm:$0xff]
          %v1620 = vld [vmem:[%s3 + $0xba8] sm:$0xff]
          %v1621 = vld [vmem:[%s3 + $0xbb0] sm:$0xff]
          %v1622 = vld [vmem:[%s3 + $0xbb8] sm:$0xff]
          %v1623 = vld [vmem:[%s3 + $0xbc0] sm:$0xff]
          %v1624 = vld [vmem:[%s3 + $0xbc8] sm:$0xff]
          %v1625 = vld [vmem:[%s3 + $0xbd0] sm:$0xff]
          %v1626 = vld [vmem:[%s3 + $0xbd8] sm:$0xff]
          %v1627 = vld [vmem:[%s3 + $0xbe0] sm:$0xff]
          %v1628 = vld [vmem:[%s3 + $0xbe8] sm:$0xff]
          %v1629 = vld [vmem:[%s3 + $0xbf0] sm:$0xff]
          %v1630 = vld [vmem:[%s3 + $0xbf8] sm:$0xff]
          %v1631 = vld [vmem:[%s3 + $0xc00] sm:$0xff]
          %v1632 = vld [vmem:[%s3 + $0xc08] sm:$0xff]
          %v1633 = vld [vmem:[%s3 + $0xc10] sm:$0xff]
          %v1634 = vld [vmem:[%s3 + $0xc18] sm:$0xff]
          %v1635 = vld [vmem:[%s3 + $0xc20] sm:$0xff]
          %v1636 = vld [vmem:[%s3 + $0xc28] sm:$0xff]
          %v1637 = vld [vmem:[%s3 + $0xc30] sm:$0xff]
          %v1638 = vld [vmem:[%s3 + $0xc38] sm:$0xff]
          %v1639 = vld [vmem:[%s3 + $0xc40] sm:$0xff]
          %v1640 = vld [vmem:[%s3 + $0xc48] sm:$0xff]
          %v1641 = vld [vmem:[%s3 + $0xc50] sm:$0xff]
          %v1642 = vld [vmem:[%s3 + $0xc58] sm:$0xff]
          %v1643 = vld [vmem:[%s3 + $0xc60] sm:$0xff]
          %v1644 = vld [vmem:[%s3 + $0xc68] sm:$0xff]
          %v1645 = vld [vmem:[%s3 + $0xc70] sm:$0xff]
          %v1646 = vld [vmem:[%s3 + $0xc78] sm:$0xff]
          %v1647 = vld [vmem:[%s3 + $0xc80] sm:$0xff]
          %v1648 = vld [vmem:[%s3 + $0xc88] sm:$0xff]
          %v1649 = vld [vmem:[%s3 + $0xc90] sm:$0xff]
          %v1650 = vld [vmem:[%s3 + $0xc98] sm:$0xff]
          %v1651 = vld [vmem:[%s3 + $0xca0] sm:$0xff]
          %v1652 = vld [vmem:[%s3 + $0xca8] sm:$0xff]
          %v1653 = vld [vmem:[%s3 + $0xcb0] sm:$0xff]
          %v1654 = vld [vmem:[%s3 + $0xcb8] sm:$0xff]
          %v1655 = vld [vmem:[%s3 + $0xcc0] sm:$0xff]
          %v1656 = vld [vmem:[%s3 + $0xcc8] sm:$0xff]
          %v1657 = vld [vmem:[%s3 + $0xcd0] sm:$0xff]
          %v1658 = vld [vmem:[%s3 + $0xcd8] sm:$0xff]
          %v1659 = vld [vmem:[%s3 + $0xce0] sm:$0xff]
          %v1660 = vld [vmem:[%s3 + $0xce8] sm:$0xff]
          %v1661 = vld [vmem:[%s3 + $0xcf0] sm:$0xff]
          %v1662 = vld [vmem:[%s3 + $0xcf8] sm:$0xff]
          %v1663 = vld [vmem:[%s3 + $0xd00] sm:$0xff]
          %v1664 = vld [vmem:[%s3 + $0xd08] sm:$0xff]
          %v1665 = vld [vmem:[%s3 + $0xd10] sm:$0xff]
          %v1666 = vld [vmem:[%s3 + $0xd18] sm:$0xff]
          %v1667 = vld [vmem:[%s3 + $0xd20] sm:$0xff]
          %v1668 = vld [vmem:[%s3 + $0xd28] sm:$0xff]
          %v1669 = vld [vmem:[%s3 + $0xd30] sm:$0xff]
          %v1670 = vld [vmem:[%s3 + $0xd38] sm:$0xff]
          %v1671 = vld [vmem:[%s3 + $0xd40] sm:$0xff]
          %v1672 = vld [vmem:[%s3 + $0xd48] sm:$0xff]
          %v1673 = vld [vmem:[%s3 + $0xd50] sm:$0xff]
          %v1674 = vld [vmem:[%s3 + $0xd58] sm:$0xff]
          %v1675 = vld [vmem:[%s3 + $0xd60] sm:$0xff]
          %v1676 = vld [vmem:[%s3 + $0xd68] sm:$0xff]
          %v1677 = vld [vmem:[%s3 + $0xd70] sm:$0xff]
          %v1678 = vld [vmem:[%s3 + $0xd78] sm:$0xff]
          %v1679 = vld [vmem:[%s3 + $0xd80] sm:$0xff]
          %v1680 = vld [vmem:[%s3 + $0xd88] sm:$0xff]
          %v1681 = vld [vmem:[%s3 + $0xd90] sm:$0xff]
          %v1682 = vld [vmem:[%s3 + $0xd98] sm:$0xff]
          %v1683 = vld [vmem:[%s3 + $0xda0] sm:$0xff]
          %v1684 = vld [vmem:[%s3 + $0xda8] sm:$0xff]
          %v1685 = vld [vmem:[%s3 + $0xdb0] sm:$0xff]
          %v1686 = vld [vmem:[%s3 + $0xdb8] sm:$0xff]
          %v1687 = vld [vmem:[%s3 + $0xdc0] sm:$0xff]
          %v1688 = vld [vmem:[%s3 + $0xdc8] sm:$0xff]
          %v1689 = vld [vmem:[%s3 + $0xdd0] sm:$0xff]
          %v1690 = vld [vmem:[%s3 + $0xdd8] sm:$0xff]
          %v1691 = vld [vmem:[%s3 + $0xde0] sm:$0xff]
          %v1692 = vld [vmem:[%s3 + $0xde8] sm:$0xff]
          %v1693 = vld [vmem:[%s3 + $0xdf0] sm:$0xff]
          %v1694 = vld [vmem:[%s3 + $0xdf8] sm:$0xff]
          %v1695 = vld [vmem:[%s3 + $0xe00] sm:$0xff]
          %v1696 = vld [vmem:[%s3 + $0xe08] sm:$0xff]
          %v1697 = vld [vmem:[%s3 + $0xe10] sm:$0xff]
          %v1698 = vld [vmem:[%s3 + $0xe18] sm:$0xff]
          %v1699 = vld [vmem:[%s3 + $0xe20] sm:$0xff]
          %v1700 = vld [vmem:[%s3 + $0xe28] sm:$0xff]
          %v1701 = vld [vmem:[%s3 + $0xe30] sm:$0xff]
          %v1702 = vld [vmem:[%s3 + $0xe38] sm:$0xff]
          %v1703 = vld [vmem:[%s3 + $0xe40] sm:$0xff]
          %v1704 = vld [vmem:[%s3 + $0xe48] sm:$0xff]
          %v1705 = vld [vmem:[%s3 + $0xe50] sm:$0xff]
          %v1706 = vld [vmem:[%s3 + $0xe58] sm:$0xff]
          %v1707 = vld [vmem:[%s3 + $0xe60] sm:$0xff]
          %v1708 = vld [vmem:[%s3 + $0xe68] sm:$0xff]
          %v1709 = vld [vmem:[%s3 + $0xe70] sm:$0xff]
          %v1710 = vld [vmem:[%s3 + $0xe78] sm:$0xff]
          %v1711 = vld [vmem:[%s3 + $0xe80] sm:$0xff]
          %v1712 = vld [vmem:[%s3 + $0xe88] sm:$0xff]
          %v1713 = vld [vmem:[%s3 + $0xe90] sm:$0xff]
          %v1714 = vld [vmem:[%s3 + $0xe98] sm:$0xff]
          %v1715 = vld [vmem:[%s3 + $0xea0] sm:$0xff]
          %v1716 = vld [vmem:[%s3 + $0xea8] sm:$0xff]
          %v1717 = vld [vmem:[%s3 + $0xeb0] sm:$0xff]
          %v1718 = vld [vmem:[%s3 + $0xeb8] sm:$0xff]
          %v1719 = vld [vmem:[%s3 + $0xec0] sm:$0xff]
          %v1720 = vld [vmem:[%s3 + $0xec8] sm:$0xff]
          %v1721 = vld [vmem:[%s3 + $0xed0] sm:$0xff]
          %v1722 = vld [vmem:[%s3 + $0xed8] sm:$0xff]
          %v1723 = vld [vmem:[%s3 + $0xee0] sm:$0xff]
          %v1724 = vld [vmem:[%s3 + $0xee8] sm:$0xff]
          %v1725 = vld [vmem:[%s3 + $0xef0] sm:$0xff]
          %v1726 = vld [vmem:[%s3 + $0xef8] sm:$0xff]
          %v1727 = vld [vmem:[%s3 + $0xf00] sm:$0xff]
          %v1728 = vld [vmem:[%s3 + $0xf08] sm:$0xff]
          %v1729 = vld [vmem:[%s3 + $0xf10] sm:$0xff]
          %v1730 = vld [vmem:[%s3 + $0xf18] sm:$0xff]
          %v1731 = vld [vmem:[%s3 + $0xf20] sm:$0xff]
          %v1732 = vld [vmem:[%s3 + $0xf28] sm:$0xff]
          %v1733 = vld [vmem:[%s3 + $0xf30] sm:$0xff]
          %v1734 = vld [vmem:[%s3 + $0xf38] sm:$0xff]
          %v1735 = vld [vmem:[%s3 + $0xf40] sm:$0xff]
          %v1736 = vld [vmem:[%s3 + $0xf48] sm:$0xff]
          %v1737 = vld [vmem:[%s3 + $0xf50] sm:$0xff]
          %v1738 = vld [vmem:[%s3 + $0xf58] sm:$0xff]
          %v1739 = vld [vmem:[%s3 + $0xf60] sm:$0xff]
          %v1740 = vld [vmem:[%s3 + $0xf68] sm:$0xff]
          %v1741 = vld [vmem:[%s3 + $0xf70] sm:$0xff]
          %v1742 = vld [vmem:[%s3 + $0xf78] sm:$0xff]
          %v1743 = vld [vmem:[%s3 + $0xf80] sm:$0xff]
          %v1744 = vld [vmem:[%s3 + $0xf88] sm:$0xff]
          %v1745 = vld [vmem:[%s3 + $0xf90] sm:$0xff]
          %v1746 = vld [vmem:[%s3 + $0xf98] sm:$0xff]
          %v1747 = vld [vmem:[%s3 + $0xfa0] sm:$0xff]
          %v1748 = vld [vmem:[%s3 + $0xfa8] sm:$0xff]
          %v1749 = vld [vmem:[%s3 + $0xfb0] sm:$0xff]
          %v1750 = vld [vmem:[%s3 + $0xfb8] sm:$0xff]
          %v1751 = vld [vmem:[%s3 + $0xfc0] sm:$0xff]
          %v1752 = vld [vmem:[%s3 + $0xfc8] sm:$0xff]
          %v1753 = vld [vmem:[%s3 + $0xfd0] sm:$0xff]
          %v1754 = vld [vmem:[%s3 + $0xfd8] sm:$0xff]
          %v1755 = vld [vmem:[%s3 + $0xfe0] sm:$0xff]
          %v1756 = vld [vmem:[%s3 + $0xfe8] sm:$0xff]
          %v1757 = vld [vmem:[%s3 + $0xff0] sm:$0xff]
          %v1758 = vld [vmem:[%s3 + $0xff8] sm:$0xff]
          %v1759 = vld [vmem:[%s4] sm:$0xff]
          %v1761 = vlaneseq
          %v1762 = vshrl.u32 %v1761, 7
          %v1763 = vsub.s32 0, %v1762
          %v1764 = vrot.slane %v1759, %v1763
          %v1765 = vlaneseq
          %v1766 = vshrl.u32 %v1765, 7
          %v1767 = vsub.s32 1, %v1766
          %v1768 = vrot.slane %v1759, %v1767
          %v1769 = vlaneseq
          %v1770 = vshrl.u32 %v1769, 7
          %v1771 = vsub.s32 2, %v1770
          %v1772 = vrot.slane %v1759, %v1771
          %v1773 = vlaneseq
          %v1774 = vshrl.u32 %v1773, 7
          %v1775 = vsub.s32 3, %v1774
          %v1776 = vrot.slane %v1759, %v1775
          %v1777 = vlaneseq
          %v1778 = vshrl.u32 %v1777, 7
          %v1779 = vsub.s32 4, %v1778
          %v1780 = vrot.slane %v1759, %v1779
          %v1781 = vlaneseq
          %v1782 = vshrl.u32 %v1781, 7
          %v1783 = vsub.s32 5, %v1782
          %v1784 = vrot.slane %v1759, %v1783
          %v1785 = vlaneseq
          %v1786 = vshrl.u32 %v1785, 7
          %v1787 = vsub.s32 6, %v1786
          %v1788 = vrot.slane %v1759, %v1787
          %v1789 = vlaneseq
          %v1790 = vshrl.u32 %v1789, 7
          %v1791 = vsub.s32 7, %v1790
          %v1792 = vrot.slane %v1759, %v1791
          %v2313 = vunpack.c.l.b16 %v1247
          %v2314 = vunpack.c.h.b16 %v1247
          %v2315 = vunpack.c.l.b16 %v1248
          %v2316 = vunpack.c.h.b16 %v1248
          %v2317 = vunpack.c.l.b16 %v1249
          %v2318 = vunpack.c.h.b16 %v1249
          %v2319 = vunpack.c.l.b16 %v1250
          %v2320 = vunpack.c.h.b16 %v1250
          %v2321 = vunpack.c.l.b16 %v1251
          %v2322 = vunpack.c.h.b16 %v1251
          %v2323 = vunpack.c.l.b16 %v1252
          %v2324 = vunpack.c.h.b16 %v1252
          %v2325 = vunpack.c.l.b16 %v1253
          %v2326 = vunpack.c.h.b16 %v1253
          %v2327 = vunpack.c.l.b16 %v1254
          %v2328 = vunpack.c.h.b16 %v1254
          %v2329 = vunpack.c.l.b16 %v1255
          %v2330 = vunpack.c.h.b16 %v1255
          %v2331 = vunpack.c.l.b16 %v1256
          %v2332 = vunpack.c.h.b16 %v1256
          %v2333 = vunpack.c.l.b16 %v1257
          %v2334 = vunpack.c.h.b16 %v1257
          %v2335 = vunpack.c.l.b16 %v1258
          %v2336 = vunpack.c.h.b16 %v1258
          %v2337 = vunpack.c.l.b16 %v1259
          %v2338 = vunpack.c.h.b16 %v1259
          %v2339 = vunpack.c.l.b16 %v1260
          %v2340 = vunpack.c.h.b16 %v1260
          %v2341 = vunpack.c.l.b16 %v1261
          %v2342 = vunpack.c.h.b16 %v1261
          %v2343 = vunpack.c.l.b16 %v1262
          %v2344 = vunpack.c.h.b16 %v1262
          %v2345 = vunpack.c.l.b16 %v1263
          %v2346 = vunpack.c.h.b16 %v1263
          %v2347 = vunpack.c.l.b16 %v1264
          %v2348 = vunpack.c.h.b16 %v1264
          %v2349 = vunpack.c.l.b16 %v1265
          %v2350 = vunpack.c.h.b16 %v1265
          %v2351 = vunpack.c.l.b16 %v1266
          %v2352 = vunpack.c.h.b16 %v1266
          %v2353 = vunpack.c.l.b16 %v1267
          %v2354 = vunpack.c.h.b16 %v1267
          %v2355 = vunpack.c.l.b16 %v1268
          %v2356 = vunpack.c.h.b16 %v1268
          %v2357 = vunpack.c.l.b16 %v1269
          %v2358 = vunpack.c.h.b16 %v1269
          %v2359 = vunpack.c.l.b16 %v1270
          %v2360 = vunpack.c.h.b16 %v1270
          %v2361 = vunpack.c.l.b16 %v1271
          %v2362 = vunpack.c.h.b16 %v1271
          %v2363 = vunpack.c.l.b16 %v1272
          %v2364 = vunpack.c.h.b16 %v1272
          %v2365 = vunpack.c.l.b16 %v1273
          %v2366 = vunpack.c.h.b16 %v1273
          %v2367 = vunpack.c.l.b16 %v1274
          %v2368 = vunpack.c.h.b16 %v1274
          %v2369 = vunpack.c.l.b16 %v1275
          %v2370 = vunpack.c.h.b16 %v1275
          %v2371 = vunpack.c.l.b16 %v1276
          %v2372 = vunpack.c.h.b16 %v1276
          %v2373 = vunpack.c.l.b16 %v1277
          %v2374 = vunpack.c.h.b16 %v1277
          %v2375 = vunpack.c.l.b16 %v1278
          %v2376 = vunpack.c.h.b16 %v1278
          %v2377 = vunpack.c.l.b16 %v1279
          %v2378 = vunpack.c.h.b16 %v1279
          %v2379 = vunpack.c.l.b16 %v1280
          %v2380 = vunpack.c.h.b16 %v1280
          %v2381 = vunpack.c.l.b16 %v1281
          %v2382 = vunpack.c.h.b16 %v1281
          %v2383 = vunpack.c.l.b16 %v1282
          %v2384 = vunpack.c.h.b16 %v1282
          %v2385 = vunpack.c.l.b16 %v1283
          %v2386 = vunpack.c.h.b16 %v1283
          %v2387 = vunpack.c.l.b16 %v1284
          %v2388 = vunpack.c.h.b16 %v1284
          %v2389 = vunpack.c.l.b16 %v1285
          %v2390 = vunpack.c.h.b16 %v1285
          %v2391 = vunpack.c.l.b16 %v1286
          %v2392 = vunpack.c.h.b16 %v1286
          %v2393 = vunpack.c.l.b16 %v1287
          %v2394 = vunpack.c.h.b16 %v1287
          %v2395 = vunpack.c.l.b16 %v1288
          %v2396 = vunpack.c.h.b16 %v1288
          %v2397 = vunpack.c.l.b16 %v1289
          %v2398 = vunpack.c.h.b16 %v1289
          %v2399 = vunpack.c.l.b16 %v1290
          %v2400 = vunpack.c.h.b16 %v1290
          %v2401 = vunpack.c.l.b16 %v1291
          %v2402 = vunpack.c.h.b16 %v1291
          %v2403 = vunpack.c.l.b16 %v1292
          %v2404 = vunpack.c.h.b16 %v1292
          %v2405 = vunpack.c.l.b16 %v1293
          %v2406 = vunpack.c.h.b16 %v1293
          %v2407 = vunpack.c.l.b16 %v1294
          %v2408 = vunpack.c.h.b16 %v1294
          %v2409 = vunpack.c.l.b16 %v1295
          %v2410 = vunpack.c.h.b16 %v1295
          %v2411 = vunpack.c.l.b16 %v1296
          %v2412 = vunpack.c.h.b16 %v1296
          %v2413 = vunpack.c.l.b16 %v1297
          %v2414 = vunpack.c.h.b16 %v1297
          %v2415 = vunpack.c.l.b16 %v1298
          %v2416 = vunpack.c.h.b16 %v1298
          %v2417 = vunpack.c.l.b16 %v1299
          %v2418 = vunpack.c.h.b16 %v1299
          %v2419 = vunpack.c.l.b16 %v1300
          %v2420 = vunpack.c.h.b16 %v1300
          %v2421 = vunpack.c.l.b16 %v1301
          %v2422 = vunpack.c.h.b16 %v1301
          %v2423 = vunpack.c.l.b16 %v1302
          %v2424 = vunpack.c.h.b16 %v1302
          %v2425 = vunpack.c.l.b16 %v1303
          %v2426 = vunpack.c.h.b16 %v1303
          %v2427 = vunpack.c.l.b16 %v1304
          %v2428 = vunpack.c.h.b16 %v1304
          %v2429 = vunpack.c.l.b16 %v1305
          %v2430 = vunpack.c.h.b16 %v1305
          %v2431 = vunpack.c.l.b16 %v1306
          %v2432 = vunpack.c.h.b16 %v1306
          %v2433 = vunpack.c.l.b16 %v1307
          %v2434 = vunpack.c.h.b16 %v1307
          %v2435 = vunpack.c.l.b16 %v1308
          %v2436 = vunpack.c.h.b16 %v1308
          %v2437 = vunpack.c.l.b16 %v1309
          %v2438 = vunpack.c.h.b16 %v1309
          %v2439 = vunpack.c.l.b16 %v1310
          %v2440 = vunpack.c.h.b16 %v1310
          %v2441 = vunpack.c.l.b16 %v1311
          %v2442 = vunpack.c.h.b16 %v1311
          %v2443 = vunpack.c.l.b16 %v1312
          %v2444 = vunpack.c.h.b16 %v1312
          %v2445 = vunpack.c.l.b16 %v1313
          %v2446 = vunpack.c.h.b16 %v1313
          %v2447 = vunpack.c.l.b16 %v1314
          %v2448 = vunpack.c.h.b16 %v1314
          %v2449 = vunpack.c.l.b16 %v1315
          %v2450 = vunpack.c.h.b16 %v1315
          %v2451 = vunpack.c.l.b16 %v1316
          %v2452 = vunpack.c.h.b16 %v1316
          %v2453 = vunpack.c.l.b16 %v1317
          %v2454 = vunpack.c.h.b16 %v1317
          %v2455 = vunpack.c.l.b16 %v1318
          %v2456 = vunpack.c.h.b16 %v1318
          %v2457 = vunpack.c.l.b16 %v1319
          %v2458 = vunpack.c.h.b16 %v1319
          %v2459 = vunpack.c.l.b16 %v1320
          %v2460 = vunpack.c.h.b16 %v1320
          %v2461 = vunpack.c.l.b16 %v1321
          %v2462 = vunpack.c.h.b16 %v1321
          %v2463 = vunpack.c.l.b16 %v1322
          %v2464 = vunpack.c.h.b16 %v1322
          %v2465 = vunpack.c.l.b16 %v1323
          %v2466 = vunpack.c.h.b16 %v1323
          %v2467 = vunpack.c.l.b16 %v1324
          %v2468 = vunpack.c.h.b16 %v1324
          %v2469 = vunpack.c.l.b16 %v1325
          %v2470 = vunpack.c.h.b16 %v1325
          %v2471 = vunpack.c.l.b16 %v1326
          %v2472 = vunpack.c.h.b16 %v1326
          %v2473 = vunpack.c.l.b16 %v1327
          %v2474 = vunpack.c.h.b16 %v1327
          %v2475 = vunpack.c.l.b16 %v1328
          %v2476 = vunpack.c.h.b16 %v1328
          %v2477 = vunpack.c.l.b16 %v1329
          %v2478 = vunpack.c.h.b16 %v1329
          %v2479 = vunpack.c.l.b16 %v1330
          %v2480 = vunpack.c.h.b16 %v1330
          %v2481 = vunpack.c.l.b16 %v1331
          %v2482 = vunpack.c.h.b16 %v1331
          %v2483 = vunpack.c.l.b16 %v1332
          %v2484 = vunpack.c.h.b16 %v1332
          %v2485 = vunpack.c.l.b16 %v1333
          %v2486 = vunpack.c.h.b16 %v1333
          %v2487 = vunpack.c.l.b16 %v1334
          %v2488 = vunpack.c.h.b16 %v1334
          %v2489 = vunpack.c.l.b16 %v1335
          %v2490 = vunpack.c.h.b16 %v1335
          %v2491 = vunpack.c.l.b16 %v1336
          %v2492 = vunpack.c.h.b16 %v1336
          %v2493 = vunpack.c.l.b16 %v1337
          %v2494 = vunpack.c.h.b16 %v1337
          %v2495 = vunpack.c.l.b16 %v1338
          %v2496 = vunpack.c.h.b16 %v1338
          %v2497 = vunpack.c.l.b16 %v1339
          %v2498 = vunpack.c.h.b16 %v1339
          %v2499 = vunpack.c.l.b16 %v1340
          %v2500 = vunpack.c.h.b16 %v1340
          %v2501 = vunpack.c.l.b16 %v1341
          %v2502 = vunpack.c.h.b16 %v1341
          %v2503 = vunpack.c.l.b16 %v1342
          %v2504 = vunpack.c.h.b16 %v1342
          %v2505 = vunpack.c.l.b16 %v1343
          %v2506 = vunpack.c.h.b16 %v1343
          %v2507 = vunpack.c.l.b16 %v1344
          %v2508 = vunpack.c.h.b16 %v1344
          %v2509 = vunpack.c.l.b16 %v1345
          %v2510 = vunpack.c.h.b16 %v1345
          %v2511 = vunpack.c.l.b16 %v1346
          %v2512 = vunpack.c.h.b16 %v1346
          %v2513 = vunpack.c.l.b16 %v1347
          %v2514 = vunpack.c.h.b16 %v1347
          %v2515 = vunpack.c.l.b16 %v1348
          %v2516 = vunpack.c.h.b16 %v1348
          %v2517 = vunpack.c.l.b16 %v1349
          %v2518 = vunpack.c.h.b16 %v1349
          %v2519 = vunpack.c.l.b16 %v1350
          %v2520 = vunpack.c.h.b16 %v1350
          %v2521 = vunpack.c.l.b16 %v1351
          %v2522 = vunpack.c.h.b16 %v1351
          %v2523 = vunpack.c.l.b16 %v1352
          %v2524 = vunpack.c.h.b16 %v1352
          %v2525 = vunpack.c.l.b16 %v1353
          %v2526 = vunpack.c.h.b16 %v1353
          %v2527 = vunpack.c.l.b16 %v1354
          %v2528 = vunpack.c.h.b16 %v1354
          %v2529 = vunpack.c.l.b16 %v1355
          %v2530 = vunpack.c.h.b16 %v1355
          %v2531 = vunpack.c.l.b16 %v1356
          %v2532 = vunpack.c.h.b16 %v1356
          %v2533 = vunpack.c.l.b16 %v1357
          %v2534 = vunpack.c.h.b16 %v1357
          %v2535 = vunpack.c.l.b16 %v1358
          %v2536 = vunpack.c.h.b16 %v1358
          %v2537 = vunpack.c.l.b16 %v1359
          %v2538 = vunpack.c.h.b16 %v1359
          %v2539 = vunpack.c.l.b16 %v1360
          %v2540 = vunpack.c.h.b16 %v1360
          %v2541 = vunpack.c.l.b16 %v1361
          %v2542 = vunpack.c.h.b16 %v1361
          %v2543 = vunpack.c.l.b16 %v1362
          %v2544 = vunpack.c.h.b16 %v1362
          %v2545 = vunpack.c.l.b16 %v1363
          %v2546 = vunpack.c.h.b16 %v1363
          %v2547 = vunpack.c.l.b16 %v1364
          %v2548 = vunpack.c.h.b16 %v1364
          %v2549 = vunpack.c.l.b16 %v1365
          %v2550 = vunpack.c.h.b16 %v1365
          %v2551 = vunpack.c.l.b16 %v1366
          %v2552 = vunpack.c.h.b16 %v1366
          %v2553 = vunpack.c.l.b16 %v1367
          %v2554 = vunpack.c.h.b16 %v1367
          %v2555 = vunpack.c.l.b16 %v1368
          %v2556 = vunpack.c.h.b16 %v1368
          %v2557 = vunpack.c.l.b16 %v1369
          %v2558 = vunpack.c.h.b16 %v1369
          %v2559 = vunpack.c.l.b16 %v1370
          %v2560 = vunpack.c.h.b16 %v1370
          %v2561 = vunpack.c.l.b16 %v1371
          %v2562 = vunpack.c.h.b16 %v1371
          %v2563 = vunpack.c.l.b16 %v1372
          %v2564 = vunpack.c.h.b16 %v1372
          %v2565 = vunpack.c.l.b16 %v1373
          %v2566 = vunpack.c.h.b16 %v1373
          %v2567 = vunpack.c.l.b16 %v1374
          %v2568 = vunpack.c.h.b16 %v1374
          %v2569 = vunpack.c.l.b16 %v1375
          %v2570 = vunpack.c.h.b16 %v1375
          %v2571 = vunpack.c.l.b16 %v1376
          %v2572 = vunpack.c.h.b16 %v1376
          %v2573 = vunpack.c.l.b16 %v1377
          %v2574 = vunpack.c.h.b16 %v1377
          %v2575 = vunpack.c.l.b16 %v1378
          %v2576 = vunpack.c.h.b16 %v1378
          %v2577 = vunpack.c.l.b16 %v1379
          %v2578 = vunpack.c.h.b16 %v1379
          %v2579 = vunpack.c.l.b16 %v1380
          %v2580 = vunpack.c.h.b16 %v1380
          %v2581 = vunpack.c.l.b16 %v1381
          %v2582 = vunpack.c.h.b16 %v1381
          %v2583 = vunpack.c.l.b16 %v1382
          %v2584 = vunpack.c.h.b16 %v1382
          %v2585 = vunpack.c.l.b16 %v1383
          %v2586 = vunpack.c.h.b16 %v1383
          %v2587 = vunpack.c.l.b16 %v1384
          %v2588 = vunpack.c.h.b16 %v1384
          %v2589 = vunpack.c.l.b16 %v1385
          %v2590 = vunpack.c.h.b16 %v1385
          %v2591 = vunpack.c.l.b16 %v1386
          %v2592 = vunpack.c.h.b16 %v1386
          %v2593 = vunpack.c.l.b16 %v1387
          %v2594 = vunpack.c.h.b16 %v1387
          %v2595 = vunpack.c.l.b16 %v1388
          %v2596 = vunpack.c.h.b16 %v1388
          %v2597 = vunpack.c.l.b16 %v1389
          %v2598 = vunpack.c.h.b16 %v1389
          %v2599 = vunpack.c.l.b16 %v1390
          %v2600 = vunpack.c.h.b16 %v1390
          %v2601 = vunpack.c.l.b16 %v1391
          %v2602 = vunpack.c.h.b16 %v1391
          %v2603 = vunpack.c.l.b16 %v1392
          %v2604 = vunpack.c.h.b16 %v1392
          %v2605 = vunpack.c.l.b16 %v1393
          %v2606 = vunpack.c.h.b16 %v1393
          %v2607 = vunpack.c.l.b16 %v1394
          %v2608 = vunpack.c.h.b16 %v1394
          %v2609 = vunpack.c.l.b16 %v1395
          %v2610 = vunpack.c.h.b16 %v1395
          %v2611 = vunpack.c.l.b16 %v1396
          %v2612 = vunpack.c.h.b16 %v1396
          %v2613 = vunpack.c.l.b16 %v1397
          %v2614 = vunpack.c.h.b16 %v1397
          %v2615 = vunpack.c.l.b16 %v1398
          %v2616 = vunpack.c.h.b16 %v1398
          %v2617 = vunpack.c.l.b16 %v1399
          %v2618 = vunpack.c.h.b16 %v1399
          %v2619 = vunpack.c.l.b16 %v1400
          %v2620 = vunpack.c.h.b16 %v1400
          %v2621 = vunpack.c.l.b16 %v1401
          %v2622 = vunpack.c.h.b16 %v1401
          %v2623 = vunpack.c.l.b16 %v1402
          %v2624 = vunpack.c.h.b16 %v1402
          %v2625 = vunpack.c.l.b16 %v1403
          %v2626 = vunpack.c.h.b16 %v1403
          %v2627 = vunpack.c.l.b16 %v1404
          %v2628 = vunpack.c.h.b16 %v1404
          %v2629 = vunpack.c.l.b16 %v1405
          %v2630 = vunpack.c.h.b16 %v1405
          %v2631 = vunpack.c.l.b16 %v1406
          %v2632 = vunpack.c.h.b16 %v1406
          %v2633 = vunpack.c.l.b16 %v1407
          %v2634 = vunpack.c.h.b16 %v1407
          %v2635 = vunpack.c.l.b16 %v1408
          %v2636 = vunpack.c.h.b16 %v1408
          %v2637 = vunpack.c.l.b16 %v1409
          %v2638 = vunpack.c.h.b16 %v1409
          %v2639 = vunpack.c.l.b16 %v1410
          %v2640 = vunpack.c.h.b16 %v1410
          %v2641 = vunpack.c.l.b16 %v1411
          %v2642 = vunpack.c.h.b16 %v1411
          %v2643 = vunpack.c.l.b16 %v1412
          %v2644 = vunpack.c.h.b16 %v1412
          %v2645 = vunpack.c.l.b16 %v1413
          %v2646 = vunpack.c.h.b16 %v1413
          %v2647 = vunpack.c.l.b16 %v1414
          %v2648 = vunpack.c.h.b16 %v1414
          %v2649 = vunpack.c.l.b16 %v1415
          %v2650 = vunpack.c.h.b16 %v1415
          %v2651 = vunpack.c.l.b16 %v1416
          %v2652 = vunpack.c.h.b16 %v1416
          %v2653 = vunpack.c.l.b16 %v1417
          %v2654 = vunpack.c.h.b16 %v1417
          %v2655 = vunpack.c.l.b16 %v1418
          %v2656 = vunpack.c.h.b16 %v1418
          %v2657 = vunpack.c.l.b16 %v1419
          %v2658 = vunpack.c.h.b16 %v1419
          %v2659 = vunpack.c.l.b16 %v1420
          %v2660 = vunpack.c.h.b16 %v1420
          %v2661 = vunpack.c.l.b16 %v1421
          %v2662 = vunpack.c.h.b16 %v1421
          %v2663 = vunpack.c.l.b16 %v1422
          %v2664 = vunpack.c.h.b16 %v1422
          %v2665 = vunpack.c.l.b16 %v1423
          %v2666 = vunpack.c.h.b16 %v1423
          %v2667 = vunpack.c.l.b16 %v1424
          %v2668 = vunpack.c.h.b16 %v1424
          %v2669 = vunpack.c.l.b16 %v1425
          %v2670 = vunpack.c.h.b16 %v1425
          %v2671 = vunpack.c.l.b16 %v1426
          %v2672 = vunpack.c.h.b16 %v1426
          %v2673 = vunpack.c.l.b16 %v1427
          %v2674 = vunpack.c.h.b16 %v1427
          %v2675 = vunpack.c.l.b16 %v1428
          %v2676 = vunpack.c.h.b16 %v1428
          %v2677 = vunpack.c.l.b16 %v1429
          %v2678 = vunpack.c.h.b16 %v1429
          %v2679 = vunpack.c.l.b16 %v1430
          %v2680 = vunpack.c.h.b16 %v1430
          %v2681 = vunpack.c.l.b16 %v1431
          %v2682 = vunpack.c.h.b16 %v1431
          %v2683 = vunpack.c.l.b16 %v1432
          %v2684 = vunpack.c.h.b16 %v1432
          %v2685 = vunpack.c.l.b16 %v1433
          %v2686 = vunpack.c.h.b16 %v1433
          %v2687 = vunpack.c.l.b16 %v1434
          %v2688 = vunpack.c.h.b16 %v1434
          %v2689 = vunpack.c.l.b16 %v1435
          %v2690 = vunpack.c.h.b16 %v1435
          %v2691 = vunpack.c.l.b16 %v1436
          %v2692 = vunpack.c.h.b16 %v1436
          %v2693 = vunpack.c.l.b16 %v1437
          %v2694 = vunpack.c.h.b16 %v1437
          %v2695 = vunpack.c.l.b16 %v1438
          %v2696 = vunpack.c.h.b16 %v1438
          %v2697 = vunpack.c.l.b16 %v1439
          %v2698 = vunpack.c.h.b16 %v1439
          %v2699 = vunpack.c.l.b16 %v1440
          %v2700 = vunpack.c.h.b16 %v1440
          %v2701 = vunpack.c.l.b16 %v1441
          %v2702 = vunpack.c.h.b16 %v1441
          %v2703 = vunpack.c.l.b16 %v1442
          %v2704 = vunpack.c.h.b16 %v1442
          %v2705 = vunpack.c.l.b16 %v1443
          %v2706 = vunpack.c.h.b16 %v1443
          %v2707 = vunpack.c.l.b16 %v1444
          %v2708 = vunpack.c.h.b16 %v1444
          %v2709 = vunpack.c.l.b16 %v1445
          %v2710 = vunpack.c.h.b16 %v1445
          %v2711 = vunpack.c.l.b16 %v1446
          %v2712 = vunpack.c.h.b16 %v1446
          %v2713 = vunpack.c.l.b16 %v1447
          %v2714 = vunpack.c.h.b16 %v1447
          %v2715 = vunpack.c.l.b16 %v1448
          %v2716 = vunpack.c.h.b16 %v1448
          %v2717 = vunpack.c.l.b16 %v1449
          %v2718 = vunpack.c.h.b16 %v1449
          %v2719 = vunpack.c.l.b16 %v1450
          %v2720 = vunpack.c.h.b16 %v1450
          %v2721 = vunpack.c.l.b16 %v1451
          %v2722 = vunpack.c.h.b16 %v1451
          %v2723 = vunpack.c.l.b16 %v1452
          %v2724 = vunpack.c.h.b16 %v1452
          %v2725 = vunpack.c.l.b16 %v1453
          %v2726 = vunpack.c.h.b16 %v1453
          %v2727 = vunpack.c.l.b16 %v1454
          %v2728 = vunpack.c.h.b16 %v1454
          %v2729 = vunpack.c.l.b16 %v1455
          %v2730 = vunpack.c.h.b16 %v1455
          %v2731 = vunpack.c.l.b16 %v1456
          %v2732 = vunpack.c.h.b16 %v1456
          %v2733 = vunpack.c.l.b16 %v1457
          %v2734 = vunpack.c.h.b16 %v1457
          %v2735 = vunpack.c.l.b16 %v1458
          %v2736 = vunpack.c.h.b16 %v1458
          %v2737 = vunpack.c.l.b16 %v1459
          %v2738 = vunpack.c.h.b16 %v1459
          %v2739 = vunpack.c.l.b16 %v1460
          %v2740 = vunpack.c.h.b16 %v1460
          %v2741 = vunpack.c.l.b16 %v1461
          %v2742 = vunpack.c.h.b16 %v1461
          %v2743 = vunpack.c.l.b16 %v1462
          %v2744 = vunpack.c.h.b16 %v1462
          %v2745 = vunpack.c.l.b16 %v1463
          %v2746 = vunpack.c.h.b16 %v1463
          %v2747 = vunpack.c.l.b16 %v1464
          %v2748 = vunpack.c.h.b16 %v1464
          %v2749 = vunpack.c.l.b16 %v1465
          %v2750 = vunpack.c.h.b16 %v1465
          %v2751 = vunpack.c.l.b16 %v1466
          %v2752 = vunpack.c.h.b16 %v1466
          %v2753 = vunpack.c.l.b16 %v1467
          %v2754 = vunpack.c.h.b16 %v1467
          %v2755 = vunpack.c.l.b16 %v1468
          %v2756 = vunpack.c.h.b16 %v1468
          %v2757 = vunpack.c.l.b16 %v1469
          %v2758 = vunpack.c.h.b16 %v1469
          %v2759 = vunpack.c.l.b16 %v1470
          %v2760 = vunpack.c.h.b16 %v1470
          %v2761 = vunpack.c.l.b16 %v1471
          %v2762 = vunpack.c.h.b16 %v1471
          %v2763 = vunpack.c.l.b16 %v1472
          %v2764 = vunpack.c.h.b16 %v1472
          %v2765 = vunpack.c.l.b16 %v1473
          %v2766 = vunpack.c.h.b16 %v1473
          %v2767 = vunpack.c.l.b16 %v1474
          %v2768 = vunpack.c.h.b16 %v1474
          %v2769 = vunpack.c.l.b16 %v1475
          %v2770 = vunpack.c.h.b16 %v1475
          %v2771 = vunpack.c.l.b16 %v1476
          %v2772 = vunpack.c.h.b16 %v1476
          %v2773 = vunpack.c.l.b16 %v1477
          %v2774 = vunpack.c.h.b16 %v1477
          %v2775 = vunpack.c.l.b16 %v1478
          %v2776 = vunpack.c.h.b16 %v1478
          %v2777 = vunpack.c.l.b16 %v1479
          %v2778 = vunpack.c.h.b16 %v1479
          %v2779 = vunpack.c.l.b16 %v1480
          %v2780 = vunpack.c.h.b16 %v1480
          %v2781 = vunpack.c.l.b16 %v1481
          %v2782 = vunpack.c.h.b16 %v1481
          %v2783 = vunpack.c.l.b16 %v1482
          %v2784 = vunpack.c.h.b16 %v1482
          %v2785 = vunpack.c.l.b16 %v1483
          %v2786 = vunpack.c.h.b16 %v1483
          %v2787 = vunpack.c.l.b16 %v1484
          %v2788 = vunpack.c.h.b16 %v1484
          %v2789 = vunpack.c.l.b16 %v1485
          %v2790 = vunpack.c.h.b16 %v1485
          %v2791 = vunpack.c.l.b16 %v1486
          %v2792 = vunpack.c.h.b16 %v1486
          %v2793 = vunpack.c.l.b16 %v1487
          %v2794 = vunpack.c.h.b16 %v1487
          %v2795 = vunpack.c.l.b16 %v1488
          %v2796 = vunpack.c.h.b16 %v1488
          %v2797 = vunpack.c.l.b16 %v1489
          %v2798 = vunpack.c.h.b16 %v1489
          %v2799 = vunpack.c.l.b16 %v1490
          %v2800 = vunpack.c.h.b16 %v1490
          %v2801 = vunpack.c.l.b16 %v1491
          %v2802 = vunpack.c.h.b16 %v1491
          %v2803 = vunpack.c.l.b16 %v1492
          %v2804 = vunpack.c.h.b16 %v1492
          %v2805 = vunpack.c.l.b16 %v1493
          %v2806 = vunpack.c.h.b16 %v1493
          %v2807 = vunpack.c.l.b16 %v1494
          %v2808 = vunpack.c.h.b16 %v1494
          %v2809 = vunpack.c.l.b16 %v1495
          %v2810 = vunpack.c.h.b16 %v1495
          %v2811 = vunpack.c.l.b16 %v1496
          %v2812 = vunpack.c.h.b16 %v1496
          %v2813 = vunpack.c.l.b16 %v1497
          %v2814 = vunpack.c.h.b16 %v1497
          %v2815 = vunpack.c.l.b16 %v1498
          %v2816 = vunpack.c.h.b16 %v1498
          %v2817 = vunpack.c.l.b16 %v1499
          %v2818 = vunpack.c.h.b16 %v1499
          %v2819 = vunpack.c.l.b16 %v1500
          %v2820 = vunpack.c.h.b16 %v1500
          %v2821 = vunpack.c.l.b16 %v1501
          %v2822 = vunpack.c.h.b16 %v1501
          %v2823 = vunpack.c.l.b16 %v1502
          %v2824 = vunpack.c.h.b16 %v1502
          %v2825 = vunpack.c.l.b16 %v1503
          %v2826 = vunpack.c.h.b16 %v1503
          %v2827 = vunpack.c.l.b16 %v1504
          %v2828 = vunpack.c.h.b16 %v1504
          %v2829 = vunpack.c.l.b16 %v1505
          %v2830 = vunpack.c.h.b16 %v1505
          %v2831 = vunpack.c.l.b16 %v1506
          %v2832 = vunpack.c.h.b16 %v1506
          %v2833 = vunpack.c.l.b16 %v1507
          %v2834 = vunpack.c.h.b16 %v1507
          %v2835 = vunpack.c.l.b16 %v1508
          %v2836 = vunpack.c.h.b16 %v1508
          %v2837 = vunpack.c.l.b16 %v1509
          %v2838 = vunpack.c.h.b16 %v1509
          %v2839 = vunpack.c.l.b16 %v1510
          %v2840 = vunpack.c.h.b16 %v1510
          %v2841 = vunpack.c.l.b16 %v1511
          %v2842 = vunpack.c.h.b16 %v1511
          %v2843 = vunpack.c.l.b16 %v1512
          %v2844 = vunpack.c.h.b16 %v1512
          %v2845 = vunpack.c.l.b16 %v1513
          %v2846 = vunpack.c.h.b16 %v1513
          %v2847 = vunpack.c.l.b16 %v1514
          %v2848 = vunpack.c.h.b16 %v1514
          %v2849 = vunpack.c.l.b16 %v1515
          %v2850 = vunpack.c.h.b16 %v1515
          %v2851 = vunpack.c.l.b16 %v1516
          %v2852 = vunpack.c.h.b16 %v1516
          %v2853 = vunpack.c.l.b16 %v1517
          %v2854 = vunpack.c.h.b16 %v1517
          %v2855 = vunpack.c.l.b16 %v1518
          %v2856 = vunpack.c.h.b16 %v1518
          %v2857 = vunpack.c.l.b16 %v1519
          %v2858 = vunpack.c.h.b16 %v1519
          %v2859 = vunpack.c.l.b16 %v1520
          %v2860 = vunpack.c.h.b16 %v1520
          %v2861 = vunpack.c.l.b16 %v1521
          %v2862 = vunpack.c.h.b16 %v1521
          %v2863 = vunpack.c.l.b16 %v1522
          %v2864 = vunpack.c.h.b16 %v1522
          %v2865 = vunpack.c.l.b16 %v1523
          %v2866 = vunpack.c.h.b16 %v1523
          %v2867 = vunpack.c.l.b16 %v1524
          %v2868 = vunpack.c.h.b16 %v1524
          %v2869 = vunpack.c.l.b16 %v1525
          %v2870 = vunpack.c.h.b16 %v1525
          %v2871 = vunpack.c.l.b16 %v1526
          %v2872 = vunpack.c.h.b16 %v1526
          %v2873 = vunpack.c.l.b16 %v1527
          %v2874 = vunpack.c.h.b16 %v1527
          %v2875 = vunpack.c.l.b16 %v1528
          %v2876 = vunpack.c.h.b16 %v1528
          %v2877 = vunpack.c.l.b16 %v1529
          %v2878 = vunpack.c.h.b16 %v1529
          %v2879 = vunpack.c.l.b16 %v1530
          %v2880 = vunpack.c.h.b16 %v1530
          %v2881 = vunpack.c.l.b16 %v1531
          %v2882 = vunpack.c.h.b16 %v1531
          %v2883 = vunpack.c.l.b16 %v1532
          %v2884 = vunpack.c.h.b16 %v1532
          %v2885 = vunpack.c.l.b16 %v1533
          %v2886 = vunpack.c.h.b16 %v1533
          %v2887 = vunpack.c.l.b16 %v1534
          %v2888 = vunpack.c.h.b16 %v1534
          %v2889 = vunpack.c.l.b16 %v1535
          %v2890 = vunpack.c.h.b16 %v1535
          %v2891 = vunpack.c.l.b16 %v1536
          %v2892 = vunpack.c.h.b16 %v1536
          %v2893 = vunpack.c.l.b16 %v1537
          %v2894 = vunpack.c.h.b16 %v1537
          %v2895 = vunpack.c.l.b16 %v1538
          %v2896 = vunpack.c.h.b16 %v1538
          %v2897 = vunpack.c.l.b16 %v1539
          %v2898 = vunpack.c.h.b16 %v1539
          %v2899 = vunpack.c.l.b16 %v1540
          %v2900 = vunpack.c.h.b16 %v1540
          %v2901 = vunpack.c.l.b16 %v1541
          %v2902 = vunpack.c.h.b16 %v1541
          %v2903 = vunpack.c.l.b16 %v1542
          %v2904 = vunpack.c.h.b16 %v1542
          %v2905 = vunpack.c.l.b16 %v1543
          %v2906 = vunpack.c.h.b16 %v1543
          %v2907 = vunpack.c.l.b16 %v1544
          %v2908 = vunpack.c.h.b16 %v1544
          %v2909 = vunpack.c.l.b16 %v1545
          %v2910 = vunpack.c.h.b16 %v1545
          %v2911 = vunpack.c.l.b16 %v1546
          %v2912 = vunpack.c.h.b16 %v1546
          %v2913 = vunpack.c.l.b16 %v1547
          %v2914 = vunpack.c.h.b16 %v1547
          %v2915 = vunpack.c.l.b16 %v1548
          %v2916 = vunpack.c.h.b16 %v1548
          %v2917 = vunpack.c.l.b16 %v1549
          %v2918 = vunpack.c.h.b16 %v1549
          %v2919 = vunpack.c.l.b16 %v1550
          %v2920 = vunpack.c.h.b16 %v1550
          %v2921 = vunpack.c.l.b16 %v1551
          %v2922 = vunpack.c.h.b16 %v1551
          %v2923 = vunpack.c.l.b16 %v1552
          %v2924 = vunpack.c.h.b16 %v1552
          %v2925 = vunpack.c.l.b16 %v1553
          %v2926 = vunpack.c.h.b16 %v1553
          %v2927 = vunpack.c.l.b16 %v1554
          %v2928 = vunpack.c.h.b16 %v1554
          %v2929 = vunpack.c.l.b16 %v1555
          %v2930 = vunpack.c.h.b16 %v1555
          %v2931 = vunpack.c.l.b16 %v1556
          %v2932 = vunpack.c.h.b16 %v1556
          %v2933 = vunpack.c.l.b16 %v1557
          %v2934 = vunpack.c.h.b16 %v1557
          %v2935 = vunpack.c.l.b16 %v1558
          %v2936 = vunpack.c.h.b16 %v1558
          %v2937 = vunpack.c.l.b16 %v1559
          %v2938 = vunpack.c.h.b16 %v1559
          %v2939 = vunpack.c.l.b16 %v1560
          %v2940 = vunpack.c.h.b16 %v1560
          %v2941 = vunpack.c.l.b16 %v1561
          %v2942 = vunpack.c.h.b16 %v1561
          %v2943 = vunpack.c.l.b16 %v1562
          %v2944 = vunpack.c.h.b16 %v1562
          %v2945 = vunpack.c.l.b16 %v1563
          %v2946 = vunpack.c.h.b16 %v1563
          %v2947 = vunpack.c.l.b16 %v1564
          %v2948 = vunpack.c.h.b16 %v1564
          %v2949 = vunpack.c.l.b16 %v1565
          %v2950 = vunpack.c.h.b16 %v1565
          %v2951 = vunpack.c.l.b16 %v1566
          %v2952 = vunpack.c.h.b16 %v1566
          %v2953 = vunpack.c.l.b16 %v1567
          %v2954 = vunpack.c.h.b16 %v1567
          %v2955 = vunpack.c.l.b16 %v1568
          %v2956 = vunpack.c.h.b16 %v1568
          %v2957 = vunpack.c.l.b16 %v1569
          %v2958 = vunpack.c.h.b16 %v1569
          %v2959 = vunpack.c.l.b16 %v1570
          %v2960 = vunpack.c.h.b16 %v1570
          %v2961 = vunpack.c.l.b16 %v1571
          %v2962 = vunpack.c.h.b16 %v1571
          %v2963 = vunpack.c.l.b16 %v1572
          %v2964 = vunpack.c.h.b16 %v1572
          %v2965 = vunpack.c.l.b16 %v1573
          %v2966 = vunpack.c.h.b16 %v1573
          %v2967 = vunpack.c.l.b16 %v1574
          %v2968 = vunpack.c.h.b16 %v1574
          %v2969 = vunpack.c.l.b16 %v1575
          %v2970 = vunpack.c.h.b16 %v1575
          %v2971 = vunpack.c.l.b16 %v1576
          %v2972 = vunpack.c.h.b16 %v1576
          %v2973 = vunpack.c.l.b16 %v1577
          %v2974 = vunpack.c.h.b16 %v1577
          %v2975 = vunpack.c.l.b16 %v1578
          %v2976 = vunpack.c.h.b16 %v1578
          %v2977 = vunpack.c.l.b16 %v1579
          %v2978 = vunpack.c.h.b16 %v1579
          %v2979 = vunpack.c.l.b16 %v1580
          %v2980 = vunpack.c.h.b16 %v1580
          %v2981 = vunpack.c.l.b16 %v1581
          %v2982 = vunpack.c.h.b16 %v1581
          %v2983 = vunpack.c.l.b16 %v1582
          %v2984 = vunpack.c.h.b16 %v1582
          %v2985 = vunpack.c.l.b16 %v1583
          %v2986 = vunpack.c.h.b16 %v1583
          %v2987 = vunpack.c.l.b16 %v1584
          %v2988 = vunpack.c.h.b16 %v1584
          %v2989 = vunpack.c.l.b16 %v1585
          %v2990 = vunpack.c.h.b16 %v1585
          %v2991 = vunpack.c.l.b16 %v1586
          %v2992 = vunpack.c.h.b16 %v1586
          %v2993 = vunpack.c.l.b16 %v1587
          %v2994 = vunpack.c.h.b16 %v1587
          %v2995 = vunpack.c.l.b16 %v1588
          %v2996 = vunpack.c.h.b16 %v1588
          %v2997 = vunpack.c.l.b16 %v1589
          %v2998 = vunpack.c.h.b16 %v1589
          %v2999 = vunpack.c.l.b16 %v1590
          %v3000 = vunpack.c.h.b16 %v1590
          %v3001 = vunpack.c.l.b16 %v1591
          %v3002 = vunpack.c.h.b16 %v1591
          %v3003 = vunpack.c.l.b16 %v1592
          %v3004 = vunpack.c.h.b16 %v1592
          %v3005 = vunpack.c.l.b16 %v1593
          %v3006 = vunpack.c.h.b16 %v1593
          %v3007 = vunpack.c.l.b16 %v1594
          %v3008 = vunpack.c.h.b16 %v1594
          %v3009 = vunpack.c.l.b16 %v1595
          %v3010 = vunpack.c.h.b16 %v1595
          %v3011 = vunpack.c.l.b16 %v1596
          %v3012 = vunpack.c.h.b16 %v1596
          %v3013 = vunpack.c.l.b16 %v1597
          %v3014 = vunpack.c.h.b16 %v1597
          %v3015 = vunpack.c.l.b16 %v1598
          %v3016 = vunpack.c.h.b16 %v1598
          %v3017 = vunpack.c.l.b16 %v1599
          %v3018 = vunpack.c.h.b16 %v1599
          %v3019 = vunpack.c.l.b16 %v1600
          %v3020 = vunpack.c.h.b16 %v1600
          %v3021 = vunpack.c.l.b16 %v1601
          %v3022 = vunpack.c.h.b16 %v1601
          %v3023 = vunpack.c.l.b16 %v1602
          %v3024 = vunpack.c.h.b16 %v1602
          %v3025 = vunpack.c.l.b16 %v1603
          %v3026 = vunpack.c.h.b16 %v1603
          %v3027 = vunpack.c.l.b16 %v1604
          %v3028 = vunpack.c.h.b16 %v1604
          %v3029 = vunpack.c.l.b16 %v1605
          %v3030 = vunpack.c.h.b16 %v1605
          %v3031 = vunpack.c.l.b16 %v1606
          %v3032 = vunpack.c.h.b16 %v1606
          %v3033 = vunpack.c.l.b16 %v1607
          %v3034 = vunpack.c.h.b16 %v1607
          %v3035 = vunpack.c.l.b16 %v1608
          %v3036 = vunpack.c.h.b16 %v1608
          %v3037 = vunpack.c.l.b16 %v1609
          %v3038 = vunpack.c.h.b16 %v1609
          %v3039 = vunpack.c.l.b16 %v1610
          %v3040 = vunpack.c.h.b16 %v1610
          %v3041 = vunpack.c.l.b16 %v1611
          %v3042 = vunpack.c.h.b16 %v1611
          %v3043 = vunpack.c.l.b16 %v1612
          %v3044 = vunpack.c.h.b16 %v1612
          %v3045 = vunpack.c.l.b16 %v1613
          %v3046 = vunpack.c.h.b16 %v1613
          %v3047 = vunpack.c.l.b16 %v1614
          %v3048 = vunpack.c.h.b16 %v1614
          %v3049 = vunpack.c.l.b16 %v1615
          %v3050 = vunpack.c.h.b16 %v1615
          %v3051 = vunpack.c.l.b16 %v1616
          %v3052 = vunpack.c.h.b16 %v1616
          %v3053 = vunpack.c.l.b16 %v1617
          %v3054 = vunpack.c.h.b16 %v1617
          %v3055 = vunpack.c.l.b16 %v1618
          %v3056 = vunpack.c.h.b16 %v1618
          %v3057 = vunpack.c.l.b16 %v1619
          %v3058 = vunpack.c.h.b16 %v1619
          %v3059 = vunpack.c.l.b16 %v1620
          %v3060 = vunpack.c.h.b16 %v1620
          %v3061 = vunpack.c.l.b16 %v1621
          %v3062 = vunpack.c.h.b16 %v1621
          %v3063 = vunpack.c.l.b16 %v1622
          %v3064 = vunpack.c.h.b16 %v1622
          %v3065 = vunpack.c.l.b16 %v1623
          %v3066 = vunpack.c.h.b16 %v1623
          %v3067 = vunpack.c.l.b16 %v1624
          %v3068 = vunpack.c.h.b16 %v1624
          %v3069 = vunpack.c.l.b16 %v1625
          %v3070 = vunpack.c.h.b16 %v1625
          %v3071 = vunpack.c.l.b16 %v1626
          %v3072 = vunpack.c.h.b16 %v1626
          %v3073 = vunpack.c.l.b16 %v1627
          %v3074 = vunpack.c.h.b16 %v1627
          %v3075 = vunpack.c.l.b16 %v1628
          %v3076 = vunpack.c.h.b16 %v1628
          %v3077 = vunpack.c.l.b16 %v1629
          %v3078 = vunpack.c.h.b16 %v1629
          %v3079 = vunpack.c.l.b16 %v1630
          %v3080 = vunpack.c.h.b16 %v1630
          %v3081 = vunpack.c.l.b16 %v1631
          %v3082 = vunpack.c.h.b16 %v1631
          %v3083 = vunpack.c.l.b16 %v1632
          %v3084 = vunpack.c.h.b16 %v1632
          %v3085 = vunpack.c.l.b16 %v1633
          %v3086 = vunpack.c.h.b16 %v1633
          %v3087 = vunpack.c.l.b16 %v1634
          %v3088 = vunpack.c.h.b16 %v1634
          %v3089 = vunpack.c.l.b16 %v1635
          %v3090 = vunpack.c.h.b16 %v1635
          %v3091 = vunpack.c.l.b16 %v1636
          %v3092 = vunpack.c.h.b16 %v1636
          %v3093 = vunpack.c.l.b16 %v1637
          %v3094 = vunpack.c.h.b16 %v1637
          %v3095 = vunpack.c.l.b16 %v1638
          %v3096 = vunpack.c.h.b16 %v1638
          %v3097 = vunpack.c.l.b16 %v1639
          %v3098 = vunpack.c.h.b16 %v1639
          %v3099 = vunpack.c.l.b16 %v1640
          %v3100 = vunpack.c.h.b16 %v1640
          %v3101 = vunpack.c.l.b16 %v1641
          %v3102 = vunpack.c.h.b16 %v1641
          %v3103 = vunpack.c.l.b16 %v1642
          %v3104 = vunpack.c.h.b16 %v1642
          %v3105 = vunpack.c.l.b16 %v1643
          %v3106 = vunpack.c.h.b16 %v1643
          %v3107 = vunpack.c.l.b16 %v1644
          %v3108 = vunpack.c.h.b16 %v1644
          %v3109 = vunpack.c.l.b16 %v1645
          %v3110 = vunpack.c.h.b16 %v1645
          %v3111 = vunpack.c.l.b16 %v1646
          %v3112 = vunpack.c.h.b16 %v1646
          %v3113 = vunpack.c.l.b16 %v1647
          %v3114 = vunpack.c.h.b16 %v1647
          %v3115 = vunpack.c.l.b16 %v1648
          %v3116 = vunpack.c.h.b16 %v1648
          %v3117 = vunpack.c.l.b16 %v1649
          %v3118 = vunpack.c.h.b16 %v1649
          %v3119 = vunpack.c.l.b16 %v1650
          %v3120 = vunpack.c.h.b16 %v1650
          %v3121 = vunpack.c.l.b16 %v1651
          %v3122 = vunpack.c.h.b16 %v1651
          %v3123 = vunpack.c.l.b16 %v1652
          %v3124 = vunpack.c.h.b16 %v1652
          %v3125 = vunpack.c.l.b16 %v1653
          %v3126 = vunpack.c.h.b16 %v1653
          %v3127 = vunpack.c.l.b16 %v1654
          %v3128 = vunpack.c.h.b16 %v1654
          %v3129 = vunpack.c.l.b16 %v1655
          %v3130 = vunpack.c.h.b16 %v1655
          %v3131 = vunpack.c.l.b16 %v1656
          %v3132 = vunpack.c.h.b16 %v1656
          %v3133 = vunpack.c.l.b16 %v1657
          %v3134 = vunpack.c.h.b16 %v1657
          %v3135 = vunpack.c.l.b16 %v1658
          %v3136 = vunpack.c.h.b16 %v1658
          %v3137 = vunpack.c.l.b16 %v1659
          %v3138 = vunpack.c.h.b16 %v1659
          %v3139 = vunpack.c.l.b16 %v1660
          %v3140 = vunpack.c.h.b16 %v1660
          %v3141 = vunpack.c.l.b16 %v1661
          %v3142 = vunpack.c.h.b16 %v1661
          %v3143 = vunpack.c.l.b16 %v1662
          %v3144 = vunpack.c.h.b16 %v1662
          %v3145 = vunpack.c.l.b16 %v1663
          %v3146 = vunpack.c.h.b16 %v1663
          %v3147 = vunpack.c.l.b16 %v1664
          %v3148 = vunpack.c.h.b16 %v1664
          %v3149 = vunpack.c.l.b16 %v1665
          %v3150 = vunpack.c.h.b16 %v1665
          %v3151 = vunpack.c.l.b16 %v1666
          %v3152 = vunpack.c.h.b16 %v1666
          %v3153 = vunpack.c.l.b16 %v1667
          %v3154 = vunpack.c.h.b16 %v1667
          %v3155 = vunpack.c.l.b16 %v1668
          %v3156 = vunpack.c.h.b16 %v1668
          %v3157 = vunpack.c.l.b16 %v1669
          %v3158 = vunpack.c.h.b16 %v1669
          %v3159 = vunpack.c.l.b16 %v1670
          %v3160 = vunpack.c.h.b16 %v1670
          %v3161 = vunpack.c.l.b16 %v1671
          %v3162 = vunpack.c.h.b16 %v1671
          %v3163 = vunpack.c.l.b16 %v1672
          %v3164 = vunpack.c.h.b16 %v1672
          %v3165 = vunpack.c.l.b16 %v1673
          %v3166 = vunpack.c.h.b16 %v1673
          %v3167 = vunpack.c.l.b16 %v1674
          %v3168 = vunpack.c.h.b16 %v1674
          %v3169 = vunpack.c.l.b16 %v1675
          %v3170 = vunpack.c.h.b16 %v1675
          %v3171 = vunpack.c.l.b16 %v1676
          %v3172 = vunpack.c.h.b16 %v1676
          %v3173 = vunpack.c.l.b16 %v1677
          %v3174 = vunpack.c.h.b16 %v1677
          %v3175 = vunpack.c.l.b16 %v1678
          %v3176 = vunpack.c.h.b16 %v1678
          %v3177 = vunpack.c.l.b16 %v1679
          %v3178 = vunpack.c.h.b16 %v1679
          %v3179 = vunpack.c.l.b16 %v1680
          %v3180 = vunpack.c.h.b16 %v1680
          %v3181 = vunpack.c.l.b16 %v1681
          %v3182 = vunpack.c.h.b16 %v1681
          %v3183 = vunpack.c.l.b16 %v1682
          %v3184 = vunpack.c.h.b16 %v1682
          %v3185 = vunpack.c.l.b16 %v1683
          %v3186 = vunpack.c.h.b16 %v1683
          %v3187 = vunpack.c.l.b16 %v1684
          %v3188 = vunpack.c.h.b16 %v1684
          %v3189 = vunpack.c.l.b16 %v1685
          %v3190 = vunpack.c.h.b16 %v1685
          %v3191 = vunpack.c.l.b16 %v1686
          %v3192 = vunpack.c.h.b16 %v1686
          %v3193 = vunpack.c.l.b16 %v1687
          %v3194 = vunpack.c.h.b16 %v1687
          %v3195 = vunpack.c.l.b16 %v1688
          %v3196 = vunpack.c.h.b16 %v1688
          %v3197 = vunpack.c.l.b16 %v1689
          %v3198 = vunpack.c.h.b16 %v1689
          %v3199 = vunpack.c.l.b16 %v1690
          %v3200 = vunpack.c.h.b16 %v1690
          %v3201 = vunpack.c.l.b16 %v1691
          %v3202 = vunpack.c.h.b16 %v1691
          %v3203 = vunpack.c.l.b16 %v1692
          %v3204 = vunpack.c.h.b16 %v1692
          %v3205 = vunpack.c.l.b16 %v1693
          %v3206 = vunpack.c.h.b16 %v1693
          %v3207 = vunpack.c.l.b16 %v1694
          %v3208 = vunpack.c.h.b16 %v1694
          %v3209 = vunpack.c.l.b16 %v1695
          %v3210 = vunpack.c.h.b16 %v1695
          %v3211 = vunpack.c.l.b16 %v1696
          %v3212 = vunpack.c.h.b16 %v1696
          %v3213 = vunpack.c.l.b16 %v1697
          %v3214 = vunpack.c.h.b16 %v1697
          %v3215 = vunpack.c.l.b16 %v1698
          %v3216 = vunpack.c.h.b16 %v1698
          %v3217 = vunpack.c.l.b16 %v1699
          %v3218 = vunpack.c.h.b16 %v1699
          %v3219 = vunpack.c.l.b16 %v1700
          %v3220 = vunpack.c.h.b16 %v1700
          %v3221 = vunpack.c.l.b16 %v1701
          %v3222 = vunpack.c.h.b16 %v1701
          %v3223 = vunpack.c.l.b16 %v1702
          %v3224 = vunpack.c.h.b16 %v1702
          %v3225 = vunpack.c.l.b16 %v1703
          %v3226 = vunpack.c.h.b16 %v1703
          %v3227 = vunpack.c.l.b16 %v1704
          %v3228 = vunpack.c.h.b16 %v1704
          %v3229 = vunpack.c.l.b16 %v1705
          %v3230 = vunpack.c.h.b16 %v1705
          %v3231 = vunpack.c.l.b16 %v1706
          %v3232 = vunpack.c.h.b16 %v1706
          %v3233 = vunpack.c.l.b16 %v1707
          %v3234 = vunpack.c.h.b16 %v1707
          %v3235 = vunpack.c.l.b16 %v1708
          %v3236 = vunpack.c.h.b16 %v1708
          %v3237 = vunpack.c.l.b16 %v1709
          %v3238 = vunpack.c.h.b16 %v1709
          %v3239 = vunpack.c.l.b16 %v1710
          %v3240 = vunpack.c.h.b16 %v1710
          %v3241 = vunpack.c.l.b16 %v1711
          %v3242 = vunpack.c.h.b16 %v1711
          %v3243 = vunpack.c.l.b16 %v1712
          %v3244 = vunpack.c.h.b16 %v1712
          %v3245 = vunpack.c.l.b16 %v1713
          %v3246 = vunpack.c.h.b16 %v1713
          %v3247 = vunpack.c.l.b16 %v1714
          %v3248 = vunpack.c.h.b16 %v1714
          %v3249 = vunpack.c.l.b16 %v1715
          %v3250 = vunpack.c.h.b16 %v1715
          %v3251 = vunpack.c.l.b16 %v1716
          %v3252 = vunpack.c.h.b16 %v1716
          %v3253 = vunpack.c.l.b16 %v1717
          %v3254 = vunpack.c.h.b16 %v1717
          %v3255 = vunpack.c.l.b16 %v1718
          %v3256 = vunpack.c.h.b16 %v1718
          %v3257 = vunpack.c.l.b16 %v1719
          %v3258 = vunpack.c.h.b16 %v1719
          %v3259 = vunpack.c.l.b16 %v1720
          %v3260 = vunpack.c.h.b16 %v1720
          %v3261 = vunpack.c.l.b16 %v1721
          %v3262 = vunpack.c.h.b16 %v1721
          %v3263 = vunpack.c.l.b16 %v1722
          %v3264 = vunpack.c.h.b16 %v1722
          %v3265 = vunpack.c.l.b16 %v1723
          %v3266 = vunpack.c.h.b16 %v1723
          %v3267 = vunpack.c.l.b16 %v1724
          %v3268 = vunpack.c.h.b16 %v1724
          %v3269 = vunpack.c.l.b16 %v1725
          %v3270 = vunpack.c.h.b16 %v1725
          %v3271 = vunpack.c.l.b16 %v1726
          %v3272 = vunpack.c.h.b16 %v1726
          %v3273 = vunpack.c.l.b16 %v1727
          %v3274 = vunpack.c.h.b16 %v1727
          %v3275 = vunpack.c.l.b16 %v1728
          %v3276 = vunpack.c.h.b16 %v1728
          %v3277 = vunpack.c.l.b16 %v1729
          %v3278 = vunpack.c.h.b16 %v1729
          %v3279 = vunpack.c.l.b16 %v1730
          %v3280 = vunpack.c.h.b16 %v1730
          %v3281 = vunpack.c.l.b16 %v1731
          %v3282 = vunpack.c.h.b16 %v1731
          %v3283 = vunpack.c.l.b16 %v1732
          %v3284 = vunpack.c.h.b16 %v1732
          %v3285 = vunpack.c.l.b16 %v1733
          %v3286 = vunpack.c.h.b16 %v1733
          %v3287 = vunpack.c.l.b16 %v1734
          %v3288 = vunpack.c.h.b16 %v1734
          %v3289 = vunpack.c.l.b16 %v1735
          %v3290 = vunpack.c.h.b16 %v1735
          %v3291 = vunpack.c.l.b16 %v1736
          %v3292 = vunpack.c.h.b16 %v1736
          %v3293 = vunpack.c.l.b16 %v1737
          %v3294 = vunpack.c.h.b16 %v1737
          %v3295 = vunpack.c.l.b16 %v1738
          %v3296 = vunpack.c.h.b16 %v1738
          %v3297 = vunpack.c.l.b16 %v1739
          %v3298 = vunpack.c.h.b16 %v1739
          %v3299 = vunpack.c.l.b16 %v1740
          %v3300 = vunpack.c.h.b16 %v1740
          %v3301 = vunpack.c.l.b16 %v1741
          %v3302 = vunpack.c.h.b16 %v1741
          %v3303 = vunpack.c.l.b16 %v1742
          %v3304 = vunpack.c.h.b16 %v1742
          %v3305 = vunpack.c.l.b16 %v1743
          %v3306 = vunpack.c.h.b16 %v1743
          %v3307 = vunpack.c.l.b16 %v1744
          %v3308 = vunpack.c.h.b16 %v1744
          %v3309 = vunpack.c.l.b16 %v1745
          %v3310 = vunpack.c.h.b16 %v1745
          %v3311 = vunpack.c.l.b16 %v1746
          %v3312 = vunpack.c.h.b16 %v1746
          %v3313 = vunpack.c.l.b16 %v1747
          %v3314 = vunpack.c.h.b16 %v1747
          %v3315 = vunpack.c.l.b16 %v1748
          %v3316 = vunpack.c.h.b16 %v1748
          %v3317 = vunpack.c.l.b16 %v1749
          %v3318 = vunpack.c.h.b16 %v1749
          %v3319 = vunpack.c.l.b16 %v1750
          %v3320 = vunpack.c.h.b16 %v1750
          %v3321 = vunpack.c.l.b16 %v1751
          %v3322 = vunpack.c.h.b16 %v1751
          %v3323 = vunpack.c.l.b16 %v1752
          %v3324 = vunpack.c.h.b16 %v1752
          %v3325 = vunpack.c.l.b16 %v1753
          %v3326 = vunpack.c.h.b16 %v1753
          %v3327 = vunpack.c.l.b16 %v1754
          %v3328 = vunpack.c.h.b16 %v1754
          %v3329 = vunpack.c.l.b16 %v1755
          %v3330 = vunpack.c.h.b16 %v1755
          %v3331 = vunpack.c.l.b16 %v1756
          %v3332 = vunpack.c.h.b16 %v1756
          %v3333 = vunpack.c.l.b16 %v1757
          %v3334 = vunpack.c.h.b16 %v1757
          %v3335 = vunpack.c.l.b16 %v1758
          %v3336 = vunpack.c.h.b16 %v1758
          %v3337 = vpack.c.b16 %v2321, %v2313
          %v3338 = vpack.c.b16 %v2322, %v2314
          %v3339 = vpack.c.b16 %v2323, %v2315
          %v3340 = vpack.c.b16 %v2324, %v2316
          %v3341 = vpack.c.b16 %v2325, %v2317
          %v3342 = vpack.c.b16 %v2326, %v2318
          %v3343 = vpack.c.b16 %v2327, %v2319
          %v3344 = vpack.c.b16 %v2328, %v2320
          %v3345 = vpack.c.b16 %v2337, %v2329
          %v3346 = vpack.c.b16 %v2338, %v2330
          %v3347 = vpack.c.b16 %v2339, %v2331
          %v3348 = vpack.c.b16 %v2340, %v2332
          %v3349 = vpack.c.b16 %v2341, %v2333
          %v3350 = vpack.c.b16 %v2342, %v2334
          %v3351 = vpack.c.b16 %v2343, %v2335
          %v3352 = vpack.c.b16 %v2344, %v2336
          %v3353 = vpack.c.b16 %v2353, %v2345
          %v3354 = vpack.c.b16 %v2354, %v2346
          %v3355 = vpack.c.b16 %v2355, %v2347
          %v3356 = vpack.c.b16 %v2356, %v2348
          %v3357 = vpack.c.b16 %v2357, %v2349
          %v3358 = vpack.c.b16 %v2358, %v2350
          %v3359 = vpack.c.b16 %v2359, %v2351
          %v3360 = vpack.c.b16 %v2360, %v2352
          %v3361 = vpack.c.b16 %v2369, %v2361
          %v3362 = vpack.c.b16 %v2370, %v2362
          %v3363 = vpack.c.b16 %v2371, %v2363
          %v3364 = vpack.c.b16 %v2372, %v2364
          %v3365 = vpack.c.b16 %v2373, %v2365
          %v3366 = vpack.c.b16 %v2374, %v2366
          %v3367 = vpack.c.b16 %v2375, %v2367
          %v3368 = vpack.c.b16 %v2376, %v2368
          %v3369 = vpack.c.b16 %v2385, %v2377
          %v3370 = vpack.c.b16 %v2386, %v2378
          %v3371 = vpack.c.b16 %v2387, %v2379
          %v3372 = vpack.c.b16 %v2388, %v2380
          %v3373 = vpack.c.b16 %v2389, %v2381
          %v3374 = vpack.c.b16 %v2390, %v2382
          %v3375 = vpack.c.b16 %v2391, %v2383
          %v3376 = vpack.c.b16 %v2392, %v2384
          %v3377 = vpack.c.b16 %v2401, %v2393
          %v3378 = vpack.c.b16 %v2402, %v2394
          %v3379 = vpack.c.b16 %v2403, %v2395
          %v3380 = vpack.c.b16 %v2404, %v2396
          %v3381 = vpack.c.b16 %v2405, %v2397
          %v3382 = vpack.c.b16 %v2406, %v2398
          %v3383 = vpack.c.b16 %v2407, %v2399
          %v3384 = vpack.c.b16 %v2408, %v2400
          %v3385 = vpack.c.b16 %v2417, %v2409
          %v3386 = vpack.c.b16 %v2418, %v2410
          %v3387 = vpack.c.b16 %v2419, %v2411
          %v3388 = vpack.c.b16 %v2420, %v2412
          %v3389 = vpack.c.b16 %v2421, %v2413
          %v3390 = vpack.c.b16 %v2422, %v2414
          %v3391 = vpack.c.b16 %v2423, %v2415
          %v3392 = vpack.c.b16 %v2424, %v2416
          %v3393 = vpack.c.b16 %v2433, %v2425
          %v3394 = vpack.c.b16 %v2434, %v2426
          %v3395 = vpack.c.b16 %v2435, %v2427
          %v3396 = vpack.c.b16 %v2436, %v2428
          %v3397 = vpack.c.b16 %v2437, %v2429
          %v3398 = vpack.c.b16 %v2438, %v2430
          %v3399 = vpack.c.b16 %v2439, %v2431
          %v3400 = vpack.c.b16 %v2440, %v2432
          %v3401 = vpack.c.b16 %v2449, %v2441
          %v3402 = vpack.c.b16 %v2450, %v2442
          %v3403 = vpack.c.b16 %v2451, %v2443
          %v3404 = vpack.c.b16 %v2452, %v2444
          %v3405 = vpack.c.b16 %v2453, %v2445
          %v3406 = vpack.c.b16 %v2454, %v2446
          %v3407 = vpack.c.b16 %v2455, %v2447
          %v3408 = vpack.c.b16 %v2456, %v2448
          %v3409 = vpack.c.b16 %v2465, %v2457
          %v3410 = vpack.c.b16 %v2466, %v2458
          %v3411 = vpack.c.b16 %v2467, %v2459
          %v3412 = vpack.c.b16 %v2468, %v2460
          %v3413 = vpack.c.b16 %v2469, %v2461
          %v3414 = vpack.c.b16 %v2470, %v2462
          %v3415 = vpack.c.b16 %v2471, %v2463
          %v3416 = vpack.c.b16 %v2472, %v2464
          %v3417 = vpack.c.b16 %v2481, %v2473
          %v3418 = vpack.c.b16 %v2482, %v2474
          %v3419 = vpack.c.b16 %v2483, %v2475
          %v3420 = vpack.c.b16 %v2484, %v2476
          %v3421 = vpack.c.b16 %v2485, %v2477
          %v3422 = vpack.c.b16 %v2486, %v2478
          %v3423 = vpack.c.b16 %v2487, %v2479
          %v3424 = vpack.c.b16 %v2488, %v2480
          %v3425 = vpack.c.b16 %v2497, %v2489
          %v3426 = vpack.c.b16 %v2498, %v2490
          %v3427 = vpack.c.b16 %v2499, %v2491
          %v3428 = vpack.c.b16 %v2500, %v2492
          %v3429 = vpack.c.b16 %v2501, %v2493
          %v3430 = vpack.c.b16 %v2502, %v2494
          %v3431 = vpack.c.b16 %v2503, %v2495
          %v3432 = vpack.c.b16 %v2504, %v2496
          %v3433 = vpack.c.b16 %v2513, %v2505
          %v3434 = vpack.c.b16 %v2514, %v2506
          %v3435 = vpack.c.b16 %v2515, %v2507
          %v3436 = vpack.c.b16 %v2516, %v2508
          %v3437 = vpack.c.b16 %v2517, %v2509
          %v3438 = vpack.c.b16 %v2518, %v2510
          %v3439 = vpack.c.b16 %v2519, %v2511
          %v3440 = vpack.c.b16 %v2520, %v2512
          %v3441 = vpack.c.b16 %v2529, %v2521
          %v3442 = vpack.c.b16 %v2530, %v2522
          %v3443 = vpack.c.b16 %v2531, %v2523
          %v3444 = vpack.c.b16 %v2532, %v2524
          %v3445 = vpack.c.b16 %v2533, %v2525
          %v3446 = vpack.c.b16 %v2534, %v2526
          %v3447 = vpack.c.b16 %v2535, %v2527
          %v3448 = vpack.c.b16 %v2536, %v2528
          %v3449 = vpack.c.b16 %v2545, %v2537
          %v3450 = vpack.c.b16 %v2546, %v2538
          %v3451 = vpack.c.b16 %v2547, %v2539
          %v3452 = vpack.c.b16 %v2548, %v2540
          %v3453 = vpack.c.b16 %v2549, %v2541
          %v3454 = vpack.c.b16 %v2550, %v2542
          %v3455 = vpack.c.b16 %v2551, %v2543
          %v3456 = vpack.c.b16 %v2552, %v2544
          %v3457 = vpack.c.b16 %v2561, %v2553
          %v3458 = vpack.c.b16 %v2562, %v2554
          %v3459 = vpack.c.b16 %v2563, %v2555
          %v3460 = vpack.c.b16 %v2564, %v2556
          %v3461 = vpack.c.b16 %v2565, %v2557
          %v3462 = vpack.c.b16 %v2566, %v2558
          %v3463 = vpack.c.b16 %v2567, %v2559
          %v3464 = vpack.c.b16 %v2568, %v2560
          %v3465 = vpack.c.b16 %v2577, %v2569
          %v3466 = vpack.c.b16 %v2578, %v2570
          %v3467 = vpack.c.b16 %v2579, %v2571
          %v3468 = vpack.c.b16 %v2580, %v2572
          %v3469 = vpack.c.b16 %v2581, %v2573
          %v3470 = vpack.c.b16 %v2582, %v2574
          %v3471 = vpack.c.b16 %v2583, %v2575
          %v3472 = vpack.c.b16 %v2584, %v2576
          %v3473 = vpack.c.b16 %v2593, %v2585
          %v3474 = vpack.c.b16 %v2594, %v2586
          %v3475 = vpack.c.b16 %v2595, %v2587
          %v3476 = vpack.c.b16 %v2596, %v2588
          %v3477 = vpack.c.b16 %v2597, %v2589
          %v3478 = vpack.c.b16 %v2598, %v2590
          %v3479 = vpack.c.b16 %v2599, %v2591
          %v3480 = vpack.c.b16 %v2600, %v2592
          %v3481 = vpack.c.b16 %v2609, %v2601
          %v3482 = vpack.c.b16 %v2610, %v2602
          %v3483 = vpack.c.b16 %v2611, %v2603
          %v3484 = vpack.c.b16 %v2612, %v2604
          %v3485 = vpack.c.b16 %v2613, %v2605
          %v3486 = vpack.c.b16 %v2614, %v2606
          %v3487 = vpack.c.b16 %v2615, %v2607
          %v3488 = vpack.c.b16 %v2616, %v2608
          %v3489 = vpack.c.b16 %v2625, %v2617
          %v3490 = vpack.c.b16 %v2626, %v2618
          %v3491 = vpack.c.b16 %v2627, %v2619
          %v3492 = vpack.c.b16 %v2628, %v2620
          %v3493 = vpack.c.b16 %v2629, %v2621
          %v3494 = vpack.c.b16 %v2630, %v2622
          %v3495 = vpack.c.b16 %v2631, %v2623
          %v3496 = vpack.c.b16 %v2632, %v2624
          %v3497 = vpack.c.b16 %v2641, %v2633
          %v3498 = vpack.c.b16 %v2642, %v2634
          %v3499 = vpack.c.b16 %v2643, %v2635
          %v3500 = vpack.c.b16 %v2644, %v2636
          %v3501 = vpack.c.b16 %v2645, %v2637
          %v3502 = vpack.c.b16 %v2646, %v2638
          %v3503 = vpack.c.b16 %v2647, %v2639
          %v3504 = vpack.c.b16 %v2648, %v2640
          %v3505 = vpack.c.b16 %v2657, %v2649
          %v3506 = vpack.c.b16 %v2658, %v2650
          %v3507 = vpack.c.b16 %v2659, %v2651
          %v3508 = vpack.c.b16 %v2660, %v2652
          %v3509 = vpack.c.b16 %v2661, %v2653
          %v3510 = vpack.c.b16 %v2662, %v2654
          %v3511 = vpack.c.b16 %v2663, %v2655
          %v3512 = vpack.c.b16 %v2664, %v2656
          %v3513 = vpack.c.b16 %v2673, %v2665
          %v3514 = vpack.c.b16 %v2674, %v2666
          %v3515 = vpack.c.b16 %v2675, %v2667
          %v3516 = vpack.c.b16 %v2676, %v2668
          %v3517 = vpack.c.b16 %v2677, %v2669
          %v3518 = vpack.c.b16 %v2678, %v2670
          %v3519 = vpack.c.b16 %v2679, %v2671
          %v3520 = vpack.c.b16 %v2680, %v2672
          %v3521 = vpack.c.b16 %v2689, %v2681
          %v3522 = vpack.c.b16 %v2690, %v2682
          %v3523 = vpack.c.b16 %v2691, %v2683
          %v3524 = vpack.c.b16 %v2692, %v2684
          %v3525 = vpack.c.b16 %v2693, %v2685
          %v3526 = vpack.c.b16 %v2694, %v2686
          %v3527 = vpack.c.b16 %v2695, %v2687
          %v3528 = vpack.c.b16 %v2696, %v2688
          %v3529 = vpack.c.b16 %v2705, %v2697
          %v3530 = vpack.c.b16 %v2706, %v2698
          %v3531 = vpack.c.b16 %v2707, %v2699
          %v3532 = vpack.c.b16 %v2708, %v2700
          %v3533 = vpack.c.b16 %v2709, %v2701
          %v3534 = vpack.c.b16 %v2710, %v2702
          %v3535 = vpack.c.b16 %v2711, %v2703
          %v3536 = vpack.c.b16 %v2712, %v2704
          %v3537 = vpack.c.b16 %v2721, %v2713
          %v3538 = vpack.c.b16 %v2722, %v2714
          %v3539 = vpack.c.b16 %v2723, %v2715
          %v3540 = vpack.c.b16 %v2724, %v2716
          %v3541 = vpack.c.b16 %v2725, %v2717
          %v3542 = vpack.c.b16 %v2726, %v2718
          %v3543 = vpack.c.b16 %v2727, %v2719
          %v3544 = vpack.c.b16 %v2728, %v2720
          %v3545 = vpack.c.b16 %v2737, %v2729
          %v3546 = vpack.c.b16 %v2738, %v2730
          %v3547 = vpack.c.b16 %v2739, %v2731
          %v3548 = vpack.c.b16 %v2740, %v2732
          %v3549 = vpack.c.b16 %v2741, %v2733
          %v3550 = vpack.c.b16 %v2742, %v2734
          %v3551 = vpack.c.b16 %v2743, %v2735
          %v3552 = vpack.c.b16 %v2744, %v2736
          %v3553 = vpack.c.b16 %v2753, %v2745
          %v3554 = vpack.c.b16 %v2754, %v2746
          %v3555 = vpack.c.b16 %v2755, %v2747
          %v3556 = vpack.c.b16 %v2756, %v2748
          %v3557 = vpack.c.b16 %v2757, %v2749
          %v3558 = vpack.c.b16 %v2758, %v2750
          %v3559 = vpack.c.b16 %v2759, %v2751
          %v3560 = vpack.c.b16 %v2760, %v2752
          %v3561 = vpack.c.b16 %v2769, %v2761
          %v3562 = vpack.c.b16 %v2770, %v2762
          %v3563 = vpack.c.b16 %v2771, %v2763
          %v3564 = vpack.c.b16 %v2772, %v2764
          %v3565 = vpack.c.b16 %v2773, %v2765
          %v3566 = vpack.c.b16 %v2774, %v2766
          %v3567 = vpack.c.b16 %v2775, %v2767
          %v3568 = vpack.c.b16 %v2776, %v2768
          %v3569 = vpack.c.b16 %v2785, %v2777
          %v3570 = vpack.c.b16 %v2786, %v2778
          %v3571 = vpack.c.b16 %v2787, %v2779
          %v3572 = vpack.c.b16 %v2788, %v2780
          %v3573 = vpack.c.b16 %v2789, %v2781
          %v3574 = vpack.c.b16 %v2790, %v2782
          %v3575 = vpack.c.b16 %v2791, %v2783
          %v3576 = vpack.c.b16 %v2792, %v2784
          %v3577 = vpack.c.b16 %v2801, %v2793
          %v3578 = vpack.c.b16 %v2802, %v2794
          %v3579 = vpack.c.b16 %v2803, %v2795
          %v3580 = vpack.c.b16 %v2804, %v2796
          %v3581 = vpack.c.b16 %v2805, %v2797
          %v3582 = vpack.c.b16 %v2806, %v2798
          %v3583 = vpack.c.b16 %v2807, %v2799
          %v3584 = vpack.c.b16 %v2808, %v2800
          %v3585 = vpack.c.b16 %v2817, %v2809
          %v3586 = vpack.c.b16 %v2818, %v2810
          %v3587 = vpack.c.b16 %v2819, %v2811
          %v3588 = vpack.c.b16 %v2820, %v2812
          %v3589 = vpack.c.b16 %v2821, %v2813
          %v3590 = vpack.c.b16 %v2822, %v2814
          %v3591 = vpack.c.b16 %v2823, %v2815
          %v3592 = vpack.c.b16 %v2824, %v2816
          %v3593 = vpack.c.b16 %v2833, %v2825
          %v3594 = vpack.c.b16 %v2834, %v2826
          %v3595 = vpack.c.b16 %v2835, %v2827
          %v3596 = vpack.c.b16 %v2836, %v2828
          %v3597 = vpack.c.b16 %v2837, %v2829
          %v3598 = vpack.c.b16 %v2838, %v2830
          %v3599 = vpack.c.b16 %v2839, %v2831
          %v3600 = vpack.c.b16 %v2840, %v2832
          %v3601 = vpack.c.b16 %v2849, %v2841
          %v3602 = vpack.c.b16 %v2850, %v2842
          %v3603 = vpack.c.b16 %v2851, %v2843
          %v3604 = vpack.c.b16 %v2852, %v2844
          %v3605 = vpack.c.b16 %v2853, %v2845
          %v3606 = vpack.c.b16 %v2854, %v2846
          %v3607 = vpack.c.b16 %v2855, %v2847
          %v3608 = vpack.c.b16 %v2856, %v2848
          %v3609 = vpack.c.b16 %v2865, %v2857
          %v3610 = vpack.c.b16 %v2866, %v2858
          %v3611 = vpack.c.b16 %v2867, %v2859
          %v3612 = vpack.c.b16 %v2868, %v2860
          %v3613 = vpack.c.b16 %v2869, %v2861
          %v3614 = vpack.c.b16 %v2870, %v2862
          %v3615 = vpack.c.b16 %v2871, %v2863
          %v3616 = vpack.c.b16 %v2872, %v2864
          %v3617 = vpack.c.b16 %v2881, %v2873
          %v3618 = vpack.c.b16 %v2882, %v2874
          %v3619 = vpack.c.b16 %v2883, %v2875
          %v3620 = vpack.c.b16 %v2884, %v2876
          %v3621 = vpack.c.b16 %v2885, %v2877
          %v3622 = vpack.c.b16 %v2886, %v2878
          %v3623 = vpack.c.b16 %v2887, %v2879
          %v3624 = vpack.c.b16 %v2888, %v2880
          %v3625 = vpack.c.b16 %v2897, %v2889
          %v3626 = vpack.c.b16 %v2898, %v2890
          %v3627 = vpack.c.b16 %v2899, %v2891
          %v3628 = vpack.c.b16 %v2900, %v2892
          %v3629 = vpack.c.b16 %v2901, %v2893
          %v3630 = vpack.c.b16 %v2902, %v2894
          %v3631 = vpack.c.b16 %v2903, %v2895
          %v3632 = vpack.c.b16 %v2904, %v2896
          %v3633 = vpack.c.b16 %v2913, %v2905
          %v3634 = vpack.c.b16 %v2914, %v2906
          %v3635 = vpack.c.b16 %v2915, %v2907
          %v3636 = vpack.c.b16 %v2916, %v2908
          %v3637 = vpack.c.b16 %v2917, %v2909
          %v3638 = vpack.c.b16 %v2918, %v2910
          %v3639 = vpack.c.b16 %v2919, %v2911
          %v3640 = vpack.c.b16 %v2920, %v2912
          %v3641 = vpack.c.b16 %v2929, %v2921
          %v3642 = vpack.c.b16 %v2930, %v2922
          %v3643 = vpack.c.b16 %v2931, %v2923
          %v3644 = vpack.c.b16 %v2932, %v2924
          %v3645 = vpack.c.b16 %v2933, %v2925
          %v3646 = vpack.c.b16 %v2934, %v2926
          %v3647 = vpack.c.b16 %v2935, %v2927
          %v3648 = vpack.c.b16 %v2936, %v2928
          %v3649 = vpack.c.b16 %v2945, %v2937
          %v3650 = vpack.c.b16 %v2946, %v2938
          %v3651 = vpack.c.b16 %v2947, %v2939
          %v3652 = vpack.c.b16 %v2948, %v2940
          %v3653 = vpack.c.b16 %v2949, %v2941
          %v3654 = vpack.c.b16 %v2950, %v2942
          %v3655 = vpack.c.b16 %v2951, %v2943
          %v3656 = vpack.c.b16 %v2952, %v2944
          %v3657 = vpack.c.b16 %v2961, %v2953
          %v3658 = vpack.c.b16 %v2962, %v2954
          %v3659 = vpack.c.b16 %v2963, %v2955
          %v3660 = vpack.c.b16 %v2964, %v2956
          %v3661 = vpack.c.b16 %v2965, %v2957
          %v3662 = vpack.c.b16 %v2966, %v2958
          %v3663 = vpack.c.b16 %v2967, %v2959
          %v3664 = vpack.c.b16 %v2968, %v2960
          %v3665 = vpack.c.b16 %v2977, %v2969
          %v3666 = vpack.c.b16 %v2978, %v2970
          %v3667 = vpack.c.b16 %v2979, %v2971
          %v3668 = vpack.c.b16 %v2980, %v2972
          %v3669 = vpack.c.b16 %v2981, %v2973
          %v3670 = vpack.c.b16 %v2982, %v2974
          %v3671 = vpack.c.b16 %v2983, %v2975
          %v3672 = vpack.c.b16 %v2984, %v2976
          %v3673 = vpack.c.b16 %v2993, %v2985
          %v3674 = vpack.c.b16 %v2994, %v2986
          %v3675 = vpack.c.b16 %v2995, %v2987
          %v3676 = vpack.c.b16 %v2996, %v2988
          %v3677 = vpack.c.b16 %v2997, %v2989
          %v3678 = vpack.c.b16 %v2998, %v2990
          %v3679 = vpack.c.b16 %v2999, %v2991
          %v3680 = vpack.c.b16 %v3000, %v2992
          %v3681 = vpack.c.b16 %v3009, %v3001
          %v3682 = vpack.c.b16 %v3010, %v3002
          %v3683 = vpack.c.b16 %v3011, %v3003
          %v3684 = vpack.c.b16 %v3012, %v3004
          %v3685 = vpack.c.b16 %v3013, %v3005
          %v3686 = vpack.c.b16 %v3014, %v3006
          %v3687 = vpack.c.b16 %v3015, %v3007
          %v3688 = vpack.c.b16 %v3016, %v3008
          %v3689 = vpack.c.b16 %v3025, %v3017
          %v3690 = vpack.c.b16 %v3026, %v3018
          %v3691 = vpack.c.b16 %v3027, %v3019
          %v3692 = vpack.c.b16 %v3028, %v3020
          %v3693 = vpack.c.b16 %v3029, %v3021
          %v3694 = vpack.c.b16 %v3030, %v3022
          %v3695 = vpack.c.b16 %v3031, %v3023
          %v3696 = vpack.c.b16 %v3032, %v3024
          %v3697 = vpack.c.b16 %v3041, %v3033
          %v3698 = vpack.c.b16 %v3042, %v3034
          %v3699 = vpack.c.b16 %v3043, %v3035
          %v3700 = vpack.c.b16 %v3044, %v3036
          %v3701 = vpack.c.b16 %v3045, %v3037
          %v3702 = vpack.c.b16 %v3046, %v3038
          %v3703 = vpack.c.b16 %v3047, %v3039
          %v3704 = vpack.c.b16 %v3048, %v3040
          %v3705 = vpack.c.b16 %v3057, %v3049
          %v3706 = vpack.c.b16 %v3058, %v3050
          %v3707 = vpack.c.b16 %v3059, %v3051
          %v3708 = vpack.c.b16 %v3060, %v3052
          %v3709 = vpack.c.b16 %v3061, %v3053
          %v3710 = vpack.c.b16 %v3062, %v3054
          %v3711 = vpack.c.b16 %v3063, %v3055
          %v3712 = vpack.c.b16 %v3064, %v3056
          %v3713 = vpack.c.b16 %v3073, %v3065
          %v3714 = vpack.c.b16 %v3074, %v3066
          %v3715 = vpack.c.b16 %v3075, %v3067
          %v3716 = vpack.c.b16 %v3076, %v3068
          %v3717 = vpack.c.b16 %v3077, %v3069
          %v3718 = vpack.c.b16 %v3078, %v3070
          %v3719 = vpack.c.b16 %v3079, %v3071
          %v3720 = vpack.c.b16 %v3080, %v3072
          %v3721 = vpack.c.b16 %v3089, %v3081
          %v3722 = vpack.c.b16 %v3090, %v3082
          %v3723 = vpack.c.b16 %v3091, %v3083
          %v3724 = vpack.c.b16 %v3092, %v3084
          %v3725 = vpack.c.b16 %v3093, %v3085
          %v3726 = vpack.c.b16 %v3094, %v3086
          %v3727 = vpack.c.b16 %v3095, %v3087
          %v3728 = vpack.c.b16 %v3096, %v3088
          %v3729 = vpack.c.b16 %v3105, %v3097
          %v3730 = vpack.c.b16 %v3106, %v3098
          %v3731 = vpack.c.b16 %v3107, %v3099
          %v3732 = vpack.c.b16 %v3108, %v3100
          %v3733 = vpack.c.b16 %v3109, %v3101
          %v3734 = vpack.c.b16 %v3110, %v3102
          %v3735 = vpack.c.b16 %v3111, %v3103
          %v3736 = vpack.c.b16 %v3112, %v3104
          %v3737 = vpack.c.b16 %v3121, %v3113
          %v3738 = vpack.c.b16 %v3122, %v3114
          %v3739 = vpack.c.b16 %v3123, %v3115
          %v3740 = vpack.c.b16 %v3124, %v3116
          %v3741 = vpack.c.b16 %v3125, %v3117
          %v3742 = vpack.c.b16 %v3126, %v3118
          %v3743 = vpack.c.b16 %v3127, %v3119
          %v3744 = vpack.c.b16 %v3128, %v3120
          %v3745 = vpack.c.b16 %v3137, %v3129
          %v3746 = vpack.c.b16 %v3138, %v3130
          %v3747 = vpack.c.b16 %v3139, %v3131
          %v3748 = vpack.c.b16 %v3140, %v3132
          %v3749 = vpack.c.b16 %v3141, %v3133
          %v3750 = vpack.c.b16 %v3142, %v3134
          %v3751 = vpack.c.b16 %v3143, %v3135
          %v3752 = vpack.c.b16 %v3144, %v3136
          %v3753 = vpack.c.b16 %v3153, %v3145
          %v3754 = vpack.c.b16 %v3154, %v3146
          %v3755 = vpack.c.b16 %v3155, %v3147
          %v3756 = vpack.c.b16 %v3156, %v3148
          %v3757 = vpack.c.b16 %v3157, %v3149
          %v3758 = vpack.c.b16 %v3158, %v3150
          %v3759 = vpack.c.b16 %v3159, %v3151
          %v3760 = vpack.c.b16 %v3160, %v3152
          %v3761 = vpack.c.b16 %v3169, %v3161
          %v3762 = vpack.c.b16 %v3170, %v3162
          %v3763 = vpack.c.b16 %v3171, %v3163
          %v3764 = vpack.c.b16 %v3172, %v3164
          %v3765 = vpack.c.b16 %v3173, %v3165
          %v3766 = vpack.c.b16 %v3174, %v3166
          %v3767 = vpack.c.b16 %v3175, %v3167
          %v3768 = vpack.c.b16 %v3176, %v3168
          %v3769 = vpack.c.b16 %v3185, %v3177
          %v3770 = vpack.c.b16 %v3186, %v3178
          %v3771 = vpack.c.b16 %v3187, %v3179
          %v3772 = vpack.c.b16 %v3188, %v3180
          %v3773 = vpack.c.b16 %v3189, %v3181
          %v3774 = vpack.c.b16 %v3190, %v3182
          %v3775 = vpack.c.b16 %v3191, %v3183
          %v3776 = vpack.c.b16 %v3192, %v3184
          %v3777 = vpack.c.b16 %v3201, %v3193
          %v3778 = vpack.c.b16 %v3202, %v3194
          %v3779 = vpack.c.b16 %v3203, %v3195
          %v3780 = vpack.c.b16 %v3204, %v3196
          %v3781 = vpack.c.b16 %v3205, %v3197
          %v3782 = vpack.c.b16 %v3206, %v3198
          %v3783 = vpack.c.b16 %v3207, %v3199
          %v3784 = vpack.c.b16 %v3208, %v3200
          %v3785 = vpack.c.b16 %v3217, %v3209
          %v3786 = vpack.c.b16 %v3218, %v3210
          %v3787 = vpack.c.b16 %v3219, %v3211
          %v3788 = vpack.c.b16 %v3220, %v3212
          %v3789 = vpack.c.b16 %v3221, %v3213
          %v3790 = vpack.c.b16 %v3222, %v3214
          %v3791 = vpack.c.b16 %v3223, %v3215
          %v3792 = vpack.c.b16 %v3224, %v3216
          %v3793 = vpack.c.b16 %v3233, %v3225
          %v3794 = vpack.c.b16 %v3234, %v3226
          %v3795 = vpack.c.b16 %v3235, %v3227
          %v3796 = vpack.c.b16 %v3236, %v3228
          %v3797 = vpack.c.b16 %v3237, %v3229
          %v3798 = vpack.c.b16 %v3238, %v3230
          %v3799 = vpack.c.b16 %v3239, %v3231
          %v3800 = vpack.c.b16 %v3240, %v3232
          %v3801 = vpack.c.b16 %v3249, %v3241
          %v3802 = vpack.c.b16 %v3250, %v3242
          %v3803 = vpack.c.b16 %v3251, %v3243
          %v3804 = vpack.c.b16 %v3252, %v3244
          %v3805 = vpack.c.b16 %v3253, %v3245
          %v3806 = vpack.c.b16 %v3254, %v3246
          %v3807 = vpack.c.b16 %v3255, %v3247
          %v3808 = vpack.c.b16 %v3256, %v3248
          %v3809 = vpack.c.b16 %v3265, %v3257
          %v3810 = vpack.c.b16 %v3266, %v3258
          %v3811 = vpack.c.b16 %v3267, %v3259
          %v3812 = vpack.c.b16 %v3268, %v3260
          %v3813 = vpack.c.b16 %v3269, %v3261
          %v3814 = vpack.c.b16 %v3270, %v3262
          %v3815 = vpack.c.b16 %v3271, %v3263
          %v3816 = vpack.c.b16 %v3272, %v3264
          %v3817 = vpack.c.b16 %v3281, %v3273
          %v3818 = vpack.c.b16 %v3282, %v3274
          %v3819 = vpack.c.b16 %v3283, %v3275
          %v3820 = vpack.c.b16 %v3284, %v3276
          %v3821 = vpack.c.b16 %v3285, %v3277
          %v3822 = vpack.c.b16 %v3286, %v3278
          %v3823 = vpack.c.b16 %v3287, %v3279
          %v3824 = vpack.c.b16 %v3288, %v3280
          %v3825 = vpack.c.b16 %v3297, %v3289
          %v3826 = vpack.c.b16 %v3298, %v3290
          %v3827 = vpack.c.b16 %v3299, %v3291
          %v3828 = vpack.c.b16 %v3300, %v3292
          %v3829 = vpack.c.b16 %v3301, %v3293
          %v3830 = vpack.c.b16 %v3302, %v3294
          %v3831 = vpack.c.b16 %v3303, %v3295
          %v3832 = vpack.c.b16 %v3304, %v3296
          %v3833 = vpack.c.b16 %v3313, %v3305
          %v3834 = vpack.c.b16 %v3314, %v3306
          %v3835 = vpack.c.b16 %v3315, %v3307
          %v3836 = vpack.c.b16 %v3316, %v3308
          %v3837 = vpack.c.b16 %v3317, %v3309
          %v3838 = vpack.c.b16 %v3318, %v3310
          %v3839 = vpack.c.b16 %v3319, %v3311
          %v3840 = vpack.c.b16 %v3320, %v3312
          %v3841 = vpack.c.b16 %v3329, %v3321
          %v3842 = vpack.c.b16 %v3330, %v3322
          %v3843 = vpack.c.b16 %v3331, %v3323
          %v3844 = vpack.c.b16 %v3332, %v3324
          %v3845 = vpack.c.b16 %v3333, %v3325
          %v3846 = vpack.c.b16 %v3334, %v3326
          %v3847 = vpack.c.b16 %v3335, %v3327
          %v3848 = vpack.c.b16 %v3336, %v3328
          %4361 = vmatprep.subr.bf16.mxu0 %v3338
          %4362 = vmatpush1.bf16.msra.mxu0 %v3337
          %4363 = vmatprep.subr.bf16.mxu0 %v3346
          %4364 = vmatpush1.bf16.msra.mxu0 %v3345
          %4365 = vmatprep.subr.bf16.mxu0 %v3354
          %4366 = vmatpush1.bf16.msra.mxu0 %v3353
          %4367 = vmatprep.subr.bf16.mxu0 %v3362
          %4368 = vmatpush1.bf16.msra.mxu0 %v3361
          %4369 = vmatprep.subr.bf16.mxu0 %v3370
          %4370 = vmatpush1.bf16.msra.mxu0 %v3369
          %4371 = vmatprep.subr.bf16.mxu0 %v3378
          %4372 = vmatpush1.bf16.msra.mxu0 %v3377
          %4373 = vmatprep.subr.bf16.mxu0 %v3386
          %4374 = vmatpush1.bf16.msra.mxu0 %v3385
          %4375 = vmatprep.subr.bf16.mxu0 %v3394
          %4376 = vmatpush1.bf16.msra.mxu0 %v3393
          %4377 = vmatprep.subr.bf16.mxu0 %v3402
          %4378 = vmatpush1.bf16.msra.mxu0 %v3401
          %4379 = vmatprep.subr.bf16.mxu0 %v3410
          %4380 = vmatpush1.bf16.msra.mxu0 %v3409
          %4381 = vmatprep.subr.bf16.mxu0 %v3418
          %4382 = vmatpush1.bf16.msra.mxu0 %v3417
          %4383 = vmatprep.subr.bf16.mxu0 %v3426
          %4384 = vmatpush1.bf16.msra.mxu0 %v3425
          %4385 = vmatprep.subr.bf16.mxu0 %v3434
          %4386 = vmatpush1.bf16.msra.mxu0 %v3433
          %4387 = vmatprep.subr.bf16.mxu0 %v3442
          %4388 = vmatpush1.bf16.msra.mxu0 %v3441
          %4389 = vmatprep.subr.bf16.mxu0 %v3450
          %4390 = vmatpush1.bf16.msra.mxu0 %v3449
          %4391 = vmatprep.subr.bf16.mxu0 %v3458
          %4392 = vmatpush1.bf16.msra.mxu0 %v3457
          %4393 = vmatprep.mubr.bf16.mxu0 %v1232
          %4394 = vmatmul.mubr.bf16.gmra.mrb[0].mxu0 %v1231
          %v4395 = vpop.f32.mrb[0].mxu0
          %v4396 = vadd.f32 %v1764, %v4395
          %v4397 = vpop.f32.mrb[0].mxu0
          %v4398 = vadd.f32 %v1768, %v4397
          %v4399 = vpop.f32.mrb[0].mxu0
          %v4400 = vadd.f32 %v1764, %v4399
          %v4401 = vpop.f32.mrb[0].mxu0
          %v4402 = vadd.f32 %v1768, %v4401
          %4403 = vmatprep.mubr.bf16.mxu0 %v1240
          %4404 = vmatmul.mubr.bf16.gmra.mrb[0].mxu0 %v1239
          %v4405 = vpop.f32.mrb[0].mxu0
          %v4406 = vadd.f32 %v1764, %v4405
          %v4407 = vpop.f32.mrb[0].mxu0
          %v4408 = vadd.f32 %v1768, %v4407
          %v4409 = vpop.f32.mrb[0].mxu0
          %v4410 = vadd.f32 %v1764, %v4409
          %v4411 = vpop.f32.mrb[0].mxu0
          %v4412 = vadd.f32 %v1768, %v4411
          %4413 = vdwg.mxu0
          %4414 = vmatprep.subr.bf16.mxu0 %v3466
          %4415 = vmatpush1.bf16.msra.mxu0 %v3465
          %4416 = vmatprep.subr.bf16.mxu0 %v3474
          %4417 = vmatpush1.bf16.msra.mxu0 %v3473
          %4418 = vmatprep.subr.bf16.mxu0 %v3482
          %4419 = vmatpush1.bf16.msra.mxu0 %v3481
          %4420 = vmatprep.subr.bf16.mxu0 %v3490
          %4421 = vmatpush1.bf16.msra.mxu0 %v3489
          %4422 = vmatprep.subr.bf16.mxu0 %v3498
          %4423 = vmatpush1.bf16.msra.mxu0 %v3497
          %4424 = vmatprep.subr.bf16.mxu0 %v3506
          %4425 = vmatpush1.bf16.msra.mxu0 %v3505
          %4426 = vmatprep.subr.bf16.mxu0 %v3514
          %4427 = vmatpush1.bf16.msra.mxu0 %v3513
          %4428 = vmatprep.subr.bf16.mxu0 %v3522
          %4429 = vmatpush1.bf16.msra.mxu0 %v3521
          %4430 = vmatprep.subr.bf16.mxu0 %v3530
          %4431 = vmatpush1.bf16.msra.mxu0 %v3529
          %4432 = vmatprep.subr.bf16.mxu0 %v3538
          %4433 = vmatpush1.bf16.msra.mxu0 %v3537
          %4434 = vmatprep.subr.bf16.mxu0 %v3546
          %4435 = vmatpush1.bf16.msra.mxu0 %v3545
          %4436 = vmatprep.subr.bf16.mxu0 %v3554
          %4437 = vmatpush1.bf16.msra.mxu0 %v3553
          %4438 = vmatprep.subr.bf16.mxu0 %v3562
          %4439 = vmatpush1.bf16.msra.mxu0 %v3561
          %4440 = vmatprep.subr.bf16.mxu0 %v3570
          %4441 = vmatpush1.bf16.msra.mxu0 %v3569
          %4442 = vmatprep.subr.bf16.mxu0 %v3578
          %4443 = vmatpush1.bf16.msra.mxu0 %v3577
          %4444 = vmatprep.subr.bf16.mxu0 %v3586
          %4445 = vmatpush1.bf16.msra.mxu0 %v3585
          %4446 = vmatprep.mubr.bf16.mxu0 %v1234
          %4447 = vmatmul.mubr.bf16.gmra.mrb[0].mxu0 %v1233
          %v4448 = vpop.f32.mrb[0].mxu0
          %v4449 = vadd.f32 %v4396, %v4448
          %v4450 = vpop.f32.mrb[0].mxu0
          %v4451 = vadd.f32 %v4398, %v4450
          %v4452 = vpop.f32.mrb[0].mxu0
          %v4453 = vadd.f32 %v4400, %v4452
          %v4454 = vpop.f32.mrb[0].mxu0
          %v4455 = vadd.f32 %v4402, %v4454
          %4456 = vmatprep.mubr.bf16.mxu0 %v1242
          %4457 = vmatmul.mubr.bf16.gmra.mrb[0].mxu0 %v1241
          %v4458 = vpop.f32.mrb[0].mxu0
          %v4459 = vadd.f32 %v4406, %v4458
          %v4460 = vpop.f32.mrb[0].mxu0
          %v4461 = vadd.f32 %v4408, %v4460
          %v4462 = vpop.f32.mrb[0].mxu0
          %v4463 = vadd.f32 %v4410, %v4462
          %v4464 = vpop.f32.mrb[0].mxu0
          %v4465 = vadd.f32 %v4412, %v4464
          %4466 = vdwg.mxu0
          %4467 = vmatprep.subr.bf16.mxu0 %v3594
          %4468 = vmatpush1.bf16.msra.mxu0 %v3593
          %4469 = vmatprep.subr.bf16.mxu0 %v3602
          %4470 = vmatpush1.bf16.msra.mxu0 %v3601
          %4471 = vmatprep.subr.bf16.mxu0 %v3610
          %4472 = vmatpush1.bf16.msra.mxu0 %v3609
          %4473 = vmatprep.subr.bf16.mxu0 %v3618
          %4474 = vmatpush1.bf16.msra.mxu0 %v3617
          %4475 = vmatprep.subr.bf16.mxu0 %v3626
          %4476 = vmatpush1.bf16.msra.mxu0 %v3625
          %4477 = vmatprep.subr.bf16.mxu0 %v3634
          %4478 = vmatpush1.bf16.msra.mxu0 %v3633
          %4479 = vmatprep.subr.bf16.mxu0 %v3642
          %4480 = vmatpush1.bf16.msra.mxu0 %v3641
          %4481 = vmatprep.subr.bf16.mxu0 %v3650
          %4482 = vmatpush1.bf16.msra.mxu0 %v3649
          %4483 = vmatprep.subr.bf16.mxu0 %v3658
          %4484 = vmatpush1.bf16.msra.mxu0 %v3657
          %4485 = vmatprep.subr.bf16.mxu0 %v3666
          %4486 = vmatpush1.bf16.msra.mxu0 %v3665
          %4487 = vmatprep.subr.bf16.mxu0 %v3674
          %4488 = vmatpush1.bf16.msra.mxu0 %v3673
          %4489 = vmatprep.subr.bf16.mxu0 %v3682
          %4490 = vmatpush1.bf16.msra.mxu0 %v3681
          %4491 = vmatprep.subr.bf16.mxu0 %v3690
          %4492 = vmatpush1.bf16.msra.mxu0 %v3689
          %4493 = vmatprep.subr.bf16.mxu0 %v3698
          %4494 = vmatpush1.bf16.msra.mxu0 %v3697
          %4495 = vmatprep.subr.bf16.mxu0 %v3706
          %4496 = vmatpush1.bf16.msra.mxu0 %v3705
          %4497 = vmatprep.subr.bf16.mxu0 %v3714
          %4498 = vmatpush1.bf16.msra.mxu0 %v3713
          %4499 = vmatprep.mubr.bf16.mxu0 %v1236
          %4500 = vmatmul.mubr.bf16.gmra.mrb[0].mxu0 %v1235
          %v4501 = vpop.f32.mrb[0].mxu0
          %v4502 = vadd.f32 %v4449, %v4501
          %v4503 = vpop.f32.mrb[0].mxu0
          %v4504 = vadd.f32 %v4451, %v4503
          %v4505 = vpop.f32.mrb[0].mxu0
          %v4506 = vadd.f32 %v4453, %v4505
          %v4507 = vpop.f32.mrb[0].mxu0
          %v4508 = vadd.f32 %v4455, %v4507
          %4509 = vmatprep.mubr.bf16.mxu0 %v1244
          %4510 = vmatmul.mubr.bf16.gmra.mrb[0].mxu0 %v1243
          %v4511 = vpop.f32.mrb[0].mxu0
          %v4512 = vadd.f32 %v4459, %v4511
          %v4513 = vpop.f32.mrb[0].mxu0
          %v4514 = vadd.f32 %v4461, %v4513
          %v4515 = vpop.f32.mrb[0].mxu0
          %v4516 = vadd.f32 %v4463, %v4515
          %v4517 = vpop.f32.mrb[0].mxu0
          %v4518 = vadd.f32 %v4465, %v4517
          %4519 = vdwg.mxu0
          %4520 = vmatprep.subr.bf16.mxu0 %v3722
          %4521 = vmatpush1.bf16.msra.mxu0 %v3721
          %4522 = vmatprep.subr.bf16.mxu0 %v3730
          %4523 = vmatpush1.bf16.msra.mxu0 %v3729
          %4524 = vmatprep.subr.bf16.mxu0 %v3738
          %4525 = vmatpush1.bf16.msra.mxu0 %v3737
          %4526 = vmatprep.subr.bf16.mxu0 %v3746
          %4527 = vmatpush1.bf16.msra.mxu0 %v3745
          %4528 = vmatprep.subr.bf16.mxu0 %v3754
          %4529 = vmatpush1.bf16.msra.mxu0 %v3753
          %4530 = vmatprep.subr.bf16.mxu0 %v3762
          %4531 = vmatpush1.bf16.msra.mxu0 %v3761
          %4532 = vmatprep.subr.bf16.mxu0 %v3770
          %4533 = vmatpush1.bf16.msra.mxu0 %v3769
          %4534 = vmatprep.subr.bf16.mxu0 %v3778
          %4535 = vmatpush1.bf16.msra.mxu0 %v3777
          %4536 = vmatprep.subr.bf16.mxu0 %v3786
          %4537 = vmatpush1.bf16.msra.mxu0 %v3785
          %4538 = vmatprep.subr.bf16.mxu0 %v3794
          %4539 = vmatpush1.bf16.msra.mxu0 %v3793
          %4540 = vmatprep.subr.bf16.mxu0 %v3802
          %4541 = vmatpush1.bf16.msra.mxu0 %v3801
          %4542 = vmatprep.subr.bf16.mxu0 %v3810
          %4543 = vmatpush1.bf16.msra.mxu0 %v3809
          %4544 = vmatprep.subr.bf16.mxu0 %v3818
          %4545 = vmatpush1.bf16.msra.mxu0 %v3817
          %4546 = vmatprep.subr.bf16.mxu0 %v3826
          %4547 = vmatpush1.bf16.msra.mxu0 %v3825
          %4548 = vmatprep.subr.bf16.mxu0 %v3834
          %4549 = vmatpush1.bf16.msra.mxu0 %v3833
          %4550 = vmatprep.subr.bf16.mxu0 %v3842
          %4551 = vmatpush1.bf16.msra.mxu0 %v3841
          %4552 = vmatprep.mubr.bf16.mxu0 %v1238
          %4553 = vmatmul.mubr.bf16.gmra.mrb[0].mxu0 %v1237
          %v4554 = vpop.f32.mrb[0].mxu0
          %v4555 = vadd.f32 %v4502, %v4554
          %v4556 = vpop.f32.mrb[0].mxu0
          %v4557 = vadd.f32 %v4504, %v4556
          %v4558 = vpop.f32.mrb[0].mxu0
          %v4559 = vadd.f32 %v4506, %v4558
          %v4560 = vpop.f32.mrb[0].mxu0
          %v4561 = vadd.f32 %v4508, %v4560
          %4562 = vmatprep.mubr.bf16.mxu0 %v1246
          %4563 = vmatmul.mubr.bf16.gmra.mrb[0].mxu0 %v1245
          %v4564 = vpop.f32.mrb[0].mxu0
          %v4565 = vadd.f32 %v4512, %v4564
          %v4566 = vpop.f32.mrb[0].mxu0
          %v4567 = vadd.f32 %v4514, %v4566
          %v4568 = vpop.f32.mrb[0].mxu0
          %v4569 = vadd.f32 %v4516, %v4568
          %v4570 = vpop.f32.mrb[0].mxu0
          %v4571 = vadd.f32 %v4518, %v4570
          %4572 = vdwg.mxu0
          %4573 = vmatprep.subr.bf16.mxu0 %v3340
          %4574 = vmatpush1.bf16.msra.mxu0 %v3339
          %4575 = vmatprep.subr.bf16.mxu0 %v3348
          %4576 = vmatpush1.bf16.msra.mxu0 %v3347
          %4577 = vmatprep.subr.bf16.mxu0 %v3356
          %4578 = vmatpush1.bf16.msra.mxu0 %v3355
          %4579 = vmatprep.subr.bf16.mxu0 %v3364
          %4580 = vmatpush1.bf16.msra.mxu0 %v3363
          %4581 = vmatprep.subr.bf16.mxu0 %v3372
          %4582 = vmatpush1.bf16.msra.mxu0 %v3371
          %4583 = vmatprep.subr.bf16.mxu0 %v3380
          %4584 = vmatpush1.bf16.msra.mxu0 %v3379
          %4585 = vmatprep.subr.bf16.mxu0 %v3388
          %4586 = vmatpush1.bf16.msra.mxu0 %v3387
          %4587 = vmatprep.subr.bf16.mxu0 %v3396
          %4588 = vmatpush1.bf16.msra.mxu0 %v3395
          %4589 = vmatprep.subr.bf16.mxu0 %v3404
          %4590 = vmatpush1.bf16.msra.mxu0 %v3403
          %4591 = vmatprep.subr.bf16.mxu0 %v3412
          %4592 = vmatpush1.bf16.msra.mxu0 %v3411
          %4593 = vmatprep.subr.bf16.mxu0 %v3420
          %4594 = vmatpush1.bf16.msra.mxu0 %v3419
          %4595 = vmatprep.subr.bf16.mxu0 %v3428
          %4596 = vmatpush1.bf16.msra.mxu0 %v3427
          %4597 = vmatprep.subr.bf16.mxu0 %v3436
          %4598 = vmatpush1.bf16.msra.mxu0 %v3435
          %4599 = vmatprep.subr.bf16.mxu0 %v3444
          %4600 = vmatpush1.bf16.msra.mxu0 %v3443
          %4601 = vmatprep.subr.bf16.mxu0 %v3452
          %4602 = vmatpush1.bf16.msra.mxu0 %v3451
          %4603 = vmatprep.subr.bf16.mxu0 %v3460
          %4604 = vmatpush1.bf16.msra.mxu0 %v3459
          %4605 = vmatprep.mubr.bf16.mxu0 %v1232
          %4606 = vmatmul.mubr.bf16.gmra.mrb[0].mxu0 %v1231
          %v4607 = vpop.f32.mrb[0].mxu0
          %v4608 = vadd.f32 %v1772, %v4607
          %v4609 = vpop.f32.mrb[0].mxu0
          %v4610 = vadd.f32 %v1776, %v4609
          %v4611 = vpop.f32.mrb[0].mxu0
          %v4612 = vadd.f32 %v1772, %v4611
          %v4613 = vpop.f32.mrb[0].mxu0
          %v4614 = vadd.f32 %v1776, %v4613
          %4615 = vmatprep.mubr.bf16.mxu0 %v1240
          %4616 = vmatmul.mubr.bf16.gmra.mrb[0].mxu0 %v1239
          %v4617 = vpop.f32.mrb[0].mxu0
          %v4618 = vadd.f32 %v1772, %v4617
          %v4619 = vpop.f32.mrb[0].mxu0
          %v4620 = vadd.f32 %v1776, %v4619
          %v4621 = vpop.f32.mrb[0].mxu0
          %v4622 = vadd.f32 %v1772, %v4621
          %v4623 = vpop.f32.mrb[0].mxu0
          %v4624 = vadd.f32 %v1776, %v4623
          %4625 = vdwg.mxu0
          %4626 = vmatprep.subr.bf16.mxu0 %v3468
          %4627 = vmatpush1.bf16.msra.mxu0 %v3467
          %4628 = vmatprep.subr.bf16.mxu0 %v3476
          %4629 = vmatpush1.bf16.msra.mxu0 %v3475
          %4630 = vmatprep.subr.bf16.mxu0 %v3484
          %4631 = vmatpush1.bf16.msra.mxu0 %v3483
          %4632 = vmatprep.subr.bf16.mxu0 %v3492
          %4633 = vmatpush1.bf16.msra.mxu0 %v3491
          %4634 = vmatprep.subr.bf16.mxu0 %v3500
          %4635 = vmatpush1.bf16.msra.mxu0 %v3499
          %4636 = vmatprep.subr.bf16.mxu0 %v3508
          %4637 = vmatpush1.bf16.msra.mxu0 %v3507
          %4638 = vmatprep.subr.bf16.mxu0 %v3516
          %4639 = vmatpush1.bf16.msra.mxu0 %v3515
          %4640 = vmatprep.subr.bf16.mxu0 %v3524
          %4641 = vmatpush1.bf16.msra.mxu0 %v3523
          %4642 = vmatprep.subr.bf16.mxu0 %v3532
          %4643 = vmatpush1.bf16.msra.mxu0 %v3531
          %4644 = vmatprep.subr.bf16.mxu0 %v3540
          %4645 = vmatpush1.bf16.msra.mxu0 %v3539
          %4646 = vmatprep.subr.bf16.mxu0 %v3548
          %4647 = vmatpush1.bf16.msra.mxu0 %v3547
          %4648 = vmatprep.subr.bf16.mxu0 %v3556
          %4649 = vmatpush1.bf16.msra.mxu0 %v3555
          %4650 = vmatprep.subr.bf16.mxu0 %v3564
          %4651 = vmatpush1.bf16.msra.mxu0 %v3563
          %4652 = vmatprep.subr.bf16.mxu0 %v3572
          %4653 = vmatpush1.bf16.msra.mxu0 %v3571
          %4654 = vmatprep.subr.bf16.mxu0 %v3580
          %4655 = vmatpush1.bf16.msra.mxu0 %v3579
          %4656 = vmatprep.subr.bf16.mxu0 %v3588
          %4657 = vmatpush1.bf16.msra.mxu0 %v3587
          %4658 = vmatprep.mubr.bf16.mxu0 %v1234
          %4659 = vmatmul.mubr.bf16.gmra.mrb[0].mxu0 %v1233
          %v4660 = vpop.f32.mrb[0].mxu0
          %v4661 = vadd.f32 %v4608, %v4660
          %v4662 = vpop.f32.mrb[0].mxu0
          %v4663 = vadd.f32 %v4610, %v4662
          %v4664 = vpop.f32.mrb[0].mxu0
          %v4665 = vadd.f32 %v4612, %v4664
          %v4666 = vpop.f32.mrb[0].mxu0
          %v4667 = vadd.f32 %v4614, %v4666
          %4668 = vmatprep.mubr.bf16.mxu0 %v1242
          %4669 = vmatmul.mubr.bf16.gmra.mrb[0].mxu0 %v1241
          %v4670 = vpop.f32.mrb[0].mxu0
          %v4671 = vadd.f32 %v4618, %v4670
          %v4672 = vpop.f32.mrb[0].mxu0
          %v4673 = vadd.f32 %v4620, %v4672
          %v4674 = vpop.f32.mrb[0].mxu0
          %v4675 = vadd.f32 %v4622, %v4674
          %v4676 = vpop.f32.mrb[0].mxu0
          %v4677 = vadd.f32 %v4624, %v4676
          %4678 = vdwg.mxu0
          %4679 = vmatprep.subr.bf16.mxu0 %v3596
          %4680 = vmatpush1.bf16.msra.mxu0 %v3595
          %4681 = vmatprep.subr.bf16.mxu0 %v3604
          %4682 = vmatpush1.bf16.msra.mxu0 %v3603
          %4683 = vmatprep.subr.bf16.mxu0 %v3612
          %4684 = vmatpush1.bf16.msra.mxu0 %v3611
          %4685 = vmatprep.subr.bf16.mxu0 %v3620
          %4686 = vmatpush1.bf16.msra.mxu0 %v3619
          %4687 = vmatprep.subr.bf16.mxu0 %v3628
          %4688 = vmatpush1.bf16.msra.mxu0 %v3627
          %4689 = vmatprep.subr.bf16.mxu0 %v3636
          %4690 = vmatpush1.bf16.msra.mxu0 %v3635
          %4691 = vmatprep.subr.bf16.mxu0 %v3644
          %4692 = vmatpush1.bf16.msra.mxu0 %v3643
          %4693 = vmatprep.subr.bf16.mxu0 %v3652
          %4694 = vmatpush1.bf16.msra.mxu0 %v3651
          %4695 = vmatprep.subr.bf16.mxu0 %v3660
          %4696 = vmatpush1.bf16.msra.mxu0 %v3659
          %4697 = vmatprep.subr.bf16.mxu0 %v3668
          %4698 = vmatpush1.bf16.msra.mxu0 %v3667
          %4699 = vmatprep.subr.bf16.mxu0 %v3676
          %4700 = vmatpush1.bf16.msra.mxu0 %v3675
          %4701 = vmatprep.subr.bf16.mxu0 %v3684
          %4702 = vmatpush1.bf16.msra.mxu0 %v3683
          %4703 = vmatprep.subr.bf16.mxu0 %v3692
          %4704 = vmatpush1.bf16.msra.mxu0 %v3691
          %4705 = vmatprep.subr.bf16.mxu0 %v3700
          %4706 = vmatpush1.bf16.msra.mxu0 %v3699
          %4707 = vmatprep.subr.bf16.mxu0 %v3708
          %4708 = vmatpush1.bf16.msra.mxu0 %v3707
          %4709 = vmatprep.subr.bf16.mxu0 %v3716
          %4710 = vmatpush1.bf16.msra.mxu0 %v3715
          %4711 = vmatprep.mubr.bf16.mxu0 %v1236
          %4712 = vmatmul.mubr.bf16.gmra.mrb[0].mxu0 %v1235
          %v4713 = vpop.f32.mrb[0].mxu0
          %v4714 = vadd.f32 %v4661, %v4713
          %v4715 = vpop.f32.mrb[0].mxu0
          %v4716 = vadd.f32 %v4663, %v4715
          %v4717 = vpop.f32.mrb[0].mxu0
          %v4718 = vadd.f32 %v4665, %v4717
          %v4719 = vpop.f32.mrb[0].mxu0
          %v4720 = vadd.f32 %v4667, %v4719
          %4721 = vmatprep.mubr.bf16.mxu0 %v1244
          %4722 = vmatmul.mubr.bf16.gmra.mrb[0].mxu0 %v1243
          %v4723 = vpop.f32.mrb[0].mxu0
          %v4724 = vadd.f32 %v4671, %v4723
          %v4725 = vpop.f32.mrb[0].mxu0
          %v4726 = vadd.f32 %v4673, %v4725
          %v4727 = vpop.f32.mrb[0].mxu0
          %v4728 = vadd.f32 %v4675, %v4727
          %v4729 = vpop.f32.mrb[0].mxu0
          %v4730 = vadd.f32 %v4677, %v4729
          %4731 = vdwg.mxu0
          %4732 = vmatprep.subr.bf16.mxu0 %v3724
          %4733 = vmatpush1.bf16.msra.mxu0 %v3723
          %4734 = vmatprep.subr.bf16.mxu0 %v3732
          %4735 = vmatpush1.bf16.msra.mxu0 %v3731
          %4736 = vmatprep.subr.bf16.mxu0 %v3740
          %4737 = vmatpush1.bf16.msra.mxu0 %v3739
          %4738 = vmatprep.subr.bf16.mxu0 %v3748
          %4739 = vmatpush1.bf16.msra.mxu0 %v3747
          %4740 = vmatprep.subr.bf16.mxu0 %v3756
          %4741 = vmatpush1.bf16.msra.mxu0 %v3755
          %4742 = vmatprep.subr.bf16.mxu0 %v3764
          %4743 = vmatpush1.bf16.msra.mxu0 %v3763
          %4744 = vmatprep.subr.bf16.mxu0 %v3772
          %4745 = vmatpush1.bf16.msra.mxu0 %v3771
          %4746 = vmatprep.subr.bf16.mxu0 %v3780
          %4747 = vmatpush1.bf16.msra.mxu0 %v3779
          %4748 = vmatprep.subr.bf16.mxu0 %v3788
          %4749 = vmatpush1.bf16.msra.mxu0 %v3787
          %4750 = vmatprep.subr.bf16.mxu0 %v3796
          %4751 = vmatpush1.bf16.msra.mxu0 %v3795
          %4752 = vmatprep.subr.bf16.mxu0 %v3804
          %4753 = vmatpush1.bf16.msra.mxu0 %v3803
          %4754 = vmatprep.subr.bf16.mxu0 %v3812
          %4755 = vmatpush1.bf16.msra.mxu0 %v3811
          %4756 = vmatprep.subr.bf16.mxu0 %v3820
          %4757 = vmatpush1.bf16.msra.mxu0 %v3819
          %4758 = vmatprep.subr.bf16.mxu0 %v3828
          %4759 = vmatpush1.bf16.msra.mxu0 %v3827
          %4760 = vmatprep.subr.bf16.mxu0 %v3836
          %4761 = vmatpush1.bf16.msra.mxu0 %v3835
          %4762 = vmatprep.subr.bf16.mxu0 %v3844
          %4763 = vmatpush1.bf16.msra.mxu0 %v3843
          %4764 = vmatprep.mubr.bf16.mxu0 %v1238
          %4765 = vmatmul.mubr.bf16.gmra.mrb[0].mxu0 %v1237
          %v4766 = vpop.f32.mrb[0].mxu0
          %v4767 = vadd.f32 %v4714, %v4766
          %v4768 = vpop.f32.mrb[0].mxu0
          %v4769 = vadd.f32 %v4716, %v4768
          %v4770 = vpop.f32.mrb[0].mxu0
          %v4771 = vadd.f32 %v4718, %v4770
          %v4772 = vpop.f32.mrb[0].mxu0
          %v4773 = vadd.f32 %v4720, %v4772
          %4774 = vmatprep.mubr.bf16.mxu0 %v1246
          %4775 = vmatmul.mubr.bf16.gmra.mrb[0].mxu0 %v1245
          %v4776 = vpop.f32.mrb[0].mxu0
          %v4777 = vadd.f32 %v4724, %v4776
          %v4778 = vpop.f32.mrb[0].mxu0
          %v4779 = vadd.f32 %v4726, %v4778
          %v4780 = vpop.f32.mrb[0].mxu0
          %v4781 = vadd.f32 %v4728, %v4780
          %v4782 = vpop.f32.mrb[0].mxu0
          %v4783 = vadd.f32 %v4730, %v4782
          %4784 = vdwg.mxu0
          %4785 = vmatprep.subr.bf16.mxu0 %v3342
          %4786 = vmatpush1.bf16.msra.mxu0 %v3341
          %4787 = vmatprep.subr.bf16.mxu0 %v3350
          %4788 = vmatpush1.bf16.msra.mxu0 %v3349
          %4789 = vmatprep.subr.bf16.mxu0 %v3358
          %4790 = vmatpush1.bf16.msra.mxu0 %v3357
          %4791 = vmatprep.subr.bf16.mxu0 %v3366
          %4792 = vmatpush1.bf16.msra.mxu0 %v3365
          %4793 = vmatprep.subr.bf16.mxu0 %v3374
          %4794 = vmatpush1.bf16.msra.mxu0 %v3373
          %4795 = vmatprep.subr.bf16.mxu0 %v3382
          %4796 = vmatpush1.bf16.msra.mxu0 %v3381
          %4797 = vmatprep.subr.bf16.mxu0 %v3390
          %4798 = vmatpush1.bf16.msra.mxu0 %v3389
          %4799 = vmatprep.subr.bf16.mxu0 %v3398
          %4800 = vmatpush1.bf16.msra.mxu0 %v3397
          %4801 = vmatprep.subr.bf16.mxu0 %v3406
          %4802 = vmatpush1.bf16.msra.mxu0 %v3405
          %4803 = vmatprep.subr.bf16.mxu0 %v3414
          %4804 = vmatpush1.bf16.msra.mxu0 %v3413
          %4805 = vmatprep.subr.bf16.mxu0 %v3422
          %4806 = vmatpush1.bf16.msra.mxu0 %v3421
          %4807 = vmatprep.subr.bf16.mxu0 %v3430
          %4808 = vmatpush1.bf16.msra.mxu0 %v3429
          %4809 = vmatprep.subr.bf16.mxu0 %v3438
          %4810 = vmatpush1.bf16.msra.mxu0 %v3437
          %4811 = vmatprep.subr.bf16.mxu0 %v3446
          %4812 = vmatpush1.bf16.msra.mxu0 %v3445
          %4813 = vmatprep.subr.bf16.mxu0 %v3454
          %4814 = vmatpush1.bf16.msra.mxu0 %v3453
          %4815 = vmatprep.subr.bf16.mxu0 %v3462
          %4816 = vmatpush1.bf16.msra.mxu0 %v3461
          %4817 = vmatprep.mubr.bf16.mxu0 %v1232
          %4818 = vmatmul.mubr.bf16.gmra.mrb[0].mxu0 %v1231
          %v4819 = vpop.f32.mrb[0].mxu0
          %v4820 = vadd.f32 %v1780, %v4819
          %v4821 = vpop.f32.mrb[0].mxu0
          %v4822 = vadd.f32 %v1784, %v4821
          %v4823 = vpop.f32.mrb[0].mxu0
          %v4824 = vadd.f32 %v1780, %v4823
          %v4825 = vpop.f32.mrb[0].mxu0
          %v4826 = vadd.f32 %v1784, %v4825
          %4827 = vmatprep.mubr.bf16.mxu0 %v1240
          %4828 = vmatmul.mubr.bf16.gmra.mrb[0].mxu0 %v1239
          %v4829 = vpop.f32.mrb[0].mxu0
          %v4830 = vadd.f32 %v1780, %v4829
          %v4831 = vpop.f32.mrb[0].mxu0
          %v4832 = vadd.f32 %v1784, %v4831
          %v4833 = vpop.f32.mrb[0].mxu0
          %v4834 = vadd.f32 %v1780, %v4833
          %v4835 = vpop.f32.mrb[0].mxu0
          %v4836 = vadd.f32 %v1784, %v4835
          %4837 = vdwg.mxu0
          %4838 = vmatprep.subr.bf16.mxu0 %v3470
          %4839 = vmatpush1.bf16.msra.mxu0 %v3469
          %4840 = vmatprep.subr.bf16.mxu0 %v3478
          %4841 = vmatpush1.bf16.msra.mxu0 %v3477
          %4842 = vmatprep.subr.bf16.mxu0 %v3486
          %4843 = vmatpush1.bf16.msra.mxu0 %v3485
          %4844 = vmatprep.subr.bf16.mxu0 %v3494
          %4845 = vmatpush1.bf16.msra.mxu0 %v3493
          %4846 = vmatprep.subr.bf16.mxu0 %v3502
          %4847 = vmatpush1.bf16.msra.mxu0 %v3501
          %4848 = vmatprep.subr.bf16.mxu0 %v3510
          %4849 = vmatpush1.bf16.msra.mxu0 %v3509
          %4850 = vmatprep.subr.bf16.mxu0 %v3518
          %4851 = vmatpush1.bf16.msra.mxu0 %v3517
          %4852 = vmatprep.subr.bf16.mxu0 %v3526
          %4853 = vmatpush1.bf16.msra.mxu0 %v3525
          %4854 = vmatprep.subr.bf16.mxu0 %v3534
          %4855 = vmatpush1.bf16.msra.mxu0 %v3533
          %4856 = vmatprep.subr.bf16.mxu0 %v3542
          %4857 = vmatpush1.bf16.msra.mxu0 %v3541
          %4858 = vmatprep.subr.bf16.mxu0 %v3550
          %4859 = vmatpush1.bf16.msra.mxu0 %v3549
          %4860 = vmatprep.subr.bf16.mxu0 %v3558
          %4861 = vmatpush1.bf16.msra.mxu0 %v3557
          %4862 = vmatprep.subr.bf16.mxu0 %v3566
          %4863 = vmatpush1.bf16.msra.mxu0 %v3565
          %4864 = vmatprep.subr.bf16.mxu0 %v3574
          %4865 = vmatpush1.bf16.msra.mxu0 %v3573
          %4866 = vmatprep.subr.bf16.mxu0 %v3582
          %4867 = vmatpush1.bf16.msra.mxu0 %v3581
          %4868 = vmatprep.subr.bf16.mxu0 %v3590
          %4869 = vmatpush1.bf16.msra.mxu0 %v3589
          %4870 = vmatprep.mubr.bf16.mxu0 %v1234
          %4871 = vmatmul.mubr.bf16.gmra.mrb[0].mxu0 %v1233
          %v4872 = vpop.f32.mrb[0].mxu0
          %v4873 = vadd.f32 %v4820, %v4872
          %v4874 = vpop.f32.mrb[0].mxu0
          %v4875 = vadd.f32 %v4822, %v4874
          %v4876 = vpop.f32.mrb[0].mxu0
          %v4877 = vadd.f32 %v4824, %v4876
          %v4878 = vpop.f32.mrb[0].mxu0
          %v4879 = vadd.f32 %v4826, %v4878
          %4880 = vmatprep.mubr.bf16.mxu0 %v1242
          %4881 = vmatmul.mubr.bf16.gmra.mrb[0].mxu0 %v1241
          %v4882 = vpop.f32.mrb[0].mxu0
          %v4883 = vadd.f32 %v4830, %v4882
          %v4884 = vpop.f32.mrb[0].mxu0
          %v4885 = vadd.f32 %v4832, %v4884
          %v4886 = vpop.f32.mrb[0].mxu0
          %v4887 = vadd.f32 %v4834, %v4886
          %v4888 = vpop.f32.mrb[0].mxu0
          %v4889 = vadd.f32 %v4836, %v4888
          %4890 = vdwg.mxu0
          %4891 = vmatprep.subr.bf16.mxu0 %v3598
          %4892 = vmatpush1.bf16.msra.mxu0 %v3597
          %4893 = vmatprep.subr.bf16.mxu0 %v3606
          %4894 = vmatpush1.bf16.msra.mxu0 %v3605
          %4895 = vmatprep.subr.bf16.mxu0 %v3614
          %4896 = vmatpush1.bf16.msra.mxu0 %v3613
          %4897 = vmatprep.subr.bf16.mxu0 %v3622
          %4898 = vmatpush1.bf16.msra.mxu0 %v3621
          %4899 = vmatprep.subr.bf16.mxu0 %v3630
          %4900 = vmatpush1.bf16.msra.mxu0 %v3629
          %4901 = vmatprep.subr.bf16.mxu0 %v3638
          %4902 = vmatpush1.bf16.msra.mxu0 %v3637
          %4903 = vmatprep.subr.bf16.mxu0 %v3646
          %4904 = vmatpush1.bf16.msra.mxu0 %v3645
          %4905 = vmatprep.subr.bf16.mxu0 %v3654
          %4906 = vmatpush1.bf16.msra.mxu0 %v3653
          %4907 = vmatprep.subr.bf16.mxu0 %v3662
          %4908 = vmatpush1.bf16.msra.mxu0 %v3661
          %4909 = vmatprep.subr.bf16.mxu0 %v3670
          %4910 = vmatpush1.bf16.msra.mxu0 %v3669
          %4911 = vmatprep.subr.bf16.mxu0 %v3678
          %4912 = vmatpush1.bf16.msra.mxu0 %v3677
          %4913 = vmatprep.subr.bf16.mxu0 %v3686
          %4914 = vmatpush1.bf16.msra.mxu0 %v3685
          %4915 = vmatprep.subr.bf16.mxu0 %v3694
          %4916 = vmatpush1.bf16.msra.mxu0 %v3693
          %4917 = vmatprep.subr.bf16.mxu0 %v3702
          %4918 = vmatpush1.bf16.msra.mxu0 %v3701
          %4919 = vmatprep.subr.bf16.mxu0 %v3710
          %4920 = vmatpush1.bf16.msra.mxu0 %v3709
          %4921 = vmatprep.subr.bf16.mxu0 %v3718
          %4922 = vmatpush1.bf16.msra.mxu0 %v3717
          %4923 = vmatprep.mubr.bf16.mxu0 %v1236
          %4924 = vmatmul.mubr.bf16.gmra.mrb[0].mxu0 %v1235
          %v4925 = vpop.f32.mrb[0].mxu0
          %v4926 = vadd.f32 %v4873, %v4925
          %v4927 = vpop.f32.mrb[0].mxu0
          %v4928 = vadd.f32 %v4875, %v4927
          %v4929 = vpop.f32.mrb[0].mxu0
          %v4930 = vadd.f32 %v4877, %v4929
          %v4931 = vpop.f32.mrb[0].mxu0
          %v4932 = vadd.f32 %v4879, %v4931
          %4933 = vmatprep.mubr.bf16.mxu0 %v1244
          %4934 = vmatmul.mubr.bf16.gmra.mrb[0].mxu0 %v1243
          %v4935 = vpop.f32.mrb[0].mxu0
          %v4936 = vadd.f32 %v4883, %v4935
          %v4937 = vpop.f32.mrb[0].mxu0
          %v4938 = vadd.f32 %v4885, %v4937
          %v4939 = vpop.f32.mrb[0].mxu0
          %v4940 = vadd.f32 %v4887, %v4939
          %v4941 = vpop.f32.mrb[0].mxu0
          %v4942 = vadd.f32 %v4889, %v4941
          %4943 = vdwg.mxu0
          %4944 = vmatprep.subr.bf16.mxu0 %v3726
          %4945 = vmatpush1.bf16.msra.mxu0 %v3725
          %4946 = vmatprep.subr.bf16.mxu0 %v3734
          %4947 = vmatpush1.bf16.msra.mxu0 %v3733
          %4948 = vmatprep.subr.bf16.mxu0 %v3742
          %4949 = vmatpush1.bf16.msra.mxu0 %v3741
          %4950 = vmatprep.subr.bf16.mxu0 %v3750
          %4951 = vmatpush1.bf16.msra.mxu0 %v3749
          %4952 = vmatprep.subr.bf16.mxu0 %v3758
          %4953 = vmatpush1.bf16.msra.mxu0 %v3757
          %4954 = vmatprep.subr.bf16.mxu0 %v3766
          %4955 = vmatpush1.bf16.msra.mxu0 %v3765
          %4956 = vmatprep.subr.bf16.mxu0 %v3774
          %4957 = vmatpush1.bf16.msra.mxu0 %v3773
          %4958 = vmatprep.subr.bf16.mxu0 %v3782
          %4959 = vmatpush1.bf16.msra.mxu0 %v3781
          %4960 = vmatprep.subr.bf16.mxu0 %v3790
          %4961 = vmatpush1.bf16.msra.mxu0 %v3789
          %4962 = vmatprep.subr.bf16.mxu0 %v3798
          %4963 = vmatpush1.bf16.msra.mxu0 %v3797
          %4964 = vmatprep.subr.bf16.mxu0 %v3806
          %4965 = vmatpush1.bf16.msra.mxu0 %v3805
          %4966 = vmatprep.subr.bf16.mxu0 %v3814
          %4967 = vmatpush1.bf16.msra.mxu0 %v3813
          %4968 = vmatprep.subr.bf16.mxu0 %v3822
          %4969 = vmatpush1.bf16.msra.mxu0 %v3821
          %4970 = vmatprep.subr.bf16.mxu0 %v3830
          %4971 = vmatpush1.bf16.msra.mxu0 %v3829
          %4972 = vmatprep.subr.bf16.mxu0 %v3838
          %4973 = vmatpush1.bf16.msra.mxu0 %v3837
          %4974 = vmatprep.subr.bf16.mxu0 %v3846
          %4975 = vmatpush1.bf16.msra.mxu0 %v3845
          %4976 = vmatprep.mubr.bf16.mxu0 %v1238
          %4977 = vmatmul.mubr.bf16.gmra.mrb[0].mxu0 %v1237
          %v4978 = vpop.f32.mrb[0].mxu0
          %v4979 = vadd.f32 %v4926, %v4978
          %v4980 = vpop.f32.mrb[0].mxu0
          %v4981 = vadd.f32 %v4928, %v4980
          %v4982 = vpop.f32.mrb[0].mxu0
          %v4983 = vadd.f32 %v4930, %v4982
          %v4984 = vpop.f32.mrb[0].mxu0
          %v4985 = vadd.f32 %v4932, %v4984
          %4986 = vmatprep.mubr.bf16.mxu0 %v1246
          %4987 = vmatmul.mubr.bf16.gmra.mrb[0].mxu0 %v1245
          %v4988 = vpop.f32.mrb[0].mxu0
          %v4989 = vadd.f32 %v4936, %v4988
          %v4990 = vpop.f32.mrb[0].mxu0
          %v4991 = vadd.f32 %v4938, %v4990
          %v4992 = vpop.f32.mrb[0].mxu0
          %v4993 = vadd.f32 %v4940, %v4992
          %v4994 = vpop.f32.mrb[0].mxu0
          %v4995 = vadd.f32 %v4942, %v4994
          %4996 = vdwg.mxu0
          %4997 = vmatprep.subr.bf16.mxu0 %v3344
          %4998 = vmatpush1.bf16.msra.mxu0 %v3343
          %4999 = vmatprep.subr.bf16.mxu0 %v3352
          %5000 = vmatpush1.bf16.msra.mxu0 %v3351
          %5001 = vmatprep.subr.bf16.mxu0 %v3360
          %5002 = vmatpush1.bf16.msra.mxu0 %v3359
          %5003 = vmatprep.subr.bf16.mxu0 %v3368
          %5004 = vmatpush1.bf16.msra.mxu0 %v3367
          %5005 = vmatprep.subr.bf16.mxu0 %v3376
          %5006 = vmatpush1.bf16.msra.mxu0 %v3375
          %5007 = vmatprep.subr.bf16.mxu0 %v3384
          %5008 = vmatpush1.bf16.msra.mxu0 %v3383
          %5009 = vmatprep.subr.bf16.mxu0 %v3392
          %5010 = vmatpush1.bf16.msra.mxu0 %v3391
          %5011 = vmatprep.subr.bf16.mxu0 %v3400
          %5012 = vmatpush1.bf16.msra.mxu0 %v3399
          %5013 = vmatprep.subr.bf16.mxu0 %v3408
          %5014 = vmatpush1.bf16.msra.mxu0 %v3407
          %5015 = vmatprep.subr.bf16.mxu0 %v3416
          %5016 = vmatpush1.bf16.msra.mxu0 %v3415
          %5017 = vmatprep.subr.bf16.mxu0 %v3424
          %5018 = vmatpush1.bf16.msra.mxu0 %v3423
          %5019 = vmatprep.subr.bf16.mxu0 %v3432
          %5020 = vmatpush1.bf16.msra.mxu0 %v3431
          %5021 = vmatprep.subr.bf16.mxu0 %v3440
          %5022 = vmatpush1.bf16.msra.mxu0 %v3439
          %5023 = vmatprep.subr.bf16.mxu0 %v3448
          %5024 = vmatpush1.bf16.msra.mxu0 %v3447
          %5025 = vmatprep.subr.bf16.mxu0 %v3456
          %5026 = vmatpush1.bf16.msra.mxu0 %v3455
          %5027 = vmatprep.subr.bf16.mxu0 %v3464
          %5028 = vmatpush1.bf16.msra.mxu0 %v3463
          %5029 = vmatprep.mubr.bf16.mxu0 %v1232
          %5030 = vmatmul.mubr.bf16.gmra.mrb[0].mxu0 %v1231
          %v5031 = vpop.f32.mrb[0].mxu0
          %v5032 = vadd.f32 %v1788, %v5031
          %v5033 = vpop.f32.mrb[0].mxu0
          %v5034 = vadd.f32 %v1792, %v5033
          %v5035 = vpop.f32.mrb[0].mxu0
          %v5036 = vadd.f32 %v1788, %v5035
          %v5037 = vpop.f32.mrb[0].mxu0
          %v5038 = vadd.f32 %v1792, %v5037
          %5039 = vmatprep.mubr.bf16.mxu0 %v1240
          %5040 = vmatmul.mubr.bf16.gmra.mrb[0].mxu0 %v1239
          %v5041 = vpop.f32.mrb[0].mxu0
          %v5042 = vadd.f32 %v1788, %v5041
          %v5043 = vpop.f32.mrb[0].mxu0
          %v5044 = vadd.f32 %v1792, %v5043
          %v5045 = vpop.f32.mrb[0].mxu0
          %v5046 = vadd.f32 %v1788, %v5045
          %v5047 = vpop.f32.mrb[0].mxu0
          %v5048 = vadd.f32 %v1792, %v5047
          %5049 = vdwg.mxu0
          %5050 = vmatprep.subr.bf16.mxu0 %v3472
          %5051 = vmatpush1.bf16.msra.mxu0 %v3471
          %5052 = vmatprep.subr.bf16.mxu0 %v3480
          %5053 = vmatpush1.bf16.msra.mxu0 %v3479
          %5054 = vmatprep.subr.bf16.mxu0 %v3488
          %5055 = vmatpush1.bf16.msra.mxu0 %v3487
          %5056 = vmatprep.subr.bf16.mxu0 %v3496
          %5057 = vmatpush1.bf16.msra.mxu0 %v3495
          %5058 = vmatprep.subr.bf16.mxu0 %v3504
          %5059 = vmatpush1.bf16.msra.mxu0 %v3503
          %5060 = vmatprep.subr.bf16.mxu0 %v3512
          %5061 = vmatpush1.bf16.msra.mxu0 %v3511
          %5062 = vmatprep.subr.bf16.mxu0 %v3520
          %5063 = vmatpush1.bf16.msra.mxu0 %v3519
          %5064 = vmatprep.subr.bf16.mxu0 %v3528
          %5065 = vmatpush1.bf16.msra.mxu0 %v3527
          %5066 = vmatprep.subr.bf16.mxu0 %v3536
          %5067 = vmatpush1.bf16.msra.mxu0 %v3535
          %5068 = vmatprep.subr.bf16.mxu0 %v3544
          %5069 = vmatpush1.bf16.msra.mxu0 %v3543
          %5070 = vmatprep.subr.bf16.mxu0 %v3552
          %5071 = vmatpush1.bf16.msra.mxu0 %v3551
          %5072 = vmatprep.subr.bf16.mxu0 %v3560
          %5073 = vmatpush1.bf16.msra.mxu0 %v3559
          %5074 = vmatprep.subr.bf16.mxu0 %v3568
          %5075 = vmatpush1.bf16.msra.mxu0 %v3567
          %5076 = vmatprep.subr.bf16.mxu0 %v3576
          %5077 = vmatpush1.bf16.msra.mxu0 %v3575
          %5078 = vmatprep.subr.bf16.mxu0 %v3584
          %5079 = vmatpush1.bf16.msra.mxu0 %v3583
          %5080 = vmatprep.subr.bf16.mxu0 %v3592
          %5081 = vmatpush1.bf16.msra.mxu0 %v3591
          %5082 = vmatprep.mubr.bf16.mxu0 %v1234
          %5083 = vmatmul.mubr.bf16.gmra.mrb[0].mxu0 %v1233
          %v5084 = vpop.f32.mrb[0].mxu0
          %v5085 = vadd.f32 %v5032, %v5084
          %v5086 = vpop.f32.mrb[0].mxu0
          %v5087 = vadd.f32 %v5034, %v5086
          %v5088 = vpop.f32.mrb[0].mxu0
          %v5089 = vadd.f32 %v5036, %v5088
          %v5090 = vpop.f32.mrb[0].mxu0
          %v5091 = vadd.f32 %v5038, %v5090
          %5092 = vmatprep.mubr.bf16.mxu0 %v1242
          %5093 = vmatmul.mubr.bf16.gmra.mrb[0].mxu0 %v1241
          %v5094 = vpop.f32.mrb[0].mxu0
          %v5095 = vadd.f32 %v5042, %v5094
          %v5096 = vpop.f32.mrb[0].mxu0
          %v5097 = vadd.f32 %v5044, %v5096
          %v5098 = vpop.f32.mrb[0].mxu0
          %v5099 = vadd.f32 %v5046, %v5098
          %v5100 = vpop.f32.mrb[0].mxu0
          %v5101 = vadd.f32 %v5048, %v5100
          %5102 = vdwg.mxu0
          %5103 = vmatprep.subr.bf16.mxu0 %v3600
          %5104 = vmatpush1.bf16.msra.mxu0 %v3599
          %5105 = vmatprep.subr.bf16.mxu0 %v3608
          %5106 = vmatpush1.bf16.msra.mxu0 %v3607
          %5107 = vmatprep.subr.bf16.mxu0 %v3616
          %5108 = vmatpush1.bf16.msra.mxu0 %v3615
          %5109 = vmatprep.subr.bf16.mxu0 %v3624
          %5110 = vmatpush1.bf16.msra.mxu0 %v3623
          %5111 = vmatprep.subr.bf16.mxu0 %v3632
          %5112 = vmatpush1.bf16.msra.mxu0 %v3631
          %5113 = vmatprep.subr.bf16.mxu0 %v3640
          %5114 = vmatpush1.bf16.msra.mxu0 %v3639
          %5115 = vmatprep.subr.bf16.mxu0 %v3648
          %5116 = vmatpush1.bf16.msra.mxu0 %v3647
          %5117 = vmatprep.subr.bf16.mxu0 %v3656
          %5118 = vmatpush1.bf16.msra.mxu0 %v3655
          %5119 = vmatprep.subr.bf16.mxu0 %v3664
          %5120 = vmatpush1.bf16.msra.mxu0 %v3663
          %5121 = vmatprep.subr.bf16.mxu0 %v3672
          %5122 = vmatpush1.bf16.msra.mxu0 %v3671
          %5123 = vmatprep.subr.bf16.mxu0 %v3680
          %5124 = vmatpush1.bf16.msra.mxu0 %v3679
          %5125 = vmatprep.subr.bf16.mxu0 %v3688
          %5126 = vmatpush1.bf16.msra.mxu0 %v3687
          %5127 = vmatprep.subr.bf16.mxu0 %v3696
          %5128 = vmatpush1.bf16.msra.mxu0 %v3695
          %5129 = vmatprep.subr.bf16.mxu0 %v3704
          %5130 = vmatpush1.bf16.msra.mxu0 %v3703
          %5131 = vmatprep.subr.bf16.mxu0 %v3712
          %5132 = vmatpush1.bf16.msra.mxu0 %v3711
          %5133 = vmatprep.subr.bf16.mxu0 %v3720
          %5134 = vmatpush1.bf16.msra.mxu0 %v3719
          %5135 = vmatprep.mubr.bf16.mxu0 %v1236
          %5136 = vmatmul.mubr.bf16.gmra.mrb[0].mxu0 %v1235
          %v5137 = vpop.f32.mrb[0].mxu0
          %v5138 = vadd.f32 %v5085, %v5137
          %v5139 = vpop.f32.mrb[0].mxu0
          %v5140 = vadd.f32 %v5087, %v5139
          %v5141 = vpop.f32.mrb[0].mxu0
          %v5142 = vadd.f32 %v5089, %v5141
          %v5143 = vpop.f32.mrb[0].mxu0
          %v5144 = vadd.f32 %v5091, %v5143
          %5145 = vmatprep.mubr.bf16.mxu0 %v1244
          %5146 = vmatmul.mubr.bf16.gmra.mrb[0].mxu0 %v1243
          %v5147 = vpop.f32.mrb[0].mxu0
          %v5148 = vadd.f32 %v5095, %v5147
          %v5149 = vpop.f32.mrb[0].mxu0
          %v5150 = vadd.f32 %v5097, %v5149
          %v5151 = vpop.f32.mrb[0].mxu0
          %v5152 = vadd.f32 %v5099, %v5151
          %v5153 = vpop.f32.mrb[0].mxu0
          %v5154 = vadd.f32 %v5101, %v5153
          %5155 = vdwg.mxu0
          %5156 = vmatprep.subr.bf16.mxu0 %v3728
          %5157 = vmatpush1.bf16.msra.mxu0 %v3727
          %5158 = vmatprep.subr.bf16.mxu0 %v3736
          %5159 = vmatpush1.bf16.msra.mxu0 %v3735
          %5160 = vmatprep.subr.bf16.mxu0 %v3744
          %5161 = vmatpush1.bf16.msra.mxu0 %v3743
          %5162 = vmatprep.subr.bf16.mxu0 %v3752
          %5163 = vmatpush1.bf16.msra.mxu0 %v3751
          %5164 = vmatprep.subr.bf16.mxu0 %v3760
          %5165 = vmatpush1.bf16.msra.mxu0 %v3759
          %5166 = vmatprep.subr.bf16.mxu0 %v3768
          %5167 = vmatpush1.bf16.msra.mxu0 %v3767
          %5168 = vmatprep.subr.bf16.mxu0 %v3776
          %5169 = vmatpush1.bf16.msra.mxu0 %v3775
          %5170 = vmatprep.subr.bf16.mxu0 %v3784
          %5171 = vmatpush1.bf16.msra.mxu0 %v3783
          %5172 = vmatprep.subr.bf16.mxu0 %v3792
          %5173 = vmatpush1.bf16.msra.mxu0 %v3791
          %5174 = vmatprep.subr.bf16.mxu0 %v3800
          %5175 = vmatpush1.bf16.msra.mxu0 %v3799
          %5176 = vmatprep.subr.bf16.mxu0 %v3808
          %5177 = vmatpush1.bf16.msra.mxu0 %v3807
          %5178 = vmatprep.subr.bf16.mxu0 %v3816
          %5179 = vmatpush1.bf16.msra.mxu0 %v3815
          %5180 = vmatprep.subr.bf16.mxu0 %v3824
          %5181 = vmatpush1.bf16.msra.mxu0 %v3823
          %5182 = vmatprep.subr.bf16.mxu0 %v3832
          %5183 = vmatpush1.bf16.msra.mxu0 %v3831
          %5184 = vmatprep.subr.bf16.mxu0 %v3840
          %5185 = vmatpush1.bf16.msra.mxu0 %v3839
          %5186 = vmatprep.subr.bf16.mxu0 %v3848
          %5187 = vmatpush1.bf16.msra.mxu0 %v3847
          %5188 = vmatprep.mubr.bf16.mxu0 %v1238
          %5189 = vmatmul.mubr.bf16.gmra.mrb[0].mxu0 %v1237
          %v5190 = vpop.f32.mrb[0].mxu0
          %v5191 = vadd.f32 %v5138, %v5190
          %v5192 = vpop.f32.mrb[0].mxu0
          %v5193 = vadd.f32 %v5140, %v5192
          %v5194 = vpop.f32.mrb[0].mxu0
          %v5195 = vadd.f32 %v5142, %v5194
          %v5196 = vpop.f32.mrb[0].mxu0
          %v5197 = vadd.f32 %v5144, %v5196
          %5198 = vmatprep.mubr.bf16.mxu0 %v1246
          %5199 = vmatmul.mubr.bf16.gmra.mrb[0].mxu0 %v1245
          %v5200 = vpop.f32.mrb[0].mxu0
          %v5201 = vadd.f32 %v5148, %v5200
          %v5202 = vpop.f32.mrb[0].mxu0
          %v5203 = vadd.f32 %v5150, %v5202
          %v5204 = vpop.f32.mrb[0].mxu0
          %v5205 = vadd.f32 %v5152, %v5204
          %v5206 = vpop.f32.mrb[0].mxu0
          %v5207 = vadd.f32 %v5154, %v5206
          %5208 = vdwg.mxu0
          %v5209 = vmax.f32 %v4555, 0.0
          %v5210 = vmax.f32 %v4557, 0.0
          %v5211 = vmax.f32 %v4767, 0.0
          %v5212 = vmax.f32 %v4769, 0.0
          %v5213 = vmax.f32 %v4979, 0.0
          %v5214 = vmax.f32 %v4981, 0.0
          %v5215 = vmax.f32 %v5191, 0.0
          %v5216 = vmax.f32 %v5193, 0.0
          %v5217 = vmax.f32 %v4559, 0.0
          %v5218 = vmax.f32 %v4561, 0.0
          %v5219 = vmax.f32 %v4771, 0.0
          %v5220 = vmax.f32 %v4773, 0.0
          %v5221 = vmax.f32 %v4983, 0.0
          %v5222 = vmax.f32 %v4985, 0.0
          %v5223 = vmax.f32 %v5195, 0.0
          %v5224 = vmax.f32 %v5197, 0.0
          %v5225 = vmax.f32 %v4565, 0.0
          %v5226 = vmax.f32 %v4567, 0.0
          %v5227 = vmax.f32 %v4777, 0.0
          %v5228 = vmax.f32 %v4779, 0.0
          %v5229 = vmax.f32 %v4989, 0.0
          %v5230 = vmax.f32 %v4991, 0.0
          %v5231 = vmax.f32 %v5201, 0.0
          %v5232 = vmax.f32 %v5203, 0.0
          %v5233 = vmax.f32 %v4569, 0.0
          %v5234 = vmax.f32 %v4571, 0.0
          %v5235 = vmax.f32 %v4781, 0.0
          %v5236 = vmax.f32 %v4783, 0.0
          %v5237 = vmax.f32 %v4993, 0.0
          %v5238 = vmax.f32 %v4995, 0.0
          %v5239 = vmax.f32 %v5205, 0.0
          %v5240 = vmax.f32 %v5207, 0.0
          %v5241 = vpack.c.bf16 %v5217, %v5209
          %v5242 = vpack.c.bf16 %v5218, %v5210
          %v5243 = vpack.c.bf16 %v5219, %v5211
          %v5244 = vpack.c.bf16 %v5220, %v5212
          %v5245 = vpack.c.bf16 %v5221, %v5213
          %v5246 = vpack.c.bf16 %v5222, %v5214
          %v5247 = vpack.c.bf16 %v5223, %v5215
          %v5248 = vpack.c.bf16 %v5224, %v5216
          %v5249 = vpack.c.bf16 %v5233, %v5225
          %v5250 = vpack.c.bf16 %v5234, %v5226
          %v5251 = vpack.c.bf16 %v5235, %v5227
          %v5252 = vpack.c.bf16 %v5236, %v5228
          %v5253 = vpack.c.bf16 %v5237, %v5229
          %v5254 = vpack.c.bf16 %v5238, %v5230
          %v5255 = vpack.c.bf16 %v5239, %v5231
          %v5256 = vpack.c.bf16 %v5240, %v5232
          %v5257 = vld [vmem:[%s5] sm:$0xf]
          %v5258 = vld [vmem:[%s5 + $0x4] sm:$0xf]
          %v5259 = vld [vmem:[%s5 + $0x8] sm:$0xf]
          %v5260 = vld [vmem:[%s5 + $0xc] sm:$0xf]
          %v5261 = vld [vmem:[%s5 + $0x10] sm:$0xf]
          %v5262 = vld [vmem:[%s5 + $0x14] sm:$0xf]
          %v5263 = vld [vmem:[%s5 + $0x18] sm:$0xf]
          %v5264 = vld [vmem:[%s5 + $0x1c] sm:$0xf]
          %v5265 = vld [vmem:[%s5 + $0x20] sm:$0xf]
          %v5266 = vld [vmem:[%s5 + $0x24] sm:$0xf]
          %v5267 = vld [vmem:[%s5 + $0x28] sm:$0xf]
          %v5268 = vld [vmem:[%s5 + $0x2c] sm:$0xf]
          %v5269 = vld [vmem:[%s5 + $0x30] sm:$0xf]
          %v5270 = vld [vmem:[%s5 + $0x34] sm:$0xf]
          %v5271 = vld [vmem:[%s5 + $0x38] sm:$0xf]
          %v5272 = vld [vmem:[%s5 + $0x3c] sm:$0xf]
          %v5273 = vld [vmem:[%s5 + $0x40] sm:$0xf]
          %v5274 = vld [vmem:[%s5 + $0x44] sm:$0xf]
          %v5275 = vld [vmem:[%s5 + $0x48] sm:$0xf]
          %v5276 = vld [vmem:[%s5 + $0x4c] sm:$0xf]
          %v5277 = vld [vmem:[%s5 + $0x50] sm:$0xf]
          %v5278 = vld [vmem:[%s5 + $0x54] sm:$0xf]
          %v5279 = vld [vmem:[%s5 + $0x58] sm:$0xf]
          %v5280 = vld [vmem:[%s5 + $0x5c] sm:$0xf]
          %v5281 = vld [vmem:[%s5 + $0x60] sm:$0xf]
          %v5282 = vld [vmem:[%s5 + $0x64] sm:$0xf]
          %v5283 = vld [vmem:[%s5 + $0x68] sm:$0xf]
          %v5284 = vld [vmem:[%s5 + $0x6c] sm:$0xf]
          %v5285 = vld [vmem:[%s5 + $0x70] sm:$0xf]
          %v5286 = vld [vmem:[%s5 + $0x74] sm:$0xf]
          %v5287 = vld [vmem:[%s5 + $0x78] sm:$0xf]
          %v5288 = vld [vmem:[%s5 + $0x7c] sm:$0xf]
          %v5289 = vld [vmem:[%s5 + $0x80] sm:$0xf]
          %v5290 = vld [vmem:[%s5 + $0x84] sm:$0xf]
          %v5291 = vld [vmem:[%s5 + $0x88] sm:$0xf]
          %v5292 = vld [vmem:[%s5 + $0x8c] sm:$0xf]
          %v5293 = vld [vmem:[%s5 + $0x90] sm:$0xf]
          %v5294 = vld [vmem:[%s5 + $0x94] sm:$0xf]
          %v5295 = vld [vmem:[%s5 + $0x98] sm:$0xf]
          %v5296 = vld [vmem:[%s5 + $0x9c] sm:$0xf]
          %v5297 = vld [vmem:[%s5 + $0xa0] sm:$0xf]
          %v5298 = vld [vmem:[%s5 + $0xa4] sm:$0xf]
          %v5299 = vld [vmem:[%s5 + $0xa8] sm:$0xf]
          %v5300 = vld [vmem:[%s5 + $0xac] sm:$0xf]
          %v5301 = vld [vmem:[%s5 + $0xb0] sm:$0xf]
          %v5302 = vld [vmem:[%s5 + $0xb4] sm:$0xf]
          %v5303 = vld [vmem:[%s5 + $0xb8] sm:$0xf]
          %v5304 = vld [vmem:[%s5 + $0xbc] sm:$0xf]
          %v5305 = vld [vmem:[%s5 + $0xc0] sm:$0xf]
          %v5306 = vld [vmem:[%s5 + $0xc4] sm:$0xf]
          %v5307 = vld [vmem:[%s5 + $0xc8] sm:$0xf]
          %v5308 = vld [vmem:[%s5 + $0xcc] sm:$0xf]
          %v5309 = vld [vmem:[%s5 + $0xd0] sm:$0xf]
          %v5310 = vld [vmem:[%s5 + $0xd4] sm:$0xf]
          %v5311 = vld [vmem:[%s5 + $0xd8] sm:$0xf]
          %v5312 = vld [vmem:[%s5 + $0xdc] sm:$0xf]
          %v5313 = vld [vmem:[%s5 + $0xe0] sm:$0xf]
          %v5314 = vld [vmem:[%s5 + $0xe4] sm:$0xf]
          %v5315 = vld [vmem:[%s5 + $0xe8] sm:$0xf]
          %v5316 = vld [vmem:[%s5 + $0xec] sm:$0xf]
          %v5317 = vld [vmem:[%s5 + $0xf0] sm:$0xf]
          %v5318 = vld [vmem:[%s5 + $0xf4] sm:$0xf]
          %v5319 = vld [vmem:[%s5 + $0xf8] sm:$0xf]
          %v5320 = vld [vmem:[%s5 + $0xfc] sm:$0xf]
          %v5321 = vld [vmem:[%s5 + $0x100] sm:$0xf]
          %v5322 = vld [vmem:[%s5 + $0x104] sm:$0xf]
          %v5323 = vld [vmem:[%s5 + $0x108] sm:$0xf]
          %v5324 = vld [vmem:[%s5 + $0x10c] sm:$0xf]
          %v5325 = vld [vmem:[%s5 + $0x110] sm:$0xf]
          %v5326 = vld [vmem:[%s5 + $0x114] sm:$0xf]
          %v5327 = vld [vmem:[%s5 + $0x118] sm:$0xf]
          %v5328 = vld [vmem:[%s5 + $0x11c] sm:$0xf]
          %v5329 = vld [vmem:[%s5 + $0x120] sm:$0xf]
          %v5330 = vld [vmem:[%s5 + $0x124] sm:$0xf]
          %v5331 = vld [vmem:[%s5 + $0x128] sm:$0xf]
          %v5332 = vld [vmem:[%s5 + $0x12c] sm:$0xf]
          %v5333 = vld [vmem:[%s5 + $0x130] sm:$0xf]
          %v5334 = vld [vmem:[%s5 + $0x134] sm:$0xf]
          %v5335 = vld [vmem:[%s5 + $0x138] sm:$0xf]
          %v5336 = vld [vmem:[%s5 + $0x13c] sm:$0xf]
          %v5337 = vld [vmem:[%s5 + $0x140] sm:$0xf]
          %v5338 = vld [vmem:[%s5 + $0x144] sm:$0xf]
          %v5339 = vld [vmem:[%s5 + $0x148] sm:$0xf]
          %v5340 = vld [vmem:[%s5 + $0x14c] sm:$0xf]
          %v5341 = vld [vmem:[%s5 + $0x150] sm:$0xf]
          %v5342 = vld [vmem:[%s5 + $0x154] sm:$0xf]
          %v5343 = vld [vmem:[%s5 + $0x158] sm:$0xf]
          %v5344 = vld [vmem:[%s5 + $0x15c] sm:$0xf]
          %v5345 = vld [vmem:[%s5 + $0x160] sm:$0xf]
          %v5346 = vld [vmem:[%s5 + $0x164] sm:$0xf]
          %v5347 = vld [vmem:[%s5 + $0x168] sm:$0xf]
          %v5348 = vld [vmem:[%s5 + $0x16c] sm:$0xf]
          %v5349 = vld [vmem:[%s5 + $0x170] sm:$0xf]
          %v5350 = vld [vmem:[%s5 + $0x174] sm:$0xf]
          %v5351 = vld [vmem:[%s5 + $0x178] sm:$0xf]
          %v5352 = vld [vmem:[%s5 + $0x17c] sm:$0xf]
          %v5353 = vld [vmem:[%s5 + $0x180] sm:$0xf]
          %v5354 = vld [vmem:[%s5 + $0x184] sm:$0xf]
          %v5355 = vld [vmem:[%s5 + $0x188] sm:$0xf]
          %v5356 = vld [vmem:[%s5 + $0x18c] sm:$0xf]
          %v5357 = vld [vmem:[%s5 + $0x190] sm:$0xf]
          %v5358 = vld [vmem:[%s5 + $0x194] sm:$0xf]
          %v5359 = vld [vmem:[%s5 + $0x198] sm:$0xf]
          %v5360 = vld [vmem:[%s5 + $0x19c] sm:$0xf]
          %v5361 = vld [vmem:[%s5 + $0x1a0] sm:$0xf]
          %v5362 = vld [vmem:[%s5 + $0x1a4] sm:$0xf]
          %v5363 = vld [vmem:[%s5 + $0x1a8] sm:$0xf]
          %v5364 = vld [vmem:[%s5 + $0x1ac] sm:$0xf]
          %v5365 = vld [vmem:[%s5 + $0x1b0] sm:$0xf]
          %v5366 = vld [vmem:[%s5 + $0x1b4] sm:$0xf]
          %v5367 = vld [vmem:[%s5 + $0x1b8] sm:$0xf]
          %v5368 = vld [vmem:[%s5 + $0x1bc] sm:$0xf]
          %v5369 = vld [vmem:[%s5 + $0x1c0] sm:$0xf]
          %v5370 = vld [vmem:[%s5 + $0x1c4] sm:$0xf]
          %v5371 = vld [vmem:[%s5 + $0x1c8] sm:$0xf]
          %v5372 = vld [vmem:[%s5 + $0x1cc] sm:$0xf]
          %v5373 = vld [vmem:[%s5 + $0x1d0] sm:$0xf]
          %v5374 = vld [vmem:[%s5 + $0x1d4] sm:$0xf]
          %v5375 = vld [vmem:[%s5 + $0x1d8] sm:$0xf]
          %v5376 = vld [vmem:[%s5 + $0x1dc] sm:$0xf]
          %v5377 = vld [vmem:[%s5 + $0x1e0] sm:$0xf]
          %v5378 = vld [vmem:[%s5 + $0x1e4] sm:$0xf]
          %v5379 = vld [vmem:[%s5 + $0x1e8] sm:$0xf]
          %v5380 = vld [vmem:[%s5 + $0x1ec] sm:$0xf]
          %v5381 = vld [vmem:[%s5 + $0x1f0] sm:$0xf]
          %v5382 = vld [vmem:[%s5 + $0x1f4] sm:$0xf]
          %v5383 = vld [vmem:[%s5 + $0x1f8] sm:$0xf]
          %v5384 = vld [vmem:[%s5 + $0x1fc] sm:$0xf]
          %v5385 = vld [vmem:[%s6] sm:$0x1]
          %v5387 = vlaneseq
          %v5388 = vshrl.u32 %v5387, 7
          %v5389 = vsub.s32 0, %v5388
          %v5390 = vrot.slane %v5385, %v5389
          %v5520 = vunpack.c.l.b16 %v5257
          %v5521 = vunpack.c.l.b16 %v5258
          %v5522 = vunpack.c.l.b16 %v5259
          %v5523 = vunpack.c.l.b16 %v5260
          %v5524 = vunpack.c.l.b16 %v5261
          %v5525 = vunpack.c.l.b16 %v5262
          %v5526 = vunpack.c.l.b16 %v5263
          %v5527 = vunpack.c.l.b16 %v5264
          %v5528 = vunpack.c.l.b16 %v5265
          %v5529 = vunpack.c.l.b16 %v5266
          %v5530 = vunpack.c.l.b16 %v5267
          %v5531 = vunpack.c.l.b16 %v5268
          %v5532 = vunpack.c.l.b16 %v5269
          %v5533 = vunpack.c.l.b16 %v5270
          %v5534 = vunpack.c.l.b16 %v5271
          %v5535 = vunpack.c.l.b16 %v5272
          %v5536 = vunpack.c.l.b16 %v5273
          %v5537 = vunpack.c.l.b16 %v5274
          %v5538 = vunpack.c.l.b16 %v5275
          %v5539 = vunpack.c.l.b16 %v5276
          %v5540 = vunpack.c.l.b16 %v5277
          %v5541 = vunpack.c.l.b16 %v5278
          %v5542 = vunpack.c.l.b16 %v5279
          %v5543 = vunpack.c.l.b16 %v5280
          %v5544 = vunpack.c.l.b16 %v5281
          %v5545 = vunpack.c.l.b16 %v5282
          %v5546 = vunpack.c.l.b16 %v5283
          %v5547 = vunpack.c.l.b16 %v5284
          %v5548 = vunpack.c.l.b16 %v5285
          %v5549 = vunpack.c.l.b16 %v5286
          %v5550 = vunpack.c.l.b16 %v5287
          %v5551 = vunpack.c.l.b16 %v5288
          %v5552 = vunpack.c.l.b16 %v5289
          %v5553 = vunpack.c.l.b16 %v5290
          %v5554 = vunpack.c.l.b16 %v5291
          %v5555 = vunpack.c.l.b16 %v5292
          %v5556 = vunpack.c.l.b16 %v5293
          %v5557 = vunpack.c.l.b16 %v5294
          %v5558 = vunpack.c.l.b16 %v5295
          %v5559 = vunpack.c.l.b16 %v5296
          %v5560 = vunpack.c.l.b16 %v5297
          %v5561 = vunpack.c.l.b16 %v5298
          %v5562 = vunpack.c.l.b16 %v5299
          %v5563 = vunpack.c.l.b16 %v5300
          %v5564 = vunpack.c.l.b16 %v5301
          %v5565 = vunpack.c.l.b16 %v5302
          %v5566 = vunpack.c.l.b16 %v5303
          %v5567 = vunpack.c.l.b16 %v5304
          %v5568 = vunpack.c.l.b16 %v5305
          %v5569 = vunpack.c.l.b16 %v5306
          %v5570 = vunpack.c.l.b16 %v5307
          %v5571 = vunpack.c.l.b16 %v5308
          %v5572 = vunpack.c.l.b16 %v5309
          %v5573 = vunpack.c.l.b16 %v5310
          %v5574 = vunpack.c.l.b16 %v5311
          %v5575 = vunpack.c.l.b16 %v5312
          %v5576 = vunpack.c.l.b16 %v5313
          %v5577 = vunpack.c.l.b16 %v5314
          %v5578 = vunpack.c.l.b16 %v5315
          %v5579 = vunpack.c.l.b16 %v5316
          %v5580 = vunpack.c.l.b16 %v5317
          %v5581 = vunpack.c.l.b16 %v5318
          %v5582 = vunpack.c.l.b16 %v5319
          %v5583 = vunpack.c.l.b16 %v5320
          %v5584 = vunpack.c.l.b16 %v5321
          %v5585 = vunpack.c.l.b16 %v5322
          %v5586 = vunpack.c.l.b16 %v5323
          %v5587 = vunpack.c.l.b16 %v5324
          %v5588 = vunpack.c.l.b16 %v5325
          %v5589 = vunpack.c.l.b16 %v5326
          %v5590 = vunpack.c.l.b16 %v5327
          %v5591 = vunpack.c.l.b16 %v5328
          %v5592 = vunpack.c.l.b16 %v5329
          %v5593 = vunpack.c.l.b16 %v5330
          %v5594 = vunpack.c.l.b16 %v5331
          %v5595 = vunpack.c.l.b16 %v5332
          %v5596 = vunpack.c.l.b16 %v5333
          %v5597 = vunpack.c.l.b16 %v5334
          %v5598 = vunpack.c.l.b16 %v5335
          %v5599 = vunpack.c.l.b16 %v5336
          %v5600 = vunpack.c.l.b16 %v5337
          %v5601 = vunpack.c.l.b16 %v5338
          %v5602 = vunpack.c.l.b16 %v5339
          %v5603 = vunpack.c.l.b16 %v5340
          %v5604 = vunpack.c.l.b16 %v5341
          %v5605 = vunpack.c.l.b16 %v5342
          %v5606 = vunpack.c.l.b16 %v5343
          %v5607 = vunpack.c.l.b16 %v5344
          %v5608 = vunpack.c.l.b16 %v5345
          %v5609 = vunpack.c.l.b16 %v5346
          %v5610 = vunpack.c.l.b16 %v5347
          %v5611 = vunpack.c.l.b16 %v5348
          %v5612 = vunpack.c.l.b16 %v5349
          %v5613 = vunpack.c.l.b16 %v5350
          %v5614 = vunpack.c.l.b16 %v5351
          %v5615 = vunpack.c.l.b16 %v5352
          %v5616 = vunpack.c.l.b16 %v5353
          %v5617 = vunpack.c.l.b16 %v5354
          %v5618 = vunpack.c.l.b16 %v5355
          %v5619 = vunpack.c.l.b16 %v5356
          %v5620 = vunpack.c.l.b16 %v5357
          %v5621 = vunpack.c.l.b16 %v5358
          %v5622 = vunpack.c.l.b16 %v5359
          %v5623 = vunpack.c.l.b16 %v5360
          %v5624 = vunpack.c.l.b16 %v5361
          %v5625 = vunpack.c.l.b16 %v5362
          %v5626 = vunpack.c.l.b16 %v5363
          %v5627 = vunpack.c.l.b16 %v5364
          %v5628 = vunpack.c.l.b16 %v5365
          %v5629 = vunpack.c.l.b16 %v5366
          %v5630 = vunpack.c.l.b16 %v5367
          %v5631 = vunpack.c.l.b16 %v5368
          %v5632 = vunpack.c.l.b16 %v5369
          %v5633 = vunpack.c.l.b16 %v5370
          %v5634 = vunpack.c.l.b16 %v5371
          %v5635 = vunpack.c.l.b16 %v5372
          %v5636 = vunpack.c.l.b16 %v5373
          %v5637 = vunpack.c.l.b16 %v5374
          %v5638 = vunpack.c.l.b16 %v5375
          %v5639 = vunpack.c.l.b16 %v5376
          %v5640 = vunpack.c.l.b16 %v5377
          %v5641 = vunpack.c.l.b16 %v5378
          %v5642 = vunpack.c.l.b16 %v5379
          %v5643 = vunpack.c.l.b16 %v5380
          %v5644 = vunpack.c.l.b16 %v5381
          %v5645 = vunpack.c.l.b16 %v5382
          %v5646 = vunpack.c.l.b16 %v5383
          %v5647 = vunpack.c.l.b16 %v5384
          %v5648 = vpack.c.b16 %v5521, %v5520
          %v5649 = vpack.c.b16 %v5523, %v5522
          %v5650 = vpack.c.b16 %v5525, %v5524
          %v5651 = vpack.c.b16 %v5527, %v5526
          %v5652 = vpack.c.b16 %v5529, %v5528
          %v5653 = vpack.c.b16 %v5531, %v5530
          %v5654 = vpack.c.b16 %v5533, %v5532
          %v5655 = vpack.c.b16 %v5535, %v5534
          %v5656 = vpack.c.b16 %v5537, %v5536
          %v5657 = vpack.c.b16 %v5539, %v5538
          %v5658 = vpack.c.b16 %v5541, %v5540
          %v5659 = vpack.c.b16 %v5543, %v5542
          %v5660 = vpack.c.b16 %v5545, %v5544
          %v5661 = vpack.c.b16 %v5547, %v5546
          %v5662 = vpack.c.b16 %v5549, %v5548
          %v5663 = vpack.c.b16 %v5551, %v5550
          %v5664 = vpack.c.b16 %v5553, %v5552
          %v5665 = vpack.c.b16 %v5555, %v5554
          %v5666 = vpack.c.b16 %v5557, %v5556
          %v5667 = vpack.c.b16 %v5559, %v5558
          %v5668 = vpack.c.b16 %v5561, %v5560
          %v5669 = vpack.c.b16 %v5563, %v5562
          %v5670 = vpack.c.b16 %v5565, %v5564
          %v5671 = vpack.c.b16 %v5567, %v5566
          %v5672 = vpack.c.b16 %v5569, %v5568
          %v5673 = vpack.c.b16 %v5571, %v5570
          %v5674 = vpack.c.b16 %v5573, %v5572
          %v5675 = vpack.c.b16 %v5575, %v5574
          %v5676 = vpack.c.b16 %v5577, %v5576
          %v5677 = vpack.c.b16 %v5579, %v5578
          %v5678 = vpack.c.b16 %v5581, %v5580
          %v5679 = vpack.c.b16 %v5583, %v5582
          %v5680 = vpack.c.b16 %v5585, %v5584
          %v5681 = vpack.c.b16 %v5587, %v5586
          %v5682 = vpack.c.b16 %v5589, %v5588
          %v5683 = vpack.c.b16 %v5591, %v5590
          %v5684 = vpack.c.b16 %v5593, %v5592
          %v5685 = vpack.c.b16 %v5595, %v5594
          %v5686 = vpack.c.b16 %v5597, %v5596
          %v5687 = vpack.c.b16 %v5599, %v5598
          %v5688 = vpack.c.b16 %v5601, %v5600
          %v5689 = vpack.c.b16 %v5603, %v5602
          %v5690 = vpack.c.b16 %v5605, %v5604
          %v5691 = vpack.c.b16 %v5607, %v5606
          %v5692 = vpack.c.b16 %v5609, %v5608
          %v5693 = vpack.c.b16 %v5611, %v5610
          %v5694 = vpack.c.b16 %v5613, %v5612
          %v5695 = vpack.c.b16 %v5615, %v5614
          %v5696 = vpack.c.b16 %v5617, %v5616
          %v5697 = vpack.c.b16 %v5619, %v5618
          %v5698 = vpack.c.b16 %v5621, %v5620
          %v5699 = vpack.c.b16 %v5623, %v5622
          %v5700 = vpack.c.b16 %v5625, %v5624
          %v5701 = vpack.c.b16 %v5627, %v5626
          %v5702 = vpack.c.b16 %v5629, %v5628
          %v5703 = vpack.c.b16 %v5631, %v5630
          %v5704 = vpack.c.b16 %v5633, %v5632
          %v5705 = vpack.c.b16 %v5635, %v5634
          %v5706 = vpack.c.b16 %v5637, %v5636
          %v5707 = vpack.c.b16 %v5639, %v5638
          %v5708 = vpack.c.b16 %v5641, %v5640
          %v5709 = vpack.c.b16 %v5643, %v5642
          %v5710 = vpack.c.b16 %v5645, %v5644
          %v5711 = vpack.c.b16 %v5647, %v5646
          %5776 = vmatprep.subr.bf16.mxu0 0
          %5777 = vmatpush1.bf16.msra.mxu0 %v5648
          %5778 = vmatprep.subr.bf16.mxu0 0
          %5779 = vmatpush1.bf16.msra.mxu0 %v5649
          %5780 = vmatprep.subr.bf16.mxu0 0
          %5781 = vmatpush1.bf16.msra.mxu0 %v5650
          %5782 = vmatprep.subr.bf16.mxu0 0
          %5783 = vmatpush1.bf16.msra.mxu0 %v5651
          %5784 = vmatprep.subr.bf16.mxu0 0
          %5785 = vmatpush1.bf16.msra.mxu0 %v5652
          %5786 = vmatprep.subr.bf16.mxu0 0
          %5787 = vmatpush1.bf16.msra.mxu0 %v5653
          %5788 = vmatprep.subr.bf16.mxu0 0
          %5789 = vmatpush1.bf16.msra.mxu0 %v5654
          %5790 = vmatprep.subr.bf16.mxu0 0
          %5791 = vmatpush1.bf16.msra.mxu0 %v5655
          %5792 = vmatprep.subr.bf16.mxu0 0
          %5793 = vmatpush1.bf16.msra.mxu0 %v5656
          %5794 = vmatprep.subr.bf16.mxu0 0
          %5795 = vmatpush1.bf16.msra.mxu0 %v5657
          %5796 = vmatprep.subr.bf16.mxu0 0
          %5797 = vmatpush1.bf16.msra.mxu0 %v5658
          %5798 = vmatprep.subr.bf16.mxu0 0
          %5799 = vmatpush1.bf16.msra.mxu0 %v5659
          %5800 = vmatprep.subr.bf16.mxu0 0
          %5801 = vmatpush1.bf16.msra.mxu0 %v5660
          %5802 = vmatprep.subr.bf16.mxu0 0
          %5803 = vmatpush1.bf16.msra.mxu0 %v5661
          %5804 = vmatprep.subr.bf16.mxu0 0
          %5805 = vmatpush1.bf16.msra.mxu0 %v5662
          %5806 = vmatprep.subr.bf16.mxu0 0
          %5807 = vmatpush1.bf16.msra.mxu0 %v5663
          %5808 = vmatprep.mubr.bf16.mxu0 %v5242
          %5809 = vmatmul.mubr.bf16.gmra.mrb[0].mxu0 %v5241
          %v5810 = vpop.f32.mrb[0].mxu0
          %v5811 = vadd.f32 %v5390, %v5810
          %v5812 = vpop.f32.mrb[0].mxu0
          %v5813 = vpop.f32.mrb[0].mxu0
          %v5814 = vadd.f32 %v5390, %v5813
          %v5815 = vpop.f32.mrb[0].mxu0
          %5816 = vmatprep.mubr.bf16.mxu0 %v5250
          %5817 = vmatmul.mubr.bf16.gmra.mrb[0].mxu0 %v5249
          %v5818 = vpop.f32.mrb[0].mxu0
          %v5819 = vadd.f32 %v5390, %v5818
          %v5820 = vpop.f32.mrb[0].mxu0
          %v5821 = vpop.f32.mrb[0].mxu0
          %v5822 = vadd.f32 %v5390, %v5821
          %v5823 = vpop.f32.mrb[0].mxu0
          %5824 = vdwg.mxu0
          %5825 = vmatprep.subr.bf16.mxu0 0
          %5826 = vmatpush1.bf16.msra.mxu0 %v5664
          %5827 = vmatprep.subr.bf16.mxu0 0
          %5828 = vmatpush1.bf16.msra.mxu0 %v5665
          %5829 = vmatprep.subr.bf16.mxu0 0
          %5830 = vmatpush1.bf16.msra.mxu0 %v5666
          %5831 = vmatprep.subr.bf16.mxu0 0
          %5832 = vmatpush1.bf16.msra.mxu0 %v5667
          %5833 = vmatprep.subr.bf16.mxu0 0
          %5834 = vmatpush1.bf16.msra.mxu0 %v5668
          %5835 = vmatprep.subr.bf16.mxu0 0
          %5836 = vmatpush1.bf16.msra.mxu0 %v5669
          %5837 = vmatprep.subr.bf16.mxu0 0
          %5838 = vmatpush1.bf16.msra.mxu0 %v5670
          %5839 = vmatprep.subr.bf16.mxu0 0
          %5840 = vmatpush1.bf16.msra.mxu0 %v5671
          %5841 = vmatprep.subr.bf16.mxu0 0
          %5842 = vmatpush1.bf16.msra.mxu0 %v5672
          %5843 = vmatprep.subr.bf16.mxu0 0
          %5844 = vmatpush1.bf16.msra.mxu0 %v5673
          %5845 = vmatprep.subr.bf16.mxu0 0
          %5846 = vmatpush1.bf16.msra.mxu0 %v5674
          %5847 = vmatprep.subr.bf16.mxu0 0
          %5848 = vmatpush1.bf16.msra.mxu0 %v5675
          %5849 = vmatprep.subr.bf16.mxu0 0
          %5850 = vmatpush1.bf16.msra.mxu0 %v5676
          %5851 = vmatprep.subr.bf16.mxu0 0
          %5852 = vmatpush1.bf16.msra.mxu0 %v5677
          %5853 = vmatprep.subr.bf16.mxu0 0
          %5854 = vmatpush1.bf16.msra.mxu0 %v5678
          %5855 = vmatprep.subr.bf16.mxu0 0
          %5856 = vmatpush1.bf16.msra.mxu0 %v5679
          %5857 = vmatprep.mubr.bf16.mxu0 %v5244
          %5858 = vmatmul.mubr.bf16.gmra.mrb[0].mxu0 %v5243
          %v5859 = vpop.f32.mrb[0].mxu0
          %v5860 = vadd.f32 %v5811, %v5859
          %v5861 = vpop.f32.mrb[0].mxu0
          %v5862 = vpop.f32.mrb[0].mxu0
          %v5863 = vadd.f32 %v5814, %v5862
          %v5864 = vpop.f32.mrb[0].mxu0
          %5865 = vmatprep.mubr.bf16.mxu0 %v5252
          %5866 = vmatmul.mubr.bf16.gmra.mrb[0].mxu0 %v5251
          %v5867 = vpop.f32.mrb[0].mxu0
          %v5868 = vadd.f32 %v5819, %v5867
          %v5869 = vpop.f32.mrb[0].mxu0
          %v5870 = vpop.f32.mrb[0].mxu0
          %v5871 = vadd.f32 %v5822, %v5870
          %v5872 = vpop.f32.mrb[0].mxu0
          %5873 = vdwg.mxu0
          %5874 = vmatprep.subr.bf16.mxu0 0
          %5875 = vmatpush1.bf16.msra.mxu0 %v5680
          %5876 = vmatprep.subr.bf16.mxu0 0
          %5877 = vmatpush1.bf16.msra.mxu0 %v5681
          %5878 = vmatprep.subr.bf16.mxu0 0
          %5879 = vmatpush1.bf16.msra.mxu0 %v5682
          %5880 = vmatprep.subr.bf16.mxu0 0
          %5881 = vmatpush1.bf16.msra.mxu0 %v5683
          %5882 = vmatprep.subr.bf16.mxu0 0
          %5883 = vmatpush1.bf16.msra.mxu0 %v5684
          %5884 = vmatprep.subr.bf16.mxu0 0
          %5885 = vmatpush1.bf16.msra.mxu0 %v5685
          %5886 = vmatprep.subr.bf16.mxu0 0
          %5887 = vmatpush1.bf16.msra.mxu0 %v5686
          %5888 = vmatprep.subr.bf16.mxu0 0
          %5889 = vmatpush1.bf16.msra.mxu0 %v5687
          %5890 = vmatprep.subr.bf16.mxu0 0
          %5891 = vmatpush1.bf16.msra.mxu0 %v5688
          %5892 = vmatprep.subr.bf16.mxu0 0
          %5893 = vmatpush1.bf16.msra.mxu0 %v5689
          %5894 = vmatprep.subr.bf16.mxu0 0
          %5895 = vmatpush1.bf16.msra.mxu0 %v5690
          %5896 = vmatprep.subr.bf16.mxu0 0
          %5897 = vmatpush1.bf16.msra.mxu0 %v5691
          %5898 = vmatprep.subr.bf16.mxu0 0
          %5899 = vmatpush1.bf16.msra.mxu0 %v5692
          %5900 = vmatprep.subr.bf16.mxu0 0
          %5901 = vmatpush1.bf16.msra.mxu0 %v5693
          %5902 = vmatprep.subr.bf16.mxu0 0
          %5903 = vmatpush1.bf16.msra.mxu0 %v5694
          %5904 = vmatprep.subr.bf16.mxu0 0
          %5905 = vmatpush1.bf16.msra.mxu0 %v5695
          %5906 = vmatprep.mubr.bf16.mxu0 %v5246
          %5907 = vmatmul.mubr.bf16.gmra.mrb[0].mxu0 %v5245
          %v5908 = vpop.f32.mrb[0].mxu0
          %v5909 = vadd.f32 %v5860, %v5908
          %v5910 = vpop.f32.mrb[0].mxu0
          %v5911 = vpop.f32.mrb[0].mxu0
          %v5912 = vadd.f32 %v5863, %v5911
          %v5913 = vpop.f32.mrb[0].mxu0
          %5914 = vmatprep.mubr.bf16.mxu0 %v5254
          %5915 = vmatmul.mubr.bf16.gmra.mrb[0].mxu0 %v5253
          %v5916 = vpop.f32.mrb[0].mxu0
          %v5917 = vadd.f32 %v5868, %v5916
          %v5918 = vpop.f32.mrb[0].mxu0
          %v5919 = vpop.f32.mrb[0].mxu0
          %v5920 = vadd.f32 %v5871, %v5919
          %v5921 = vpop.f32.mrb[0].mxu0
          %5922 = vdwg.mxu0
          %5923 = vmatprep.subr.bf16.mxu0 0
          %5924 = vmatpush1.bf16.msra.mxu0 %v5696
          %5925 = vmatprep.subr.bf16.mxu0 0
          %5926 = vmatpush1.bf16.msra.mxu0 %v5697
          %5927 = vmatprep.subr.bf16.mxu0 0
          %5928 = vmatpush1.bf16.msra.mxu0 %v5698
          %5929 = vmatprep.subr.bf16.mxu0 0
          %5930 = vmatpush1.bf16.msra.mxu0 %v5699
          %5931 = vmatprep.subr.bf16.mxu0 0
          %5932 = vmatpush1.bf16.msra.mxu0 %v5700
          %5933 = vmatprep.subr.bf16.mxu0 0
          %5934 = vmatpush1.bf16.msra.mxu0 %v5701
          %5935 = vmatprep.subr.bf16.mxu0 0
          %5936 = vmatpush1.bf16.msra.mxu0 %v5702
          %5937 = vmatprep.subr.bf16.mxu0 0
          %5938 = vmatpush1.bf16.msra.mxu0 %v5703
          %5939 = vmatprep.subr.bf16.mxu0 0
          %5940 = vmatpush1.bf16.msra.mxu0 %v5704
          %5941 = vmatprep.subr.bf16.mxu0 0
          %5942 = vmatpush1.bf16.msra.mxu0 %v5705
          %5943 = vmatprep.subr.bf16.mxu0 0
          %5944 = vmatpush1.bf16.msra.mxu0 %v5706
          %5945 = vmatprep.subr.bf16.mxu0 0
          %5946 = vmatpush1.bf16.msra.mxu0 %v5707
          %5947 = vmatprep.subr.bf16.mxu0 0
          %5948 = vmatpush1.bf16.msra.mxu0 %v5708
          %5949 = vmatprep.subr.bf16.mxu0 0
          %5950 = vmatpush1.bf16.msra.mxu0 %v5709
          %5951 = vmatprep.subr.bf16.mxu0 0
          %5952 = vmatpush1.bf16.msra.mxu0 %v5710
          %5953 = vmatprep.subr.bf16.mxu0 0
          %5954 = vmatpush1.bf16.msra.mxu0 %v5711
          %5955 = vmatprep.mubr.bf16.mxu0 %v5248
          %5956 = vmatmul.mubr.bf16.gmra.mrb[0].mxu0 %v5247
          %v5957 = vpop.f32.mrb[0].mxu0
          %v5958 = vadd.f32 %v5909, %v5957
          %v5959 = vpop.f32.mrb[0].mxu0
          %v5960 = vpop.f32.mrb[0].mxu0
          %v5961 = vadd.f32 %v5912, %v5960
          %v5962 = vpop.f32.mrb[0].mxu0
          %5963 = vmatprep.mubr.bf16.mxu0 %v5256
          %5964 = vmatmul.mubr.bf16.gmra.mrb[0].mxu0 %v5255
          %v5965 = vpop.f32.mrb[0].mxu0
          %v5966 = vadd.f32 %v5917, %v5965
          %v5967 = vpop.f32.mrb[0].mxu0
          %v5968 = vpop.f32.mrb[0].mxu0
          %v5969 = vadd.f32 %v5920, %v5968
          %v5970 = vpop.f32.mrb[0].mxu0
          %5971 = vdwg.mxu0
          %5972 = vst [vmem:[%s374] sm:$0xff] %v5958
          %5973 = vst [vmem:[%s374 + $0x8] sm:$0xff] %v5961
          %5974 = vst [vmem:[%s374 + $0x10] sm:$0xff] %v5966
          %5975 = vst [vmem:[%s374 + $0x18] sm:$0xff] %v5969
        $region97: #{roi_head_forward.1} parent=84 // pred_fallthru
          _
        %s5976 = smul.u32 4, %s22
        %p5977 = scmp.lt.s32.totalorder %s5976, 3
        %s5978 = scalar_select %p5977, %s5976, 3
        %s5979 = smul.addr %s5978, 8
        %s5980 = scalar_lea.vmem %s7, %s5979
        // Predicated region
        $region98: #{roi_head_forward.1} parent=84 // pred_check
          %p5981 = pneg %p207
        $region99: #{roi_head_forward.1} parent=84 // pred_check_branch
          %5983 = sbr.rel (%p5981) target = $region101
        $region100: #{roi_head_forward.1} parent=84 // pred_region
          %s5984 = smul.u32 4, %s22
        $region101: #{roi_head_forward.1} parent=84 // pred_fallthru
          _
        // Predicated region
        $region102: #{roi_head_forward.1} parent=84 // pred_check
          %p5985 = pneg %p207
        $region103: #{roi_head_forward.1} parent=84 // pred_check_branch
          %5987 = sbr.rel (%p5985) target = $region105
        $region104: #{roi_head_forward.1} parent=84 // pred_region
          %s5988 = smul.u32 4, %s22
          %p5989 = scmp.lt.s32.totalorder %s5988, 3
          %s5990 = scalar_select %p5989, %s5988, 3
          %s5991 = smul.addr %s5990, 8
          %s5992 = scalar_lea.vmem %s7, %s5991
        $region105: #{roi_head_forward.1} parent=84 // pred_fallthru
          _
      $region85: #{roi_head_forward.1} parent=5 // pred_fallthru
        _
      %p5993 = scmp.le.s32.totalorder 2, %s13
      // Predicated region
      $region106: #{roi_head_forward.1} parent=5 // pred_check
        %p5994 = pneg %p5993
      $region107: #{roi_head_forward.1} parent=5 // pred_check_branch
        %5996 = sbr.rel (%p5994) target = $region109
      $region108: #{roi_head_forward.1} parent=5 // pred_region
        %s5997 = ssub.s32 %s13, 2
      $region109: #{roi_head_forward.1} parent=5 // pred_fallthru
        _
    $region6: #{roi_head_forward.1} parent=1 // loop_footer
      %s17 = sadd.s32 1, %s13
    $region7: #{roi_head_forward.1} parent=1 // loop_footer_branch
      %12 = sbr.rel target = $region3
    $region8: #{roi_head_forward.1} parent=1 // loop_exit
      _

</llo_original>
